<compile_context>
chip_gen: v7x
topology: tpu7x:2x2x1
jax: 0.10.0
libtpu: 0.0.40
codegen_flags: <defaults>
</compile_context>

<pallas_src>
import functools

import jax
import jax.numpy as jnp
from jax import lax
from jax.experimental import pallas as pl
from jax.experimental.pallas import tpu as pltpu


def _round_up(x, m):
    return (x + m - 1) // m * m


# ----------------------------------------------------------------------------
# Fused BasicBlock kernel (one batch element per grid step)
# ----------------------------------------------------------------------------
def _zero_halo(ref, h, w, c, dtype):
    """Zero only the 1-pixel spatial border of a (h+2, w+2, c) VMEM scratch."""
    ref[0:1, :, :] = jnp.zeros((1, w + 2, c), dtype)
    ref[h + 1:h + 2, :, :] = jnp.zeros((1, w + 2, c), dtype)
    ref[:, 0:1, :] = jnp.zeros((h + 2, 1, c), dtype)
    ref[:, w + 1:w + 2, :] = jnp.zeros((h + 2, 1, c), dtype)


def _taps9(src, ho, wo, s, c):
    """The 9 shifted (ho*wo, c) views of a zero-halo'd spatial source value."""
    out = []
    for ky in range(3):
        for kx in range(3):
            if s == 1:
                t = src[ky:ky + ho, kx:kx + wo, :]
            else:
                # TODO(synk): for stride 2, deinterleave even/odd-W slabs once
                # per step instead of 9 strided slices (perf-review item).
                t = lax.slice(src, (ky, kx, 0),
                              (ky + s * (ho - 1) + 1, kx + s * (wo - 1) + 1, c),
                              (s, s, 1))
            out.append(t.reshape(ho * wo, c))
    return out


def _basic_block_kernel(x_ref, w1_ref, b1_ref, w2_ref, b2_ref, wd_ref, bd_ref,
                        o_ref, xh_ref, h1_ref, *, stride, Ho, Wo):
    """conv1+bn1+relu -> conv2+bn2 (+dropout=id) + shortcut + relu.

    x_ref : (1, H, W, Cin)    bf16 unpadded input image
    w1_ref: (9*Cin, Cp)       bf16 im2col-packed conv1, bn1 scale folded
    b1_ref: (1, Cp)           f32
    w2_ref: (9*Cp, Cp)        bf16 im2col-packed conv2, bn2 scale folded
    b2_ref: (1, Cp)           f32
    wd_ref: (Cin, Cp)         bf16 shortcut 1x1 (downsample+bn, or padded eye)
    bd_ref: (1, Cp)           f32
    o_ref : (1, Ho, Wo, Cp)   bf16 output
    xh_ref: (H+2, W+2, Cin)   bf16 VMEM scratch (zero-halo'd input)
    h1_ref: (Ho+2, Wo+2, Cp)  bf16 VMEM scratch (zero-halo'd intermediate)
    """
    H, W, cin = x_ref.shape[1], x_ref.shape[2], x_ref.shape[3]
    cp = o_ref.shape[3]
    r = Ho * Wo
    bf16 = jnp.bfloat16
    f32 = jnp.float32

    # Stage the input with a zero halo entirely in VMEM (no HBM pad copy).
    # Only the border is re-zeroed; interior is fully overwritten each step.
    _zero_halo(xh_ref, H, W, cin, bf16)
    xh_ref[1:1 + H, 1:1 + W, :] = x_ref[0]
    xh = xh_ref[...]

    # ---- conv1 (3x3, stride, pad=1) + bn1 + relu: one K=9*Cin matmul --------
    x9 = jnp.concatenate(_taps9(xh, Ho, Wo, stride, cin), axis=-1)  # (r, 9*Cin)
    acc1 = jnp.dot(x9, w1_ref[...], preferred_element_type=f32)
    out1 = jnp.maximum(acc1 + b1_ref[...], 0.0).astype(bf16)

    # Stage the intermediate with a zero halo in VMEM (never touches HBM).
    _zero_halo(h1_ref, Ho, Wo, cp, bf16)
    h1_ref[1:1 + Ho, 1:1 + Wo, :] = out1.reshape(Ho, Wo, cp)
    h1 = h1_ref[...]

    # ---- conv2 (3x3, stride 1, pad=1) + bn2: one K=9*Cp matmul --------------
    # dropout is identity in eval mode.
    h9 = jnp.concatenate(_taps9(h1, Ho, Wo, 1, cp), axis=-1)        # (r, 9*Cp)
    acc2 = jnp.dot(h9, w2_ref[...], preferred_element_type=f32) + b2_ref[...]

    # ---- shortcut: 1x1 conv (+bn) downsample, or exact padded-eye identity --
    if stride == 1:
        xs = xh[1:1 + Ho, 1:1 + Wo, :].reshape(r, cin)
    else:
        xs = lax.slice(xh, (1, 1, 0),
                       (1 + stride * (Ho - 1) + 1, 1 + stride * (Wo - 1) + 1, cin),
                       (stride, stride, 1)).reshape(r, cin)
    acc2 = acc2 + jnp.dot(xs, wd_ref[...], preferred_element_type=f32)
    acc2 = acc2 + bd_ref[...]

    o_ref[0] = jnp.maximum(acc2, 0.0).reshape(Ho, Wo, cp).astype(o_ref.dtype)


# ----------------------------------------------------------------------------
# JAX glue: BN folding, im2col weight packing, pallas_call wrapper
# ----------------------------------------------------------------------------
def _fold_bn(gamma, beta, mean, var, eps=1e-5):
    s = gamma / jnp.sqrt(var + eps)
    return s.astype(jnp.float32), (beta - mean * s).astype(jnp.float32)


def _pack_conv3x3(w_oihw, scale, cin_pad, cout_pad):
    """[Cout,Cin,3,3] -> (9*cin_pad, cout_pad) im2col weights, BN folded, bf16.

    Tap order (ky-major, kx-minor, channel-minor) matches _taps9/concatenate."""
    cout, cin = w_oihw.shape[:2]
    w = jnp.transpose(w_oihw, (2, 3, 1, 0)).reshape(9, cin, cout) * scale
    w = jnp.pad(w, ((0, 0), (0, cin_pad - cin), (0, cout_pad - cout)))
    return w.reshape(9 * cin_pad, cout_pad).astype(jnp.bfloat16)


def basic_block_fused(x_nhwc, params, stride=1):
    """Fused Pallas BasicBlock.

    x_nhwc: (N, H, W, Cin) NHWC activations (cast to bf16 internally).
    Returns (N, Ho, Wo, Cp) bf16 NHWC with channels zero-padded to Cp
    (multiple of 128), plus the real channel count `planes`.
    """
    x = x_nhwc.astype(jnp.bfloat16)
    N, H, W, Cin = x.shape
    planes = params["w1"].shape[0]
    Ho = (H - 1) // stride + 1
    Wo = (W - 1) // stride + 1
    Cp = _round_up(planes, 128)          # lane-dense output/intermediate chans

    s1, b1 = _fold_bn(*params["bn1"])
    s2, b2 = _fold_bn(*params["bn2"])
    w1m = _pack_conv3x3(params["w1"], s1, Cin, Cp)      # (9*Cin, Cp)
    w2m = _pack_conv3x3(params["w2"], s2, Cp, Cp)       # (9*Cp,  Cp)
    b1p = jnp.pad(b1, (0, Cp - planes)).reshape(1, Cp)
    b2p = jnp.pad(b2, (0, Cp - planes)).reshape(1, Cp)

    if (stride != 1) or (Cin != planes):
        sd, bd = _fold_bn(*params["bnd"])
        wdm = params["wd"][:, :, 0, 0].T * sd           # (Cin, planes)
        wdm = jnp.pad(wdm, ((0, 0), (0, Cp - planes))).astype(jnp.bfloat16)
        bdp = jnp.pad(bd, (0, Cp - planes)).reshape(1, Cp)
    else:
        # identity shortcut as an exact padded-eye 1x1 matmul (0/1 exact)
        wdm = jnp.pad(jnp.eye(Cin, dtype=jnp.bfloat16), ((0, 0), (0, Cp - Cin)))
        bdp = jnp.zeros((1, Cp), jnp.float32)

    kernel = functools.partial(_basic_block_kernel, stride=stride, Ho=Ho, Wo=Wo)

    # Rough per-step VMEM budget: double-buffered blocks + scratch + value
    # temporaries (im2col slabs, f32 accumulators) + slack.
    blk = (H * W * Cin + 9 * Cin * Cp + 9 * Cp * Cp + Cin * Cp
           + Ho * Wo * Cp) * 2 + 3 * Cp * 4
    scr = ((H + 2) * (W + 2) * Cin + (Ho + 2) * (Wo + 2) * Cp) * 2
    tmp = Ho * Wo * (9 * Cin + 9 * Cp) * 2 + 3 * Ho * Wo * Cp * 4
    vmem_limit = int(min(max(2 * blk + scr + tmp + (8 << 20), 32 << 20), 100 << 20))

    out = pl.pallas_call(
        kernel,
        out_shape=jax.ShapeDtypeStruct((N, Ho, Wo, Cp), jnp.bfloat16),
        grid_spec=pltpu.PrefetchScalarGridSpec(
            num_scalar_prefetch=0,
            grid=(N,),                      # batch axis; megacore 'parallel'
            in_specs=[
                pl.BlockSpec((1, H, W, Cin), lambda n: (n, 0, 0, 0)),
                pl.BlockSpec((9 * Cin, Cp), lambda n: (0, 0)),
                pl.BlockSpec((1, Cp), lambda n: (0, 0)),
                pl.BlockSpec((9 * Cp, Cp), lambda n: (0, 0)),
                pl.BlockSpec((1, Cp), lambda n: (0, 0)),
                pl.BlockSpec((Cin, Cp), lambda n: (0, 0)),
                pl.BlockSpec((1, Cp), lambda n: (0, 0)),
            ],
            out_specs=pl.BlockSpec((1, Ho, Wo, Cp), lambda n: (n, 0, 0, 0)),
            scratch_shapes=[
                pltpu.VMEM((H + 2, W + 2, Cin), jnp.bfloat16),
                pltpu.VMEM((Ho + 2, Wo + 2, Cp), jnp.bfloat16),
            ],
        ),
        compiler_params=pltpu.CompilerParams(
            dimension_semantics=("parallel",),
            vmem_limit_bytes=vmem_limit,
        ),
    )(x, w1m, b1p, w2m, b2p, wdm, bdp)
    return out, planes


# ----------------------------------------------------------------------------
# Small-planes fallback (padding to 128 lanes wastes multi-x on tiny layers)
# ----------------------------------------------------------------------------
def _conv_nhwc(x, w_oihw, stride, pad):
    return lax.conv_general_dilated(
        x, jnp.transpose(w_oihw, (2, 3, 1, 0)),
        window_strides=(stride, stride),
        padding=[(pad, pad), (pad, pad)],
        dimension_numbers=("NHWC", "HWIO", "NHWC"))


def _xla_basic_block(x_nhwc, params, stride, eps=1e-5):
    x = x_nhwc.astype(jnp.float32)

    def bn(y, p):
        g, b, m, v = p
        return (y - m) / jnp.sqrt(v + eps) * g + b

    out = jax.nn.relu(bn(_conv_nhwc(x, params["w1"], stride, 1), params["bn1"]))
    out = bn(_conv_nhwc(out, params["w2"], 1, 1), params["bn2"])
    res = (bn(_conv_nhwc(x, params["wd"], stride, 0), params["bnd"])
           if "wd" in params else x)
    return jax.nn.relu(out + res)


# ----------------------------------------------------------------------------
# NCHW f32 adapter (network-boundary layout/dtype conversion only)
# ----------------------------------------------------------------------------
def basic_block_forward(x_nchw, params, stride=1, min_pallas_planes=64):
    """NCHW f32 in -> NCHW f32 out.  In a full network, keep bf16 NHWC
    channel-padded activations between blocks and call basic_block_fused
    directly; the transpose / channel slice / f32 cast here then run only at
    the network boundaries."""
    x = jnp.transpose(x_nchw, (0, 2, 3, 1))                    # -> NHWC
    planes = params["w1"].shape[0]
    if planes < min_pallas_planes:
        # Perf-review item: don't pay 4-16x zero-padded MXU/HBM cost on tiny
        # CIFAR stages; XLA conv handles those better.
        out = _xla_basic_block(x, params, stride)
    else:
        out, planes = basic_block_fused(x, params, stride)
        out = out[..., :planes].astype(jnp.float32)            # drop channel pad
    return jnp.transpose(out, (0, 3, 1, 2))                    # -> NCHW


# ----------------------------------------------------------------------------
# Pure-JAX reference (for verification)
# ----------------------------------------------------------------------------
def reference_forward(x_nchw, params, stride=1, eps=1e-5):
    x = jnp.transpose(x_nchw, (0, 2, 3, 1)).astype(jnp.float32)

    def bn(y, p):
        g, b, m, v = p
        return (y - m) / jnp.sqrt(v + eps) * g + b

    out = jax.nn.relu(bn(_conv_nhwc(x, params["w1"], stride, 1), params["bn1"]))
    out = bn(_conv_nhwc(out, params["w2"], 1, 1), params["bn2"])
    res = (bn(_conv_nhwc(x, params["wd"], stride, 0), params["bnd"])
           if "wd" in params else x)
    out = jax.nn.relu(out + res)
    return jnp.transpose(out, (0, 3, 1, 2))


# ----------------------------------------------------------------------------
# main
# ----------------------------------------------------------------------------
if __name__ == "__main__":
    key = jax.random.PRNGKey(0)

    def make_bn(k, c):
        k1, k2, k3, k4 = jax.random.split(k, 4)
        return (1.0 + 0.05 * jax.random.normal(k1, (c,), jnp.float32),
                0.05 * jax.random.normal(k2, (c,), jnp.float32),
                0.05 * jax.random.normal(k3, (c,), jnp.float32),
                1.0 + 0.1 * jnp.abs(jax.random.normal(k4, (c,), jnp.float32)))

    def make_params(k, cin, planes, downsample):
        ks = jax.random.split(k, 6)
        p = {
            "w1": 0.1 * jax.random.normal(ks[0], (planes, cin, 3, 3), jnp.float32),
            "w2": 0.1 * jax.random.normal(ks[1], (planes, planes, 3, 3), jnp.float32),
            "bn1": make_bn(ks[2], planes),
            "bn2": make_bn(ks[3], planes),
        }
        if downsample:
            p["wd"] = 0.1 * jax.random.normal(ks[4], (planes, cin, 1, 1), jnp.float32)
            p["bnd"] = make_bn(ks[5], planes)
        return p

    def check(x, params, stride, name):
        fwd = jax.jit(functools.partial(basic_block_forward, stride=stride))
        out = jax.block_until_ready(fwd(x, params))
        ref = reference_forward(x, params, stride=stride)
        assert out.shape == ref.shape, (name, out.shape, ref.shape)
        err = float(jnp.max(jnp.abs(out - ref)))
        scale = float(jnp.max(jnp.abs(ref)))
        # bf16 matmul operands / bf16 output with f32 accumulation.
        assert err <= 2e-2 + 2e-2 * scale, f"{name}: mismatch vs ref: {err} (scale {scale})"

    keys = jax.random.split(key, 6)

    # --- config A: downsample shortcut (Cin != planes), Pallas path ----------
    x_a = jax.random.normal(keys[0], (2, 64, 16, 16), jnp.float32)
    params_a = make_params(keys[1], 64, 128, downsample=True)
    check(x_a, params_a, stride=1, name="downsample")

    # --- config B: identity shortcut (Cin == planes), Pallas path ------------
    x_b = jax.random.normal(keys[2], (2, 128, 16, 16), jnp.float32)
    params_b = make_params(keys[3], 128, 128, downsample=False)
    check(x_b, params_b, stride=1, name="identity")

    # --- config C: tiny planes -> gated XLA-conv fallback (perf-review) ------
    x_c = jax.random.normal(keys[4], (2, 4, 16, 16), jnp.float32)
    params_c = make_params(keys[5], 4, 8, downsample=True)
    check(x_c, params_c, stride=1, name="small-planes-fallback")

    print("KERNEL_OK")
</pallas_src>

<mosaic_0001>
module attributes {stable_mosaic.version = 11 : i64} {
  func.func @_basic_block_kernel(%arg0: i32, %arg1: memref<1x16x16x64xbf16, #tpu.memory_space<vmem>>, %arg2: memref<576x128xbf16, #tpu.memory_space<vmem>>, %arg3: memref<1x128xf32, #tpu.memory_space<vmem>>, %arg4: memref<1152x128xbf16, #tpu.memory_space<vmem>>, %arg5: memref<1x128xf32, #tpu.memory_space<vmem>>, %arg6: memref<64x128xbf16, #tpu.memory_space<vmem>>, %arg7: memref<1x128xf32, #tpu.memory_space<vmem>>, %arg8: memref<1x16x16x128xbf16, #tpu.memory_space<vmem>>, %arg9: memref<18x18x64xbf16, #tpu.memory_space<vmem>>, %arg10: memref<18x18x128xbf16, #tpu.memory_space<vmem>>) attributes {dimension_semantics = [#tpu.dimension_semantics<parallel>], iteration_bounds = array<i64: 2>, scalar_prefetch = 0 : i64, scratch_operands = 2 : i64, tpu.core_type = #tpu.core_type<tc>, window_params = [{transform_indices = @transform_0, window_bounds = array<i64: 1, 16, 16, 64>}, {pipeline_mode = #tpu.pipeline_mode<synchronous>, transform_indices = @transform_1, window_bounds = array<i64: 576, 128>}, {pipeline_mode = #tpu.pipeline_mode<synchronous>, transform_indices = @transform_2, window_bounds = array<i64: 1, 128>}, {pipeline_mode = #tpu.pipeline_mode<synchronous>, transform_indices = @transform_3, window_bounds = array<i64: 1152, 128>}, {pipeline_mode = #tpu.pipeline_mode<synchronous>, transform_indices = @transform_4, window_bounds = array<i64: 1, 128>}, {pipeline_mode = #tpu.pipeline_mode<synchronous>, transform_indices = @transform_5, window_bounds = array<i64: 64, 128>}, {pipeline_mode = #tpu.pipeline_mode<synchronous>, transform_indices = @transform_6, window_bounds = array<i64: 1, 128>}, {transform_indices = @transform_7, window_bounds = array<i64: 1, 16, 16, 128>}]} {
    %cst = arith.constant 0.000000e+00 : bf16
    %0 = vector.broadcast %cst : bf16 to vector<1x18x64xbf16>
    %c0 = arith.constant 0 : index
    %c0_0 = arith.constant 0 : index
    %c0_1 = arith.constant 0 : index
    %1 = vector.load %arg9[%c0, %c0_0, %c0_1] : memref<18x18x64xbf16, #tpu.memory_space<vmem>>, vector<1x18x64xbf16>
    tpu.vector_store %arg9[%c0, %c0_0, %c0_1], %0 {strides = array<i32>} : memref<18x18x64xbf16, #tpu.memory_space<vmem>>, vector<1x18x64xbf16>,
    %cst_2 = arith.constant 0.000000e+00 : bf16
    %2 = vector.broadcast %cst_2 : bf16 to vector<1x18x64xbf16>
    %c17 = arith.constant 17 : index
    %c0_3 = arith.constant 0 : index
    %c0_4 = arith.constant 0 : index
    %3 = vector.load %arg9[%c17, %c0_3, %c0_4] : memref<18x18x64xbf16, #tpu.memory_space<vmem>>, vector<1x18x64xbf16>
    tpu.vector_store %arg9[%c17, %c0_3, %c0_4], %2 {strides = array<i32>} : memref<18x18x64xbf16, #tpu.memory_space<vmem>>, vector<1x18x64xbf16>,
    %cst_5 = arith.constant 0.000000e+00 : bf16
    %4 = vector.broadcast %cst_5 : bf16 to vector<18x1x64xbf16>
    %c0_6 = arith.constant 0 : index
    %c0_7 = arith.constant 0 : index
    %c0_8 = arith.constant 0 : index
    %5 = vector.load %arg9[%c0_6, %c0_7, %c0_8] : memref<18x18x64xbf16, #tpu.memory_space<vmem>>, vector<18x1x64xbf16>
    tpu.vector_store %arg9[%c0_6, %c0_7, %c0_8], %4 {strides = array<i32>} : memref<18x18x64xbf16, #tpu.memory_space<vmem>>, vector<18x1x64xbf16>,
    %cst_9 = arith.constant 0.000000e+00 : bf16
    %6 = vector.broadcast %cst_9 : bf16 to vector<18x1x64xbf16>
    %c0_10 = arith.constant 0 : index
    %c17_11 = arith.constant 17 : index
    %c0_12 = arith.constant 0 : index
    %7 = vector.load %arg9[%c0_10, %c17_11, %c0_12] : memref<18x18x64xbf16, #tpu.memory_space<vmem>>, vector<18x1x64xbf16>
    tpu.vector_store %arg9[%c0_10, %c17_11, %c0_12], %6 {strides = array<i32>} : memref<18x18x64xbf16, #tpu.memory_space<vmem>>, vector<18x1x64xbf16>,
    %c0_13 = arith.constant 0 : index
    %c0_14 = arith.constant 0 : index
    %c0_15 = arith.constant 0 : index
    %c0_16 = arith.constant 0 : index
    %8 = vector.load %arg1[%c0_13, %c0_14, %c0_15, %c0_16] : memref<1x16x16x64xbf16, #tpu.memory_space<vmem>>, vector<1x16x16x64xbf16>
    %9 = vector.shape_cast %8 : vector<1x16x16x64xbf16> to vector<16x16x64xbf16>
    %c1 = arith.constant 1 : index
    %c1_17 = arith.constant 1 : index
    %c0_18 = arith.constant 0 : index
    %10 = vector.load %arg9[%c1, %c1_17, %c0_18] : memref<18x18x64xbf16, #tpu.memory_space<vmem>>, vector<16x16x64xbf16>
    tpu.vector_store %arg9[%c1, %c1_17, %c0_18], %9 {strides = array<i32>} : memref<18x18x64xbf16, #tpu.memory_space<vmem>>, vector<16x16x64xbf16>,
    %c0_19 = arith.constant 0 : index
    %c0_20 = arith.constant 0 : index
    %c0_21 = arith.constant 0 : index
    %11 = vector.load %arg9[%c0_19, %c0_20, %c0_21] : memref<18x18x64xbf16, #tpu.memory_space<vmem>>, vector<18x18x64xbf16>
    %12 = vector.extract_strided_slice %11 {offsets = [0, 0, 0], sizes = [16, 16, 64], strides = [1, 1, 1]} : vector<18x18x64xbf16> to vector<16x16x64xbf16>
    %13 = vector.shape_cast %12 : vector<16x16x64xbf16> to vector<256x64xbf16>
    %14 = vector.extract_strided_slice %11 {offsets = [0, 1, 0], sizes = [16, 16, 64], strides = [1, 1, 1]} : vector<18x18x64xbf16> to vector<16x16x64xbf16>
    %15 = vector.shape_cast %14 : vector<16x16x64xbf16> to vector<256x64xbf16>
    %16 = vector.extract_strided_slice %11 {offsets = [0, 2, 0], sizes = [16, 16, 64], strides = [1, 1, 1]} : vector<18x18x64xbf16> to vector<16x16x64xbf16>
    %17 = vector.shape_cast %16 : vector<16x16x64xbf16> to vector<256x64xbf16>
    %18 = vector.extract_strided_slice %11 {offsets = [1, 0, 0], sizes = [16, 16, 64], strides = [1, 1, 1]} : vector<18x18x64xbf16> to vector<16x16x64xbf16>
    %19 = vector.shape_cast %18 : vector<16x16x64xbf16> to vector<256x64xbf16>
    %20 = vector.extract_strided_slice %11 {offsets = [1, 1, 0], sizes = [16, 16, 64], strides = [1, 1, 1]} : vector<18x18x64xbf16> to vector<16x16x64xbf16>
    %21 = vector.shape_cast %20 : vector<16x16x64xbf16> to vector<256x64xbf16>
    %22 = vector.extract_strided_slice %11 {offsets = [1, 2, 0], sizes = [16, 16, 64], strides = [1, 1, 1]} : vector<18x18x64xbf16> to vector<16x16x64xbf16>
    %23 = vector.shape_cast %22 : vector<16x16x64xbf16> to vector<256x64xbf16>
    %24 = vector.extract_strided_slice %11 {offsets = [2, 0, 0], sizes = [16, 16, 64], strides = [1, 1, 1]} : vector<18x18x64xbf16> to vector<16x16x64xbf16>
    %25 = vector.shape_cast %24 : vector<16x16x64xbf16> to vector<256x64xbf16>
    %26 = vector.extract_strided_slice %11 {offsets = [2, 1, 0], sizes = [16, 16, 64], strides = [1, 1, 1]} : vector<18x18x64xbf16> to vector<16x16x64xbf16>
    %27 = vector.shape_cast %26 : vector<16x16x64xbf16> to vector<256x64xbf16>
    %28 = vector.extract_strided_slice %11 {offsets = [2, 2, 0], sizes = [16, 16, 64], strides = [1, 1, 1]} : vector<18x18x64xbf16> to vector<16x16x64xbf16>
    %29 = vector.shape_cast %28 : vector<16x16x64xbf16> to vector<256x64xbf16>
    %30 = tpu.concatenate %13, %15, %17, %19, %21, %23, %25, %27, %29 in 1 : vector<256x64xbf16>, vector<256x64xbf16>, vector<256x64xbf16>, vector<256x64xbf16>, vector<256x64xbf16>, vector<256x64xbf16>, vector<256x64xbf16>, vector<256x64xbf16>, vector<256x64xbf16> -> vector<256x576xbf16>
    %c0_22 = arith.constant 0 : index
    %c0_23 = arith.constant 0 : index
    %31 = vector.load %arg2[%c0_22, %c0_23] : memref<576x128xbf16, #tpu.memory_space<vmem>>, vector<576x128xbf16>
    %cst_24 = arith.constant dense<0.000000e+00> : vector<256x128xf32>
    %32 = tpu.matmul %30, %31, %cst_24 {dimension_numbers = #tpu.dot_dimension_numbers<[1], [0], [0], [1], [0, 0, 1, 1], [], []>} : vector<256x576xbf16>, vector<576x128xbf16>, vector<256x128xf32> -> vector<256x128xf32>
    %c0_25 = arith.constant 0 : index
    %c0_26 = arith.constant 0 : index
    %33 = vector.load %arg3[%c0_25, %c0_26] : memref<1x128xf32, #tpu.memory_space<vmem>>, vector<1x128xf32>
    %34 = vector.broadcast %33 : vector<1x128xf32> to vector<256x128xf32>
    %35 = arith.addf %32, %34 : vector<256x128xf32>
    %cst_27 = arith.constant 0.000000e+00 : f32
    %36 = vector.broadcast %cst_27 : f32 to vector<256x128xf32>
    %37 = arith.maximumf %35, %36 : vector<256x128xf32>
    %38 = arith.truncf %37 : vector<256x128xf32> to vector<256x128xbf16>
    %cst_28 = arith.constant 0.000000e+00 : bf16
    %39 = vector.broadcast %cst_28 : bf16 to vector<1x18x128xbf16>
    %c0_29 = arith.constant 0 : index
    %c0_30 = arith.constant 0 : index
    %c0_31 = arith.constant 0 : index
    %40 = vector.load %arg10[%c0_29, %c0_30, %c0_31] : memref<18x18x128xbf16, #tpu.memory_space<vmem>>, vector<1x18x128xbf16>
    tpu.vector_store %arg10[%c0_29, %c0_30, %c0_31], %39 {strides = array<i32>} : memref<18x18x128xbf16, #tpu.memory_space<vmem>>, vector<1x18x128xbf16>,
    %cst_32 = arith.constant 0.000000e+00 : bf16
    %41 = vector.broadcast %cst_32 : bf16 to vector<1x18x128xbf16>
    %c17_33 = arith.constant 17 : index
    %c0_34 = arith.constant 0 : index
    %c0_35 = arith.constant 0 : index
    %42 = vector.load %arg10[%c17_33, %c0_34, %c0_35] : memref<18x18x128xbf16, #tpu.memory_space<vmem>>, vector<1x18x128xbf16>
    tpu.vector_store %arg10[%c17_33, %c0_34, %c0_35], %41 {strides = array<i32>} : memref<18x18x128xbf16, #tpu.memory_space<vmem>>, vector<1x18x128xbf16>,
    %cst_36 = arith.constant 0.000000e+00 : bf16
    %43 = vector.broadcast %cst_36 : bf16 to vector<18x1x128xbf16>
    %c0_37 = arith.constant 0 : index
    %c0_38 = arith.constant 0 : index
    %c0_39 = arith.constant 0 : index
    %44 = vector.load %arg10[%c0_37, %c0_38, %c0_39] : memref<18x18x128xbf16, #tpu.memory_space<vmem>>, vector<18x1x128xbf16>
    tpu.vector_store %arg10[%c0_37, %c0_38, %c0_39], %43 {strides = array<i32>} : memref<18x18x128xbf16, #tpu.memory_space<vmem>>, vector<18x1x128xbf16>,
    %cst_40 = arith.constant 0.000000e+00 : bf16
    %45 = vector.broadcast %cst_40 : bf16 to vector<18x1x128xbf16>
    %c0_41 = arith.constant 0 : index
    %c17_42 = arith.constant 17 : index
    %c0_43 = arith.constant 0 : index
    %46 = vector.load %arg10[%c0_41, %c17_42, %c0_43] : memref<18x18x128xbf16, #tpu.memory_space<vmem>>, vector<18x1x128xbf16>
    tpu.vector_store %arg10[%c0_41, %c17_42, %c0_43], %45 {strides = array<i32>} : memref<18x18x128xbf16, #tpu.memory_space<vmem>>, vector<18x1x128xbf16>,
    %47 = vector.shape_cast %38 : vector<256x128xbf16> to vector<16x16x128xbf16>
    %c1_44 = arith.constant 1 : index
    %c1_45 = arith.constant 1 : index
    %c0_46 = arith.constant 0 : index
    %48 = vector.load %arg10[%c1_44, %c1_45, %c0_46] : memref<18x18x128xbf16, #tpu.memory_space<vmem>>, vector<16x16x128xbf16>
    tpu.vector_store %arg10[%c1_44, %c1_45, %c0_46], %47 {strides = array<i32>} : memref<18x18x128xbf16, #tpu.memory_space<vmem>>, vector<16x16x128xbf16>,
    %c0_47 = arith.constant 0 : index
    %c0_48 = arith.constant 0 : index
    %c0_49 = arith.constant 0 : index
    %49 = vector.load %arg10[%c0_47, %c0_48, %c0_49] : memref<18x18x128xbf16, #tpu.memory_space<vmem>>, vector<18x18x128xbf16>
    %50 = vector.extract_strided_slice %49 {offsets = [0, 0, 0], sizes = [16, 16, 128], strides = [1, 1, 1]} : vector<18x18x128xbf16> to vector<16x16x128xbf16>
    %51 = vector.shape_cast %50 : vector<16x16x128xbf16> to vector<256x128xbf16>
    %52 = vector.extract_strided_slice %49 {offsets = [0, 1, 0], sizes = [16, 16, 128], strides = [1, 1, 1]} : vector<18x18x128xbf16> to vector<16x16x128xbf16>
    %53 = vector.shape_cast %52 : vector<16x16x128xbf16> to vector<256x128xbf16>
    %54 = vector.extract_strided_slice %49 {offsets = [0, 2, 0], sizes = [16, 16, 128], strides = [1, 1, 1]} : vector<18x18x128xbf16> to vector<16x16x128xbf16>
    %55 = vector.shape_cast %54 : vector<16x16x128xbf16> to vector<256x128xbf16>
    %56 = vector.extract_strided_slice %49 {offsets = [1, 0, 0], sizes = [16, 16, 128], strides = [1, 1, 1]} : vector<18x18x128xbf16> to vector<16x16x128xbf16>
    %57 = vector.shape_cast %56 : vector<16x16x128xbf16> to vector<256x128xbf16>
    %58 = vector.extract_strided_slice %49 {offsets = [1, 1, 0], sizes = [16, 16, 128], strides = [1, 1, 1]} : vector<18x18x128xbf16> to vector<16x16x128xbf16>
    %59 = vector.shape_cast %58 : vector<16x16x128xbf16> to vector<256x128xbf16>
    %60 = vector.extract_strided_slice %49 {offsets = [1, 2, 0], sizes = [16, 16, 128], strides = [1, 1, 1]} : vector<18x18x128xbf16> to vector<16x16x128xbf16>
    %61 = vector.shape_cast %60 : vector<16x16x128xbf16> to vector<256x128xbf16>
    %62 = vector.extract_strided_slice %49 {offsets = [2, 0, 0], sizes = [16, 16, 128], strides = [1, 1, 1]} : vector<18x18x128xbf16> to vector<16x16x128xbf16>
    %63 = vector.shape_cast %62 : vector<16x16x128xbf16> to vector<256x128xbf16>
    %64 = vector.extract_strided_slice %49 {offsets = [2, 1, 0], sizes = [16, 16, 128], strides = [1, 1, 1]} : vector<18x18x128xbf16> to vector<16x16x128xbf16>
    %65 = vector.shape_cast %64 : vector<16x16x128xbf16> to vector<256x128xbf16>
    %66 = vector.extract_strided_slice %49 {offsets = [2, 2, 0], sizes = [16, 16, 128], strides = [1, 1, 1]} : vector<18x18x128xbf16> to vector<16x16x128xbf16>
    %67 = vector.shape_cast %66 : vector<16x16x128xbf16> to vector<256x128xbf16>
    %68 = tpu.concatenate %51, %53, %55, %57, %59, %61, %63, %65, %67 in 1 : vector<256x128xbf16>, vector<256x128xbf16>, vector<256x128xbf16>, vector<256x128xbf16>, vector<256x128xbf16>, vector<256x128xbf16>, vector<256x128xbf16>, vector<256x128xbf16>, vector<256x128xbf16> -> vector<256x1152xbf16>
    %c0_50 = arith.constant 0 : index
    %c0_51 = arith.constant 0 : index
    %69 = vector.load %arg4[%c0_50, %c0_51] : memref<1152x128xbf16, #tpu.memory_space<vmem>>, vector<1152x128xbf16>
    %cst_52 = arith.constant dense<0.000000e+00> : vector<256x128xf32>
    %70 = tpu.matmul %68, %69, %cst_52 {dimension_numbers = #tpu.dot_dimension_numbers<[1], [0], [0], [1], [0, 0, 1, 1], [], []>} : vector<256x1152xbf16>, vector<1152x128xbf16>, vector<256x128xf32> -> vector<256x128xf32>
    %c0_53 = arith.constant 0 : index
    %c0_54 = arith.constant 0 : index
    %71 = vector.load %arg5[%c0_53, %c0_54] : memref<1x128xf32, #tpu.memory_space<vmem>>, vector<1x128xf32>
    %72 = vector.broadcast %71 : vector<1x128xf32> to vector<256x128xf32>
    %73 = arith.addf %70, %72 : vector<256x128xf32>
    %74 = vector.extract_strided_slice %11 {offsets = [1, 1, 0], sizes = [16, 16, 64], strides = [1, 1, 1]} : vector<18x18x64xbf16> to vector<16x16x64xbf16>
    %75 = vector.shape_cast %74 : vector<16x16x64xbf16> to vector<256x64xbf16>
    %c0_55 = arith.constant 0 : index
    %c0_56 = arith.constant 0 : index
    %76 = vector.load %arg6[%c0_55, %c0_56] : memref<64x128xbf16, #tpu.memory_space<vmem>>, vector<64x128xbf16>
    %cst_57 = arith.constant dense<0.000000e+00> : vector<256x128xf32>
    %77 = tpu.matmul %75, %76, %cst_57 {dimension_numbers = #tpu.dot_dimension_numbers<[1], [0], [0], [1], [0, 0, 1, 1], [], []>} : vector<256x64xbf16>, vector<64x128xbf16>, vector<256x128xf32> -> vector<256x128xf32>
    %78 = arith.addf %73, %77 : vector<256x128xf32>
    %c0_58 = arith.constant 0 : index
    %c0_59 = arith.constant 0 : index
    %79 = vector.load %arg7[%c0_58, %c0_59] : memref<1x128xf32, #tpu.memory_space<vmem>>, vector<1x128xf32>
    %80 = vector.broadcast %79 : vector<1x128xf32> to vector<256x128xf32>
    %81 = arith.addf %78, %80 : vector<256x128xf32>
    %cst_60 = arith.constant 0.000000e+00 : f32
    %82 = vector.broadcast %cst_60 : f32 to vector<256x128xf32>
    %83 = arith.maximumf %81, %82 : vector<256x128xf32>
    %84 = vector.shape_cast %83 : vector<256x128xf32> to vector<16x16x128xf32>
    %85 = arith.truncf %84 : vector<16x16x128xf32> to vector<16x16x128xbf16>
    %c0_61 = arith.constant 0 : index
    %c0_62 = arith.constant 0 : index
    %c0_63 = arith.constant 0 : index
    %c0_64 = arith.constant 0 : index
    %86 = vector.load %arg8[%c0_61, %c0_62, %c0_63, %c0_64] : memref<1x16x16x128xbf16, #tpu.memory_space<vmem>>, vector<1x16x16x128xbf16>
    %87 = vector.shape_cast %86 : vector<1x16x16x128xbf16> to vector<16x16x128xbf16>
    %88 = vector.shape_cast %85 : vector<16x16x128xbf16> to vector<1x16x16x128xbf16>
    tpu.vector_store %arg8[%c0_61, %c0_62, %c0_63, %c0_64], %88 {strides = array<i32>} : memref<1x16x16x128xbf16, #tpu.memory_space<vmem>>, vector<1x16x16x128xbf16>,
    return
  }
  func.func @transform_0(%arg0: i32) -> (i32, i32, i32, i32) {
    %c0_i32 = arith.constant 0 : i32
    %c0_i32_0 = arith.constant 0 : i32
    %c0_i32_1 = arith.constant 0 : i32
    %c0_i32_2 = arith.constant 0 : i32
    return %arg0, %c0_i32, %c0_i32_0, %c0_i32_1 : i32, i32, i32, i32
  }
  func.func @transform_1(%arg0: i32) -> (i32, i32) {
    %c0_i32 = arith.constant 0 : i32
    %c0_i32_0 = arith.constant 0 : i32
    %c0_i32_1 = arith.constant 0 : i32
    return %c0_i32, %c0_i32_0 : i32, i32
  }
  func.func @transform_2(%arg0: i32) -> (i32, i32) {
    %c0_i32 = arith.constant 0 : i32
    %c0_i32_0 = arith.constant 0 : i32
    %c0_i32_1 = arith.constant 0 : i32
    return %c0_i32, %c0_i32_0 : i32, i32
  }
  func.func @transform_3(%arg0: i32) -> (i32, i32) {
    %c0_i32 = arith.constant 0 : i32
    %c0_i32_0 = arith.constant 0 : i32
    %c0_i32_1 = arith.constant 0 : i32
    return %c0_i32, %c0_i32_0 : i32, i32
  }
  func.func @transform_4(%arg0: i32) -> (i32, i32) {
    %c0_i32 = arith.constant 0 : i32
    %c0_i32_0 = arith.constant 0 : i32
    %c0_i32_1 = arith.constant 0 : i32
    return %c0_i32, %c0_i32_0 : i32, i32
  }
  func.func @transform_5(%arg0: i32) -> (i32, i32) {
    %c0_i32 = arith.constant 0 : i32
    %c0_i32_0 = arith.constant 0 : i32
    %c0_i32_1 = arith.constant 0 : i32
    return %c0_i32, %c0_i32_0 : i32, i32
  }
  func.func @transform_6(%arg0: i32) -> (i32, i32) {
    %c0_i32 = arith.constant 0 : i32
    %c0_i32_0 = arith.constant 0 : i32
    %c0_i32_1 = arith.constant 0 : i32
    return %c0_i32, %c0_i32_0 : i32, i32
  }
  func.func @transform_7(%arg0: i32) -> (i32, i32, i32, i32) {
    %c0_i32 = arith.constant 0 : i32
    %c0_i32_0 = arith.constant 0 : i32
    %c0_i32_1 = arith.constant 0 : i32
    %c0_i32_2 = arith.constant 0 : i32
    return %arg0, %c0_i32, %c0_i32_0, %c0_i32_1 : i32, i32, i32, i32
  }
}

</mosaic_0001>

<llo_original>
// kernel: basic_block_forward.1
$region0: #{basic_block_forward.1}
  #allocation0 [shape = 'u32[]', space=smem, size = 0x4, offset = 0x4, fixed_abs, tag = 'smem constant byte address 0x4 - core index']
  #allocation1 [shape = 'u32[144,128]{1,0:T(1,128)}', space=vmem, size = 0x12000, scoped, tag = 'internal scratch']
  #allocation2 [shape = 'bf16[18,18,64]{2,1,0:T(8,128)(2,1)}', space=vmem, size = 0x1b000, scoped, tag = 'scratch operand']
  #allocation3 [shape = 'bf16[18,18,128]{2,1,0:T(8,128)(2,1)}', space=vmem, size = 0x1b000, scoped, tag = 'scratch operand']
  %s0 = inlined_call_operand.vmem [shape: bf16[2,16,16,64], index: 0, kind: input, shape index: {}]
  %s1 = inlined_call_operand.vmem [shape: bf16[576,128], index: 1, kind: input, shape index: {}]
  %s2 = inlined_call_operand.vmem [shape: f32[1,128], index: 2, kind: input, shape index: {}]
  %s3 = inlined_call_operand.vmem [shape: bf16[1152,128], index: 3, kind: input, shape index: {}]
  %s4 = inlined_call_operand.vmem [shape: f32[1,128], index: 4, kind: input, shape index: {}]
  %s5 = inlined_call_operand.vmem [shape: bf16[64,128], index: 5, kind: input, shape index: {}]
  %s6 = inlined_call_operand.vmem [shape: f32[1,128], index: 6, kind: input, shape index: {}]
  %s7 = inlined_call_operand.vmem [shape: bf16[2,16,16,128], index: 7, kind: output, shape index: {}]
  %s8 = sld [smem:[#allocation0]]
  $region61: #{basic_block_forward.1} parent=0
    _
  %s10 = ssub.s32 1, %s8
  %s11 = scalar_select 0, %s10, %s8
  loop: start=0, step=1, limit=4
  $region2: #{basic_block_forward.1} parent=0 // loop_pre_header
    _
  $region3: #{basic_block_forward.1} parent=0 // loop_header
    %s13 = sphi 0, %s17
    %p14 = scmp.ge.s32.totalorder %s13, 4
    %s23 = sphi 0, %s25
    %s26 = sphi 0, %s23
    %s27 = sphi 0, %s26
    %s43 = sphi 0, %s27
    %s47 = sphi 0, %s47
    %s49 = sphi 0, %s47
    %s50 = sphi 0, %s49
    %s64 = sphi 0, %s50
    %s68 = sphi 0, %s68
    %s70 = sphi 0, %s68
    %s71 = sphi 0, %s70
    %s85 = sphi 0, %s71
    %s89 = sphi 0, %s89
    %s91 = sphi 0, %s89
    %s92 = sphi 0, %s91
    %s106 = sphi 0, %s92
    %s110 = sphi 0, %s110
    %s112 = sphi 0, %s110
    %s113 = sphi 0, %s112
    %s127 = sphi 0, %s113
    %s131 = sphi 0, %s131
    %s133 = sphi 0, %s131
    %s134 = sphi 0, %s133
    %s148 = sphi 0, %s134
    %s152 = sphi 0, %s152
    %s154 = sphi 0, %s152
    %s155 = sphi 0, %s154
    %s169 = sphi 0, %s155
    %s175 = sphi 0, %s177
    %s178 = sphi 0, %s175
    %s179 = sphi 0, %s178
    %s195 = sphi 0, %s179
  $region4: #{basic_block_forward.1} parent=0 // loop_header_branch
    %16 = sbr.rel (%p14) target = $region8
  $region5: #{basic_block_forward.1} parent=0 // loop_body
    %s18 = ssub.s32 %s13, 1
    %s19 = ssub.s32 %s13, 2
    %s20 = sadd.s32 %s13, 1
    %s21 = ssub.s32 %s13, %s20
    %p22 = scmp.eq.s32.totalorder %s21, 0
    %s24 = sadd.s32 %s23, 1
    %s25 = scalar_select %p22, %s23, %s24
    %p28 = pneg %p22
    %p29 = scmp.eq.s32.totalorder %s13, 1
    %p30 = por %p28, %p29
    %p31 = scmp.ne.s32.totalorder %s23, %s26
    %p32 = scmp.eq.s32.totalorder %s13, 0
    %p33 = por %p31, %p32
    %p34 = scmp.ne.s32.totalorder %s23, %s26
    %p35 = scmp.eq.s32.totalorder %s18, 1
    %p36 = por %p34, %p35
    %p37 = scmp.ne.s32.totalorder %s26, %s27
    %p38 = scmp.eq.s32.totalorder %s18, 0
    %p39 = por %p37, %p38
    %p40 = scmp.ne.s32.totalorder %s26, %s27
    %p41 = scmp.eq.s32.totalorder %s19, 1
    %p42 = por %p40, %p41
    %p44 = scmp.ne.s32.totalorder %s27, %s43
    %p45 = scmp.eq.s32.totalorder %s19, 0
    %p46 = por %p44, %p45
    %s48 = sadd.s32 %s47, 1
    %p51 = scmp.eq.s32.totalorder %s13, 1
    %p52 = scmp.ne.s32.totalorder %s47, %s49
    %p53 = scmp.eq.s32.totalorder %s13, 0
    %p54 = por %p52, %p53
    %p55 = scmp.ne.s32.totalorder %s47, %s49
    %p56 = scmp.eq.s32.totalorder %s18, 1
    %p57 = por %p55, %p56
    %p58 = scmp.ne.s32.totalorder %s49, %s50
    %p59 = scmp.eq.s32.totalorder %s18, 0
    %p60 = por %p58, %p59
    %p61 = scmp.ne.s32.totalorder %s49, %s50
    %p62 = scmp.eq.s32.totalorder %s19, 1
    %p63 = por %p61, %p62
    %p65 = scmp.ne.s32.totalorder %s50, %s64
    %p66 = scmp.eq.s32.totalorder %s19, 0
    %p67 = por %p65, %p66
    %s69 = sadd.s32 %s68, 1
    %p72 = scmp.eq.s32.totalorder %s13, 1
    %p73 = scmp.ne.s32.totalorder %s68, %s70
    %p74 = scmp.eq.s32.totalorder %s13, 0
    %p75 = por %p73, %p74
    %p76 = scmp.ne.s32.totalorder %s68, %s70
    %p77 = scmp.eq.s32.totalorder %s18, 1
    %p78 = por %p76, %p77
    %p79 = scmp.ne.s32.totalorder %s70, %s71
    %p80 = scmp.eq.s32.totalorder %s18, 0
    %p81 = por %p79, %p80
    %p82 = scmp.ne.s32.totalorder %s70, %s71
    %p83 = scmp.eq.s32.totalorder %s19, 1
    %p84 = por %p82, %p83
    %p86 = scmp.ne.s32.totalorder %s71, %s85
    %p87 = scmp.eq.s32.totalorder %s19, 0
    %p88 = por %p86, %p87
    %s90 = sadd.s32 %s89, 1
    %p93 = scmp.eq.s32.totalorder %s13, 1
    %p94 = scmp.ne.s32.totalorder %s89, %s91
    %p95 = scmp.eq.s32.totalorder %s13, 0
    %p96 = por %p94, %p95
    %p97 = scmp.ne.s32.totalorder %s89, %s91
    %p98 = scmp.eq.s32.totalorder %s18, 1
    %p99 = por %p97, %p98
    %p100 = scmp.ne.s32.totalorder %s91, %s92
    %p101 = scmp.eq.s32.totalorder %s18, 0
    %p102 = por %p100, %p101
    %p103 = scmp.ne.s32.totalorder %s91, %s92
    %p104 = scmp.eq.s32.totalorder %s19, 1
    %p105 = por %p103, %p104
    %p107 = scmp.ne.s32.totalorder %s92, %s106
    %p108 = scmp.eq.s32.totalorder %s19, 0
    %p109 = por %p107, %p108
    %s111 = sadd.s32 %s110, 1
    %p114 = scmp.eq.s32.totalorder %s13, 1
    %p115 = scmp.ne.s32.totalorder %s110, %s112
    %p116 = scmp.eq.s32.totalorder %s13, 0
    %p117 = por %p115, %p116
    %p118 = scmp.ne.s32.totalorder %s110, %s112
    %p119 = scmp.eq.s32.totalorder %s18, 1
    %p120 = por %p118, %p119
    %p121 = scmp.ne.s32.totalorder %s112, %s113
    %p122 = scmp.eq.s32.totalorder %s18, 0
    %p123 = por %p121, %p122
    %p124 = scmp.ne.s32.totalorder %s112, %s113
    %p125 = scmp.eq.s32.totalorder %s19, 1
    %p126 = por %p124, %p125
    %p128 = scmp.ne.s32.totalorder %s113, %s127
    %p129 = scmp.eq.s32.totalorder %s19, 0
    %p130 = por %p128, %p129
    %s132 = sadd.s32 %s131, 1
    %p135 = scmp.eq.s32.totalorder %s13, 1
    %p136 = scmp.ne.s32.totalorder %s131, %s133
    %p137 = scmp.eq.s32.totalorder %s13, 0
    %p138 = por %p136, %p137
    %p139 = scmp.ne.s32.totalorder %s131, %s133
    %p140 = scmp.eq.s32.totalorder %s18, 1
    %p141 = por %p139, %p140
    %p142 = scmp.ne.s32.totalorder %s133, %s134
    %p143 = scmp.eq.s32.totalorder %s18, 0
    %p144 = por %p142, %p143
    %p145 = scmp.ne.s32.totalorder %s133, %s134
    %p146 = scmp.eq.s32.totalorder %s19, 1
    %p147 = por %p145, %p146
    %p149 = scmp.ne.s32.totalorder %s134, %s148
    %p150 = scmp.eq.s32.totalorder %s19, 0
    %p151 = por %p149, %p150
    %s153 = sadd.s32 %s152, 1
    %p156 = scmp.eq.s32.totalorder %s13, 1
    %p157 = scmp.ne.s32.totalorder %s152, %s154
    %p158 = scmp.eq.s32.totalorder %s13, 0
    %p159 = por %p157, %p158
    %p160 = scmp.ne.s32.totalorder %s152, %s154
    %p161 = scmp.eq.s32.totalorder %s18, 1
    %p162 = por %p160, %p161
    %p163 = scmp.ne.s32.totalorder %s154, %s155
    %p164 = scmp.eq.s32.totalorder %s18, 0
    %p165 = por %p163, %p164
    %p166 = scmp.ne.s32.totalorder %s154, %s155
    %p167 = scmp.eq.s32.totalorder %s19, 1
    %p168 = por %p166, %p167
    %p170 = scmp.ne.s32.totalorder %s155, %s169
    %p171 = scmp.eq.s32.totalorder %s19, 0
    %p172 = por %p170, %p171
    %s173 = ssub.s32 %s13, %s20
    %p174 = scmp.eq.s32.totalorder %s173, 0
    %s176 = sadd.s32 %s175, 1
    %s177 = scalar_select %p174, %s175, %s176
    %p180 = pneg %p174
    %p181 = scmp.eq.s32.totalorder %s13, 1
    %p182 = por %p180, %p181
    %p183 = scmp.ne.s32.totalorder %s175, %s178
    %p184 = scmp.eq.s32.totalorder %s13, 0
    %p185 = por %p183, %p184
    %p186 = scmp.ne.s32.totalorder %s175, %s178
    %p187 = scmp.eq.s32.totalorder %s18, 1
    %p188 = por %p186, %p187
    %p189 = scmp.ne.s32.totalorder %s178, %s179
    %p190 = scmp.eq.s32.totalorder %s18, 0
    %p191 = por %p189, %p190
    %p192 = scmp.ne.s32.totalorder %s178, %s179
    %p193 = scmp.eq.s32.totalorder %s19, 1
    %p194 = por %p192, %p193
    %p196 = scmp.ne.s32.totalorder %s179, %s195
    %p197 = scmp.eq.s32.totalorder %s19, 0
    %p198 = por %p196, %p197
    %p199 = scmp.le.s32.totalorder 1, %s13
    %p200 = scmp.lt.s32.totalorder %s13, 3
    %p201 = pnand %p199, %p200
    %p202 = pneg %p201
    // Predicated region
    $region9: #{basic_block_forward.1} parent=5 // pred_check
      _
    $region10: #{basic_block_forward.1} parent=5 // pred_check_branch
      %204 = sbr.rel (%p201) target = $region12
    $region11: #{basic_block_forward.1} parent=5 // pred_region
      %s205 = ssub.s32 %s13, 1
      // Predicated region
      $region13: #{basic_block_forward.1} parent=11 // pred_check
        %p206 = pneg %p60
      $region14: #{basic_block_forward.1} parent=11 // pred_check_branch
        %208 = sbr.rel (%p206) target = $region16
      $region15: #{basic_block_forward.1} parent=11 // pred_region
        _
      $region16: #{basic_block_forward.1} parent=11 // pred_fallthru
        _
      // Predicated region
      $region17: #{basic_block_forward.1} parent=11 // pred_check
        %p209 = pneg %p81
      $region18: #{basic_block_forward.1} parent=11 // pred_check_branch
        %211 = sbr.rel (%p209) target = $region20
      $region19: #{basic_block_forward.1} parent=11 // pred_region
        _
      $region20: #{basic_block_forward.1} parent=11 // pred_fallthru
        _
      // Predicated region
      $region21: #{basic_block_forward.1} parent=11 // pred_check
        %p212 = pneg %p102
      $region22: #{basic_block_forward.1} parent=11 // pred_check_branch
        %214 = sbr.rel (%p212) target = $region24
      $region23: #{basic_block_forward.1} parent=11 // pred_region
        _
      $region24: #{basic_block_forward.1} parent=11 // pred_fallthru
        _
      // Predicated region
      $region25: #{basic_block_forward.1} parent=11 // pred_check
        %p215 = pneg %p123
      $region26: #{basic_block_forward.1} parent=11 // pred_check_branch
        %217 = sbr.rel (%p215) target = $region28
      $region27: #{basic_block_forward.1} parent=11 // pred_region
        _
      $region28: #{basic_block_forward.1} parent=11 // pred_fallthru
        _
      // Predicated region
      $region29: #{basic_block_forward.1} parent=11 // pred_check
        %p218 = pneg %p144
      $region30: #{basic_block_forward.1} parent=11 // pred_check_branch
        %220 = sbr.rel (%p218) target = $region32
      $region31: #{basic_block_forward.1} parent=11 // pred_region
        _
      $region32: #{basic_block_forward.1} parent=11 // pred_fallthru
        _
      // Predicated region
      $region33: #{basic_block_forward.1} parent=11 // pred_check
        %p221 = pneg %p165
      $region34: #{basic_block_forward.1} parent=11 // pred_check_branch
        %223 = sbr.rel (%p221) target = $region36
      $region35: #{basic_block_forward.1} parent=11 // pred_region
        _
      $region36: #{basic_block_forward.1} parent=11 // pred_fallthru
        _
    $region12: #{basic_block_forward.1} parent=5 // pred_fallthru
      _
    %p224 = scmp.lt.s32.totalorder %s13, 2
    // Predicated region
    $region37: #{basic_block_forward.1} parent=5 // pred_check
      %p225 = pneg %p224
    $region38: #{basic_block_forward.1} parent=5 // pred_check_branch
      %227 = sbr.rel (%p225) target = $region40
    $region39: #{basic_block_forward.1} parent=5 // pred_region
      // Predicated region
      $region41: #{basic_block_forward.1} parent=39 // pred_check
        %p228 = pneg %p33
      $region42: #{basic_block_forward.1} parent=39 // pred_check_branch
        %230 = sbr.rel (%p228) target = $region44
      $region43: #{basic_block_forward.1} parent=39 // pred_region
        %p231 = scmp.lt.s32.totalorder %s13, 1
        %s232 = scalar_select %p231, %s13, 1
        %s233 = smul.addr %s232, 32
        %s234 = smul.addr %s233, 4
        %s235 = scalar_lea.vmem %s0, %s234
      $region44: #{basic_block_forward.1} parent=39 // pred_fallthru
        _
    $region40: #{basic_block_forward.1} parent=5 // pred_fallthru
      _
    %p236 = scmp.le.s32.totalorder 1, %s13
    %p237 = scmp.lt.s32.totalorder %s13, 3
    %p238 = pnand %p236, %p237
    %p239 = pneg %p238
    // Predicated region
    $region45: #{basic_block_forward.1} parent=5 // pred_check
      _
    $region46: #{basic_block_forward.1} parent=5 // pred_check_branch
      %241 = sbr.rel (%p238) target = $region48
    $region47: #{basic_block_forward.1} parent=5 // pred_region
      %s242 = ssub.s32 %s13, 1
      %p243 = scmp.lt.s32.totalorder %s18, 1
      %s244 = scalar_select %p243, %s18, 1
      %s245 = smul.addr %s244, 32
      %s246 = smul.addr %s245, 4
      %s247 = scalar_lea.vmem %s0, %s246
      %p248 = pneg %p39
      %p249 = pneg %p36
      %p250 = pneg %p60
      %p251 = pneg %p57
      %p252 = pneg %p81
      %p253 = pneg %p78
      %p254 = pneg %p102
      %p255 = pneg %p99
      %p256 = pneg %p123
      %p257 = pneg %p120
      %p258 = pneg %p144
      %p259 = pneg %p141
      %p260 = pneg %p165
      %p261 = pneg %p162
      %p262 = pneg %p191
      %p263 = pneg %p188
      %p264 = scmp.lt.s32.totalorder %s18, 1
      %s265 = scalar_select %p264, %s18, 1
      %s266 = smul.addr %s265, 32
      %s267 = smul.addr %s266, 4
      %s268 = scalar_lea.vmem %s7, %s267
      %p269 = scmp.lt.s32.totalorder %s18, 1
      %s270 = scalar_select %p269, %s18, 1
      %s271 = smul.addr %s270, 32
      %s272 = smul.addr %s271, 4
      %s273 = scalar_lea.vmem %s0, %s272
      %p274 = scmp.lt.s32.totalorder %s18, 1
      %s275 = scalar_select %p274, %s18, 1
      %s276 = smul.addr %s275, 32
      %s277 = smul.addr %s276, 4
      %s278 = scalar_lea.vmem %s7, %s277
      %vm280 = vcmask 519168
      %281 = vst.msk [vmem:[#allocation2] sm:$0xf] %vm280, 0
      %282 = vst.msk [vmem:[#allocation2 + $0x4] sm:$0xf] %vm280, 0
      %vm283 = vcmask 516096
      %284 = vst.msk [vmem:[#allocation2 + $0x8] sm:$0x1] %vm283, 0
      %s285 = scalar_lea.vmem [#allocation2], 204
      %286 = vst.msk [vmem:[%s285] sm:$0xf] %vm280, 0
      %287 = vst.msk [vmem:[%s285 + $0x4] sm:$0xf] %vm280, 0
      %288 = vst.msk [vmem:[%s285 + $0x8] sm:$0x1] %vm283, 0
      %vm289 = vcmask 516096
      %vm290 = vsmask.f32 256
      %vm291 = vmand %vm289, %vm290
      %v292 = vld [vmem:[#allocation2] sm:$0x1]
      %v293 = vsel %vm291, 0, %v292
      %294 = vst [vmem:[#allocation2] sm:$0x1] %v293
      %v295 = vld [vmem:[#allocation2 + $0xc] sm:$0x1]
      %v296 = vsel %vm291, 0, %v295
      %297 = vst [vmem:[#allocation2 + $0xc] sm:$0x1] %v296
      %v298 = vld [vmem:[#allocation2 + $0x18] sm:$0x1]
      %v299 = vsel %vm291, 0, %v298
      %300 = vst [vmem:[#allocation2 + $0x18] sm:$0x1] %v299
      %v301 = vld [vmem:[#allocation2 + $0x24] sm:$0x1]
      %v302 = vsel %vm291, 0, %v301
      %303 = vst [vmem:[#allocation2 + $0x24] sm:$0x1] %v302
      %v304 = vld [vmem:[#allocation2 + $0x30] sm:$0x1]
      %v305 = vsel %vm291, 0, %v304
      %306 = vst [vmem:[#allocation2 + $0x30] sm:$0x1] %v305
      %v307 = vld [vmem:[#allocation2 + $0x3c] sm:$0x1]
      %v308 = vsel %vm291, 0, %v307
      %309 = vst [vmem:[#allocation2 + $0x3c] sm:$0x1] %v308
      %v310 = vld [vmem:[#allocation2 + $0x48] sm:$0x1]
      %v311 = vsel %vm291, 0, %v310
      %312 = vst [vmem:[#allocation2 + $0x48] sm:$0x1] %v311
      %v313 = vld [vmem:[#allocation2 + $0x54] sm:$0x1]
      %v314 = vsel %vm291, 0, %v313
      %315 = vst [vmem:[#allocation2 + $0x54] sm:$0x1] %v314
      %v316 = vld [vmem:[#allocation2 + $0x60] sm:$0x1]
      %v317 = vsel %vm291, 0, %v316
      %318 = vst [vmem:[#allocation2 + $0x60] sm:$0x1] %v317
      %v319 = vld [vmem:[#allocation2 + $0x6c] sm:$0x1]
      %v320 = vsel %vm291, 0, %v319
      %321 = vst [vmem:[#allocation2 + $0x6c] sm:$0x1] %v320
      %v322 = vld [vmem:[#allocation2 + $0x78] sm:$0x1]
      %v323 = vsel %vm291, 0, %v322
      %324 = vst [vmem:[#allocation2 + $0x78] sm:$0x1] %v323
      %v325 = vld [vmem:[#allocation2 + $0x84] sm:$0x1]
      %v326 = vsel %vm291, 0, %v325
      %327 = vst [vmem:[#allocation2 + $0x84] sm:$0x1] %v326
      %v328 = vld [vmem:[#allocation2 + $0x90] sm:$0x1]
      %v329 = vsel %vm291, 0, %v328
      %330 = vst [vmem:[#allocation2 + $0x90] sm:$0x1] %v329
      %v331 = vld [vmem:[#allocation2 + $0x9c] sm:$0x1]
      %v332 = vsel %vm291, 0, %v331
      %333 = vst [vmem:[#allocation2 + $0x9c] sm:$0x1] %v332
      %v334 = vld [vmem:[#allocation2 + $0xa8] sm:$0x1]
      %v335 = vsel %vm291, 0, %v334
      %336 = vst [vmem:[#allocation2 + $0xa8] sm:$0x1] %v335
      %v337 = vld [vmem:[#allocation2 + $0xb4] sm:$0x1]
      %v338 = vsel %vm291, 0, %v337
      %339 = vst [vmem:[#allocation2 + $0xb4] sm:$0x1] %v338
      %v340 = vld [vmem:[#allocation2 + $0xc0] sm:$0x1]
      %v341 = vsel %vm291, 0, %v340
      %342 = vst [vmem:[#allocation2 + $0xc0] sm:$0x1] %v341
      %v343 = vld [vmem:[#allocation2 + $0xcc] sm:$0x1]
      %v344 = vsel %vm291, 0, %v343
      %345 = vst [vmem:[#allocation2 + $0xcc] sm:$0x1] %v344
      %vm346 = vsmask.f32 7938
      %vm347 = vmand %vm289, %vm346
      %v348 = vld [vmem:[#allocation2 + $0x8] sm:$0x1]
      %v349 = vsel %vm347, 0, %v348
      %350 = vst [vmem:[#allocation2 + $0x8] sm:$0x1] %v349
      %v351 = vld [vmem:[#allocation2 + $0x14] sm:$0x1]
      %v352 = vsel %vm347, 0, %v351
      %353 = vst [vmem:[#allocation2 + $0x14] sm:$0x1] %v352
      %v354 = vld [vmem:[#allocation2 + $0x20] sm:$0x1]
      %v355 = vsel %vm347, 0, %v354
      %356 = vst [vmem:[#allocation2 + $0x20] sm:$0x1] %v355
      %v357 = vld [vmem:[#allocation2 + $0x2c] sm:$0x1]
      %v358 = vsel %vm347, 0, %v357
      %359 = vst [vmem:[#allocation2 + $0x2c] sm:$0x1] %v358
      %v360 = vld [vmem:[#allocation2 + $0x38] sm:$0x1]
      %v361 = vsel %vm347, 0, %v360
      %362 = vst [vmem:[#allocation2 + $0x38] sm:$0x1] %v361
      %v363 = vld [vmem:[#allocation2 + $0x44] sm:$0x1]
      %v364 = vsel %vm347, 0, %v363
      %365 = vst [vmem:[#allocation2 + $0x44] sm:$0x1] %v364
      %v366 = vld [vmem:[#allocation2 + $0x50] sm:$0x1]
      %v367 = vsel %vm347, 0, %v366
      %368 = vst [vmem:[#allocation2 + $0x50] sm:$0x1] %v367
      %v369 = vld [vmem:[#allocation2 + $0x5c] sm:$0x1]
      %v370 = vsel %vm347, 0, %v369
      %371 = vst [vmem:[#allocation2 + $0x5c] sm:$0x1] %v370
      %v372 = vld [vmem:[#allocation2 + $0x68] sm:$0x1]
      %v373 = vsel %vm347, 0, %v372
      %374 = vst [vmem:[#allocation2 + $0x68] sm:$0x1] %v373
      %v375 = vld [vmem:[#allocation2 + $0x74] sm:$0x1]
      %v376 = vsel %vm347, 0, %v375
      %377 = vst [vmem:[#allocation2 + $0x74] sm:$0x1] %v376
      %v378 = vld [vmem:[#allocation2 + $0x80] sm:$0x1]
      %v379 = vsel %vm347, 0, %v378
      %380 = vst [vmem:[#allocation2 + $0x80] sm:$0x1] %v379
      %v381 = vld [vmem:[#allocation2 + $0x8c] sm:$0x1]
      %v382 = vsel %vm347, 0, %v381
      %383 = vst [vmem:[#allocation2 + $0x8c] sm:$0x1] %v382
      %v384 = vld [vmem:[#allocation2 + $0x98] sm:$0x1]
      %v385 = vsel %vm347, 0, %v384
      %386 = vst [vmem:[#allocation2 + $0x98] sm:$0x1] %v385
      %v387 = vld [vmem:[#allocation2 + $0xa4] sm:$0x1]
      %v388 = vsel %vm347, 0, %v387
      %389 = vst [vmem:[#allocation2 + $0xa4] sm:$0x1] %v388
      %v390 = vld [vmem:[#allocation2 + $0xb0] sm:$0x1]
      %v391 = vsel %vm347, 0, %v390
      %392 = vst [vmem:[#allocation2 + $0xb0] sm:$0x1] %v391
      %v393 = vld [vmem:[#allocation2 + $0xbc] sm:$0x1]
      %v394 = vsel %vm347, 0, %v393
      %395 = vst [vmem:[#allocation2 + $0xbc] sm:$0x1] %v394
      %v396 = vld [vmem:[#allocation2 + $0xc8] sm:$0x1]
      %v397 = vsel %vm347, 0, %v396
      %398 = vst [vmem:[#allocation2 + $0xc8] sm:$0x1] %v397
      %v399 = vld [vmem:[#allocation2 + $0xd4] sm:$0x1]
      %v400 = vsel %vm347, 0, %v399
      %401 = vst [vmem:[#allocation2 + $0xd4] sm:$0x1] %v400
      %v402 = vld [vmem:[%s273] sm:$0xf]
      %v403 = vld [vmem:[%s273 + $0x4] sm:$0xf]
      %v404 = vld [vmem:[%s273 + $0x8] sm:$0xf]
      %v405 = vld [vmem:[%s273 + $0xc] sm:$0xf]
      %v406 = vld [vmem:[%s273 + $0x10] sm:$0xf]
      %v407 = vld [vmem:[%s273 + $0x14] sm:$0xf]
      %v408 = vld [vmem:[%s273 + $0x18] sm:$0xf]
      %v409 = vld [vmem:[%s273 + $0x1c] sm:$0xf]
      %v410 = vld [vmem:[%s273 + $0x20] sm:$0xf]
      %v411 = vld [vmem:[%s273 + $0x24] sm:$0xf]
      %v412 = vld [vmem:[%s273 + $0x28] sm:$0xf]
      %v413 = vld [vmem:[%s273 + $0x2c] sm:$0xf]
      %v414 = vld [vmem:[%s273 + $0x30] sm:$0xf]
      %v415 = vld [vmem:[%s273 + $0x34] sm:$0xf]
      %v416 = vld [vmem:[%s273 + $0x38] sm:$0xf]
      %v417 = vld [vmem:[%s273 + $0x3c] sm:$0xf]
      %v418 = vld [vmem:[%s273 + $0x40] sm:$0xf]
      %v419 = vld [vmem:[%s273 + $0x44] sm:$0xf]
      %v420 = vld [vmem:[%s273 + $0x48] sm:$0xf]
      %v421 = vld [vmem:[%s273 + $0x4c] sm:$0xf]
      %v422 = vld [vmem:[%s273 + $0x50] sm:$0xf]
      %v423 = vld [vmem:[%s273 + $0x54] sm:$0xf]
      %v424 = vld [vmem:[%s273 + $0x58] sm:$0xf]
      %v425 = vld [vmem:[%s273 + $0x5c] sm:$0xf]
      %v426 = vld [vmem:[%s273 + $0x60] sm:$0xf]
      %v427 = vld [vmem:[%s273 + $0x64] sm:$0xf]
      %v428 = vld [vmem:[%s273 + $0x68] sm:$0xf]
      %v429 = vld [vmem:[%s273 + $0x6c] sm:$0xf]
      %v430 = vld [vmem:[%s273 + $0x70] sm:$0xf]
      %v431 = vld [vmem:[%s273 + $0x74] sm:$0xf]
      %v432 = vld [vmem:[%s273 + $0x78] sm:$0xf]
      %v433 = vld [vmem:[%s273 + $0x7c] sm:$0xf]
      %vm434 = vsmask.f32 4368
      %vm435 = vmor %vm290, %vm434
      %v437 = vshrl.u32 %v402, 16
      %v439 = vrot.slane %v437, 7
      %v440 = vshll.u32 %v402, 16
      %v442 = vor.u32 %v439, %v440
      %v443 = vrot.slane %v439, 4
      %v445 = vshrl.u32 %v403, 16
      %v447 = vrot.slane %v445, 7
      %v448 = vshll.u32 %v403, 16
      %v450 = vor.u32 %v447, %v448
      %v451 = vsel %vm435, %v443, %v450
      %v452 = vrot.slane %v447, 4
      %v454 = vshrl.u32 %v404, 16
      %v456 = vrot.slane %v454, 7
      %v457 = vshll.u32 %v404, 16
      %v459 = vor.u32 %v456, %v457
      %v460 = vrot.slane %v456, 4
      %v462 = vshrl.u32 %v405, 16
      %v464 = vrot.slane %v462, 7
      %v465 = vshll.u32 %v405, 16
      %v467 = vor.u32 %v464, %v465
      %v468 = vsel %vm435, %v460, %v467
      %v469 = vrot.slane %v464, 4
      %v471 = vshrl.u32 %v406, 16
      %v473 = vrot.slane %v471, 7
      %v474 = vshll.u32 %v406, 16
      %v476 = vor.u32 %v473, %v474
      %v477 = vrot.slane %v473, 4
      %v479 = vshrl.u32 %v407, 16
      %v481 = vrot.slane %v479, 7
      %v482 = vshll.u32 %v407, 16
      %v484 = vor.u32 %v481, %v482
      %v485 = vsel %vm435, %v477, %v484
      %v486 = vrot.slane %v481, 4
      %v488 = vshrl.u32 %v408, 16
      %v490 = vrot.slane %v488, 7
      %v491 = vshll.u32 %v408, 16
      %v493 = vor.u32 %v490, %v491
      %v494 = vrot.slane %v490, 4
      %v496 = vshrl.u32 %v409, 16
      %v498 = vrot.slane %v496, 7
      %v499 = vshll.u32 %v409, 16
      %v501 = vor.u32 %v498, %v499
      %v502 = vsel %vm435, %v494, %v501
      %v503 = vrot.slane %v498, 4
      %v505 = vshrl.u32 %v410, 16
      %v507 = vrot.slane %v505, 7
      %v508 = vshll.u32 %v410, 16
      %v510 = vor.u32 %v507, %v508
      %v511 = vrot.slane %v507, 4
      %v513 = vshrl.u32 %v411, 16
      %v515 = vrot.slane %v513, 7
      %v516 = vshll.u32 %v411, 16
      %v518 = vor.u32 %v515, %v516
      %v519 = vsel %vm435, %v511, %v518
      %v520 = vrot.slane %v515, 4
      %v522 = vshrl.u32 %v412, 16
      %v524 = vrot.slane %v522, 7
      %v525 = vshll.u32 %v412, 16
      %v527 = vor.u32 %v524, %v525
      %v528 = vrot.slane %v524, 4
      %v530 = vshrl.u32 %v413, 16
      %v532 = vrot.slane %v530, 7
      %v533 = vshll.u32 %v413, 16
      %v535 = vor.u32 %v532, %v533
      %v536 = vsel %vm435, %v528, %v535
      %v537 = vrot.slane %v532, 4
      %v539 = vshrl.u32 %v414, 16
      %v541 = vrot.slane %v539, 7
      %v542 = vshll.u32 %v414, 16
      %v544 = vor.u32 %v541, %v542
      %v545 = vrot.slane %v541, 4
      %v547 = vshrl.u32 %v415, 16
      %v549 = vrot.slane %v547, 7
      %v550 = vshll.u32 %v415, 16
      %v552 = vor.u32 %v549, %v550
      %v553 = vsel %vm435, %v545, %v552
      %v554 = vrot.slane %v549, 4
      %v556 = vshrl.u32 %v416, 16
      %v558 = vrot.slane %v556, 7
      %v559 = vshll.u32 %v416, 16
      %v561 = vor.u32 %v558, %v559
      %v562 = vrot.slane %v558, 4
      %v564 = vshrl.u32 %v417, 16
      %v566 = vrot.slane %v564, 7
      %v567 = vshll.u32 %v417, 16
      %v569 = vor.u32 %v566, %v567
      %v570 = vsel %vm435, %v562, %v569
      %v571 = vrot.slane %v566, 4
      %v573 = vshrl.u32 %v418, 16
      %v575 = vrot.slane %v573, 7
      %v576 = vshll.u32 %v418, 16
      %v578 = vor.u32 %v575, %v576
      %v579 = vrot.slane %v575, 4
      %v581 = vshrl.u32 %v419, 16
      %v583 = vrot.slane %v581, 7
      %v584 = vshll.u32 %v419, 16
      %v586 = vor.u32 %v583, %v584
      %v587 = vsel %vm435, %v579, %v586
      %v588 = vrot.slane %v583, 4
      %v590 = vshrl.u32 %v420, 16
      %v592 = vrot.slane %v590, 7
      %v593 = vshll.u32 %v420, 16
      %v595 = vor.u32 %v592, %v593
      %v596 = vrot.slane %v592, 4
      %v598 = vshrl.u32 %v421, 16
      %v600 = vrot.slane %v598, 7
      %v601 = vshll.u32 %v421, 16
      %v603 = vor.u32 %v600, %v601
      %v604 = vsel %vm435, %v596, %v603
      %v605 = vrot.slane %v600, 4
      %v607 = vshrl.u32 %v422, 16
      %v609 = vrot.slane %v607, 7
      %v610 = vshll.u32 %v422, 16
      %v612 = vor.u32 %v609, %v610
      %v613 = vrot.slane %v609, 4
      %v615 = vshrl.u32 %v423, 16
      %v617 = vrot.slane %v615, 7
      %v618 = vshll.u32 %v423, 16
      %v620 = vor.u32 %v617, %v618
      %v621 = vsel %vm435, %v613, %v620
      %v622 = vrot.slane %v617, 4
      %v624 = vshrl.u32 %v424, 16
      %v626 = vrot.slane %v624, 7
      %v627 = vshll.u32 %v424, 16
      %v629 = vor.u32 %v626, %v627
      %v630 = vrot.slane %v626, 4
      %v632 = vshrl.u32 %v425, 16
      %v634 = vrot.slane %v632, 7
      %v635 = vshll.u32 %v425, 16
      %v637 = vor.u32 %v634, %v635
      %v638 = vsel %vm435, %v630, %v637
      %v639 = vrot.slane %v634, 4
      %v641 = vshrl.u32 %v426, 16
      %v643 = vrot.slane %v641, 7
      %v644 = vshll.u32 %v426, 16
      %v646 = vor.u32 %v643, %v644
      %v647 = vrot.slane %v643, 4
      %v649 = vshrl.u32 %v427, 16
      %v651 = vrot.slane %v649, 7
      %v652 = vshll.u32 %v427, 16
      %v654 = vor.u32 %v651, %v652
      %v655 = vsel %vm435, %v647, %v654
      %v656 = vrot.slane %v651, 4
      %v658 = vshrl.u32 %v428, 16
      %v660 = vrot.slane %v658, 7
      %v661 = vshll.u32 %v428, 16
      %v663 = vor.u32 %v660, %v661
      %v664 = vrot.slane %v660, 4
      %v666 = vshrl.u32 %v429, 16
      %v668 = vrot.slane %v666, 7
      %v669 = vshll.u32 %v429, 16
      %v671 = vor.u32 %v668, %v669
      %v672 = vsel %vm435, %v664, %v671
      %v673 = vrot.slane %v668, 4
      %v675 = vshrl.u32 %v430, 16
      %v677 = vrot.slane %v675, 7
      %v678 = vshll.u32 %v430, 16
      %v680 = vor.u32 %v677, %v678
      %v681 = vrot.slane %v677, 4
      %v683 = vshrl.u32 %v431, 16
      %v685 = vrot.slane %v683, 7
      %v686 = vshll.u32 %v431, 16
      %v688 = vor.u32 %v685, %v686
      %v689 = vsel %vm435, %v681, %v688
      %v690 = vrot.slane %v685, 4
      %v692 = vshrl.u32 %v432, 16
      %v694 = vrot.slane %v692, 7
      %v695 = vshll.u32 %v432, 16
      %v697 = vor.u32 %v694, %v695
      %v698 = vrot.slane %v694, 4
      %v700 = vshrl.u32 %v433, 16
      %v702 = vrot.slane %v700, 7
      %v703 = vshll.u32 %v433, 16
      %v705 = vor.u32 %v702, %v703
      %v706 = vsel %vm435, %v698, %v705
      %v707 = vrot.slane %v702, 4
      %s756 = scalar_lea.vmem [#allocation2], 12
      %vm757 = vcmask 519168
      %vm758 = vmand %vm757, %vm346
      %v759 = vld [vmem:[%s756] sm:$0xf]
      %v760 = vsel %vm758, %v442, %v759
      %761 = vst [vmem:[%s756] sm:$0xf] %v760
      %762 = vst.msk [vmem:[%s756 + $0x4] sm:$0xf] %vm280, %v451
      %v763 = vld [vmem:[%s756 + $0x8] sm:$0x1]
      %v764 = vsel %vm291, %v452, %v763
      %765 = vst [vmem:[%s756 + $0x8] sm:$0x1] %v764
      %v766 = vld [vmem:[%s756 + $0xc] sm:$0xf]
      %v767 = vsel %vm758, %v459, %v766
      %768 = vst [vmem:[%s756 + $0xc] sm:$0xf] %v767
      %769 = vst.msk [vmem:[%s756 + $0x10] sm:$0xf] %vm280, %v468
      %v770 = vld [vmem:[%s756 + $0x14] sm:$0x1]
      %v771 = vsel %vm291, %v469, %v770
      %772 = vst [vmem:[%s756 + $0x14] sm:$0x1] %v771
      %v773 = vld [vmem:[%s756 + $0x18] sm:$0xf]
      %v774 = vsel %vm758, %v476, %v773
      %775 = vst [vmem:[%s756 + $0x18] sm:$0xf] %v774
      %776 = vst.msk [vmem:[%s756 + $0x1c] sm:$0xf] %vm280, %v485
      %v777 = vld [vmem:[%s756 + $0x20] sm:$0x1]
      %v778 = vsel %vm291, %v486, %v777
      %779 = vst [vmem:[%s756 + $0x20] sm:$0x1] %v778
      %v780 = vld [vmem:[%s756 + $0x24] sm:$0xf]
      %v781 = vsel %vm758, %v493, %v780
      %782 = vst [vmem:[%s756 + $0x24] sm:$0xf] %v781
      %783 = vst.msk [vmem:[%s756 + $0x28] sm:$0xf] %vm280, %v502
      %v784 = vld [vmem:[%s756 + $0x2c] sm:$0x1]
      %v785 = vsel %vm291, %v503, %v784
      %786 = vst [vmem:[%s756 + $0x2c] sm:$0x1] %v785
      %v787 = vld [vmem:[%s756 + $0x30] sm:$0xf]
      %v788 = vsel %vm758, %v510, %v787
      %789 = vst [vmem:[%s756 + $0x30] sm:$0xf] %v788
      %790 = vst.msk [vmem:[%s756 + $0x34] sm:$0xf] %vm280, %v519
      %v791 = vld [vmem:[%s756 + $0x38] sm:$0x1]
      %v792 = vsel %vm291, %v520, %v791
      %793 = vst [vmem:[%s756 + $0x38] sm:$0x1] %v792
      %v794 = vld [vmem:[%s756 + $0x3c] sm:$0xf]
      %v795 = vsel %vm758, %v527, %v794
      %796 = vst [vmem:[%s756 + $0x3c] sm:$0xf] %v795
      %797 = vst.msk [vmem:[%s756 + $0x40] sm:$0xf] %vm280, %v536
      %v798 = vld [vmem:[%s756 + $0x44] sm:$0x1]
      %v799 = vsel %vm291, %v537, %v798
      %800 = vst [vmem:[%s756 + $0x44] sm:$0x1] %v799
      %v801 = vld [vmem:[%s756 + $0x48] sm:$0xf]
      %v802 = vsel %vm758, %v544, %v801
      %803 = vst [vmem:[%s756 + $0x48] sm:$0xf] %v802
      %804 = vst.msk [vmem:[%s756 + $0x4c] sm:$0xf] %vm280, %v553
      %v805 = vld [vmem:[%s756 + $0x50] sm:$0x1]
      %v806 = vsel %vm291, %v554, %v805
      %807 = vst [vmem:[%s756 + $0x50] sm:$0x1] %v806
      %v808 = vld [vmem:[%s756 + $0x54] sm:$0xf]
      %v809 = vsel %vm758, %v561, %v808
      %810 = vst [vmem:[%s756 + $0x54] sm:$0xf] %v809
      %811 = vst.msk [vmem:[%s756 + $0x58] sm:$0xf] %vm280, %v570
      %v812 = vld [vmem:[%s756 + $0x5c] sm:$0x1]
      %v813 = vsel %vm291, %v571, %v812
      %814 = vst [vmem:[%s756 + $0x5c] sm:$0x1] %v813
      %v815 = vld [vmem:[%s756 + $0x60] sm:$0xf]
      %v816 = vsel %vm758, %v578, %v815
      %817 = vst [vmem:[%s756 + $0x60] sm:$0xf] %v816
      %818 = vst.msk [vmem:[%s756 + $0x64] sm:$0xf] %vm280, %v587
      %v819 = vld [vmem:[%s756 + $0x68] sm:$0x1]
      %v820 = vsel %vm291, %v588, %v819
      %821 = vst [vmem:[%s756 + $0x68] sm:$0x1] %v820
      %v822 = vld [vmem:[%s756 + $0x6c] sm:$0xf]
      %v823 = vsel %vm758, %v595, %v822
      %824 = vst [vmem:[%s756 + $0x6c] sm:$0xf] %v823
      %825 = vst.msk [vmem:[%s756 + $0x70] sm:$0xf] %vm280, %v604
      %v826 = vld [vmem:[%s756 + $0x74] sm:$0x1]
      %v827 = vsel %vm291, %v605, %v826
      %828 = vst [vmem:[%s756 + $0x74] sm:$0x1] %v827
      %v829 = vld [vmem:[%s756 + $0x78] sm:$0xf]
      %v830 = vsel %vm758, %v612, %v829
      %831 = vst [vmem:[%s756 + $0x78] sm:$0xf] %v830
      %832 = vst.msk [vmem:[%s756 + $0x7c] sm:$0xf] %vm280, %v621
      %v833 = vld [vmem:[%s756 + $0x80] sm:$0x1]
      %v834 = vsel %vm291, %v622, %v833
      %835 = vst [vmem:[%s756 + $0x80] sm:$0x1] %v834
      %v836 = vld [vmem:[%s756 + $0x84] sm:$0xf]
      %v837 = vsel %vm758, %v629, %v836
      %838 = vst [vmem:[%s756 + $0x84] sm:$0xf] %v837
      %839 = vst.msk [vmem:[%s756 + $0x88] sm:$0xf] %vm280, %v638
      %v840 = vld [vmem:[%s756 + $0x8c] sm:$0x1]
      %v841 = vsel %vm291, %v639, %v840
      %842 = vst [vmem:[%s756 + $0x8c] sm:$0x1] %v841
      %v843 = vld [vmem:[%s756 + $0x90] sm:$0xf]
      %v844 = vsel %vm758, %v646, %v843
      %845 = vst [vmem:[%s756 + $0x90] sm:$0xf] %v844
      %846 = vst.msk [vmem:[%s756 + $0x94] sm:$0xf] %vm280, %v655
      %v847 = vld [vmem:[%s756 + $0x98] sm:$0x1]
      %v848 = vsel %vm291, %v656, %v847
      %849 = vst [vmem:[%s756 + $0x98] sm:$0x1] %v848
      %v850 = vld [vmem:[%s756 + $0x9c] sm:$0xf]
      %v851 = vsel %vm758, %v663, %v850
      %852 = vst [vmem:[%s756 + $0x9c] sm:$0xf] %v851
      %853 = vst.msk [vmem:[%s756 + $0xa0] sm:$0xf] %vm280, %v672
      %v854 = vld [vmem:[%s756 + $0xa4] sm:$0x1]
      %v855 = vsel %vm291, %v673, %v854
      %856 = vst [vmem:[%s756 + $0xa4] sm:$0x1] %v855
      %v857 = vld [vmem:[%s756 + $0xa8] sm:$0xf]
      %v858 = vsel %vm758, %v680, %v857
      %859 = vst [vmem:[%s756 + $0xa8] sm:$0xf] %v858
      %860 = vst.msk [vmem:[%s756 + $0xac] sm:$0xf] %vm280, %v689
      %v861 = vld [vmem:[%s756 + $0xb0] sm:$0x1]
      %v862 = vsel %vm291, %v690, %v861
      %863 = vst [vmem:[%s756 + $0xb0] sm:$0x1] %v862
      %v864 = vld [vmem:[%s756 + $0xb4] sm:$0xf]
      %v865 = vsel %vm758, %v697, %v864
      %866 = vst [vmem:[%s756 + $0xb4] sm:$0xf] %v865
      %867 = vst.msk [vmem:[%s756 + $0xb8] sm:$0xf] %vm280, %v706
      %v868 = vld [vmem:[%s756 + $0xbc] sm:$0x1]
      %v869 = vsel %vm291, %v707, %v868
      %870 = vst [vmem:[%s756 + $0xbc] sm:$0x1] %v869
      %v871 = vld [vmem:[#allocation2] sm:$0xf]
      %v872 = vld [vmem:[#allocation2 + $0x4] sm:$0xf]
      %v873 = vld [vmem:[#allocation2 + $0x8] sm:$0x1]
      %v874 = vld [vmem:[#allocation2 + $0xc] sm:$0xf]
      %v875 = vld [vmem:[#allocation2 + $0x10] sm:$0xf]
      %v876 = vld [vmem:[#allocation2 + $0x14] sm:$0x1]
      %v877 = vld [vmem:[#allocation2 + $0x18] sm:$0xf]
      %v878 = vld [vmem:[#allocation2 + $0x1c] sm:$0xf]
      %v879 = vld [vmem:[#allocation2 + $0x20] sm:$0x1]
      %v880 = vld [vmem:[#allocation2 + $0x24] sm:$0xf]
      %v881 = vld [vmem:[#allocation2 + $0x28] sm:$0xf]
      %v882 = vld [vmem:[#allocation2 + $0x2c] sm:$0x1]
      %v883 = vld [vmem:[#allocation2 + $0x30] sm:$0xf]
      %v884 = vld [vmem:[#allocation2 + $0x34] sm:$0xf]
      %v885 = vld [vmem:[#allocation2 + $0x38] sm:$0x1]
      %v886 = vld [vmem:[#allocation2 + $0x3c] sm:$0xf]
      %v887 = vld [vmem:[#allocation2 + $0x40] sm:$0xf]
      %v888 = vld [vmem:[#allocation2 + $0x44] sm:$0x1]
      %v889 = vld [vmem:[#allocation2 + $0x48] sm:$0xf]
      %v890 = vld [vmem:[#allocation2 + $0x4c] sm:$0xf]
      %v891 = vld [vmem:[#allocation2 + $0x50] sm:$0x1]
      %v892 = vld [vmem:[#allocation2 + $0x54] sm:$0xf]
      %v893 = vld [vmem:[#allocation2 + $0x58] sm:$0xf]
      %v894 = vld [vmem:[#allocation2 + $0x5c] sm:$0x1]
      %v895 = vld [vmem:[#allocation2 + $0x60] sm:$0xf]
      %v896 = vld [vmem:[#allocation2 + $0x64] sm:$0xf]
      %v897 = vld [vmem:[#allocation2 + $0x68] sm:$0x1]
      %v898 = vld [vmem:[#allocation2 + $0x6c] sm:$0xf]
      %v899 = vld [vmem:[#allocation2 + $0x70] sm:$0xf]
      %v900 = vld [vmem:[#allocation2 + $0x74] sm:$0x1]
      %v901 = vld [vmem:[#allocation2 + $0x78] sm:$0xf]
      %v902 = vld [vmem:[#allocation2 + $0x7c] sm:$0xf]
      %v903 = vld [vmem:[#allocation2 + $0x80] sm:$0x1]
      %v904 = vld [vmem:[#allocation2 + $0x84] sm:$0xf]
      %v905 = vld [vmem:[#allocation2 + $0x88] sm:$0xf]
      %v906 = vld [vmem:[#allocation2 + $0x8c] sm:$0x1]
      %v907 = vld [vmem:[#allocation2 + $0x90] sm:$0xf]
      %v908 = vld [vmem:[#allocation2 + $0x94] sm:$0xf]
      %v909 = vld [vmem:[#allocation2 + $0x98] sm:$0x1]
      %v910 = vld [vmem:[#allocation2 + $0x9c] sm:$0xf]
      %v911 = vld [vmem:[#allocation2 + $0xa0] sm:$0xf]
      %v912 = vld [vmem:[#allocation2 + $0xa4] sm:$0x1]
      %v913 = vld [vmem:[#allocation2 + $0xa8] sm:$0xf]
      %v914 = vld [vmem:[#allocation2 + $0xac] sm:$0xf]
      %v915 = vld [vmem:[#allocation2 + $0xb0] sm:$0x1]
      %v916 = vld [vmem:[#allocation2 + $0xb4] sm:$0xf]
      %v917 = vld [vmem:[#allocation2 + $0xb8] sm:$0xf]
      %v918 = vld [vmem:[#allocation2 + $0xbc] sm:$0x1]
      %v919 = vld [vmem:[#allocation2 + $0xc0] sm:$0xf]
      %v920 = vld [vmem:[#allocation2 + $0xc4] sm:$0xf]
      %v921 = vld [vmem:[#allocation2 + $0xc8] sm:$0x1]
      %v922 = vld [vmem:[#allocation2 + $0xcc] sm:$0xf]
      %v923 = vld [vmem:[#allocation2 + $0xd0] sm:$0xf]
      %v924 = vld [vmem:[#allocation2 + $0xd4] sm:$0x1]
      %vm925 = vsmask.f32 3328
      %vm926 = vsmask.f32 7440
      %vm927 = vmor %vm925, %vm926
      %v929 = vshrl.u32 %v871, 16
      %v931 = vrot.slane %v929, 4
      %v932 = vshll.u32 %v871, 16
      %v934 = vrot.slane %v932, 5
      %v935 = vor.u32 %v931, %v934
      %v936 = vrot.slane %v935, 4
      %v938 = vshll.u32 %v872, 16
      %v940 = vrot.slane %v938, 5
      %v941 = vsel %vm927, %v936, %v940
      %v942 = vshrl.u32 %v872, 16
      %v944 = vrot.slane %v942, 4
      %v945 = vor.u32 %v944, %v940
      %v946 = vrot.slane %v945, 4
      %v948 = vshll.u32 %v873, 16
      %v950 = vrot.slane %v948, 5
      %v951 = vsel %vm927, %v946, %v950
      %v953 = vshrl.u32 %v874, 16
      %v955 = vrot.slane %v953, 4
      %v956 = vshll.u32 %v874, 16
      %v958 = vrot.slane %v956, 5
      %v959 = vor.u32 %v955, %v958
      %v960 = vrot.slane %v959, 4
      %v962 = vshll.u32 %v875, 16
      %v964 = vrot.slane %v962, 5
      %v965 = vsel %vm927, %v960, %v964
      %v966 = vshrl.u32 %v875, 16
      %v968 = vrot.slane %v966, 4
      %v969 = vor.u32 %v968, %v964
      %v970 = vrot.slane %v969, 4
      %v972 = vshll.u32 %v876, 16
      %v974 = vrot.slane %v972, 5
      %v975 = vsel %vm927, %v970, %v974
      %v977 = vshrl.u32 %v877, 16
      %v979 = vrot.slane %v977, 4
      %v980 = vshll.u32 %v877, 16
      %v982 = vrot.slane %v980, 5
      %v983 = vor.u32 %v979, %v982
      %v984 = vrot.slane %v983, 4
      %v986 = vshll.u32 %v878, 16
      %v988 = vrot.slane %v986, 5
      %v989 = vsel %vm927, %v984, %v988
      %v990 = vshrl.u32 %v878, 16
      %v992 = vrot.slane %v990, 4
      %v993 = vor.u32 %v992, %v988
      %v994 = vrot.slane %v993, 4
      %v996 = vshll.u32 %v879, 16
      %v998 = vrot.slane %v996, 5
      %v999 = vsel %vm927, %v994, %v998
      %v1001 = vshrl.u32 %v880, 16
      %v1003 = vrot.slane %v1001, 4
      %v1004 = vshll.u32 %v880, 16
      %v1006 = vrot.slane %v1004, 5
      %v1007 = vor.u32 %v1003, %v1006
      %v1008 = vrot.slane %v1007, 4
      %v1010 = vshll.u32 %v881, 16
      %v1012 = vrot.slane %v1010, 5
      %v1013 = vsel %vm927, %v1008, %v1012
      %v1014 = vshrl.u32 %v881, 16
      %v1016 = vrot.slane %v1014, 4
      %v1017 = vor.u32 %v1016, %v1012
      %v1018 = vrot.slane %v1017, 4
      %v1020 = vshll.u32 %v882, 16
      %v1022 = vrot.slane %v1020, 5
      %v1023 = vsel %vm927, %v1018, %v1022
      %v1025 = vshrl.u32 %v883, 16
      %v1027 = vrot.slane %v1025, 4
      %v1028 = vshll.u32 %v883, 16
      %v1030 = vrot.slane %v1028, 5
      %v1031 = vor.u32 %v1027, %v1030
      %v1032 = vrot.slane %v1031, 4
      %v1034 = vshll.u32 %v884, 16
      %v1036 = vrot.slane %v1034, 5
      %v1037 = vsel %vm927, %v1032, %v1036
      %v1038 = vshrl.u32 %v884, 16
      %v1040 = vrot.slane %v1038, 4
      %v1041 = vor.u32 %v1040, %v1036
      %v1042 = vrot.slane %v1041, 4
      %v1044 = vshll.u32 %v885, 16
      %v1046 = vrot.slane %v1044, 5
      %v1047 = vsel %vm927, %v1042, %v1046
      %v1049 = vshrl.u32 %v886, 16
      %v1051 = vrot.slane %v1049, 4
      %v1052 = vshll.u32 %v886, 16
      %v1054 = vrot.slane %v1052, 5
      %v1055 = vor.u32 %v1051, %v1054
      %v1056 = vrot.slane %v1055, 4
      %v1058 = vshll.u32 %v887, 16
      %v1060 = vrot.slane %v1058, 5
      %v1061 = vsel %vm927, %v1056, %v1060
      %v1062 = vshrl.u32 %v887, 16
      %v1064 = vrot.slane %v1062, 4
      %v1065 = vor.u32 %v1064, %v1060
      %v1066 = vrot.slane %v1065, 4
      %v1068 = vshll.u32 %v888, 16
      %v1070 = vrot.slane %v1068, 5
      %v1071 = vsel %vm927, %v1066, %v1070
      %v1073 = vshrl.u32 %v889, 16
      %v1075 = vrot.slane %v1073, 4
      %v1076 = vshll.u32 %v889, 16
      %v1078 = vrot.slane %v1076, 5
      %v1079 = vor.u32 %v1075, %v1078
      %v1080 = vrot.slane %v1079, 4
      %v1082 = vshll.u32 %v890, 16
      %v1084 = vrot.slane %v1082, 5
      %v1085 = vsel %vm927, %v1080, %v1084
      %v1086 = vshrl.u32 %v890, 16
      %v1088 = vrot.slane %v1086, 4
      %v1089 = vor.u32 %v1088, %v1084
      %v1090 = vrot.slane %v1089, 4
      %v1092 = vshll.u32 %v891, 16
      %v1094 = vrot.slane %v1092, 5
      %v1095 = vsel %vm927, %v1090, %v1094
      %v1097 = vshrl.u32 %v892, 16
      %v1099 = vrot.slane %v1097, 4
      %v1100 = vshll.u32 %v892, 16
      %v1102 = vrot.slane %v1100, 5
      %v1103 = vor.u32 %v1099, %v1102
      %v1104 = vrot.slane %v1103, 4
      %v1106 = vshll.u32 %v893, 16
      %v1108 = vrot.slane %v1106, 5
      %v1109 = vsel %vm927, %v1104, %v1108
      %v1110 = vshrl.u32 %v893, 16
      %v1112 = vrot.slane %v1110, 4
      %v1113 = vor.u32 %v1112, %v1108
      %v1114 = vrot.slane %v1113, 4
      %v1116 = vshll.u32 %v894, 16
      %v1118 = vrot.slane %v1116, 5
      %v1119 = vsel %vm927, %v1114, %v1118
      %v1121 = vshrl.u32 %v895, 16
      %v1123 = vrot.slane %v1121, 4
      %v1124 = vshll.u32 %v895, 16
      %v1126 = vrot.slane %v1124, 5
      %v1127 = vor.u32 %v1123, %v1126
      %v1128 = vrot.slane %v1127, 4
      %v1130 = vshll.u32 %v896, 16
      %v1132 = vrot.slane %v1130, 5
      %v1133 = vsel %vm927, %v1128, %v1132
      %v1134 = vshrl.u32 %v896, 16
      %v1136 = vrot.slane %v1134, 4
      %v1137 = vor.u32 %v1136, %v1132
      %v1138 = vrot.slane %v1137, 4
      %v1140 = vshll.u32 %v897, 16
      %v1142 = vrot.slane %v1140, 5
      %v1143 = vsel %vm927, %v1138, %v1142
      %v1145 = vshrl.u32 %v898, 16
      %v1147 = vrot.slane %v1145, 4
      %v1148 = vshll.u32 %v898, 16
      %v1150 = vrot.slane %v1148, 5
      %v1151 = vor.u32 %v1147, %v1150
      %v1152 = vrot.slane %v1151, 4
      %v1154 = vshll.u32 %v899, 16
      %v1156 = vrot.slane %v1154, 5
      %v1157 = vsel %vm927, %v1152, %v1156
      %v1158 = vshrl.u32 %v899, 16
      %v1160 = vrot.slane %v1158, 4
      %v1161 = vor.u32 %v1160, %v1156
      %v1162 = vrot.slane %v1161, 4
      %v1164 = vshll.u32 %v900, 16
      %v1166 = vrot.slane %v1164, 5
      %v1167 = vsel %vm927, %v1162, %v1166
      %v1169 = vshrl.u32 %v901, 16
      %v1171 = vrot.slane %v1169, 4
      %v1172 = vshll.u32 %v901, 16
      %v1174 = vrot.slane %v1172, 5
      %v1175 = vor.u32 %v1171, %v1174
      %v1176 = vrot.slane %v1175, 4
      %v1178 = vshll.u32 %v902, 16
      %v1180 = vrot.slane %v1178, 5
      %v1181 = vsel %vm927, %v1176, %v1180
      %v1182 = vshrl.u32 %v902, 16
      %v1184 = vrot.slane %v1182, 4
      %v1185 = vor.u32 %v1184, %v1180
      %v1186 = vrot.slane %v1185, 4
      %v1188 = vshll.u32 %v903, 16
      %v1190 = vrot.slane %v1188, 5
      %v1191 = vsel %vm927, %v1186, %v1190
      %v1193 = vshrl.u32 %v904, 16
      %v1195 = vrot.slane %v1193, 4
      %v1196 = vshll.u32 %v904, 16
      %v1198 = vrot.slane %v1196, 5
      %v1199 = vor.u32 %v1195, %v1198
      %v1200 = vrot.slane %v1199, 4
      %v1202 = vshll.u32 %v905, 16
      %v1204 = vrot.slane %v1202, 5
      %v1205 = vsel %vm927, %v1200, %v1204
      %v1206 = vshrl.u32 %v905, 16
      %v1208 = vrot.slane %v1206, 4
      %v1209 = vor.u32 %v1208, %v1204
      %v1210 = vrot.slane %v1209, 4
      %v1212 = vshll.u32 %v906, 16
      %v1214 = vrot.slane %v1212, 5
      %v1215 = vsel %vm927, %v1210, %v1214
      %v1217 = vshrl.u32 %v907, 16
      %v1219 = vrot.slane %v1217, 4
      %v1220 = vshll.u32 %v907, 16
      %v1222 = vrot.slane %v1220, 5
      %v1223 = vor.u32 %v1219, %v1222
      %v1224 = vrot.slane %v1223, 4
      %v1226 = vshll.u32 %v908, 16
      %v1228 = vrot.slane %v1226, 5
      %v1229 = vsel %vm927, %v1224, %v1228
      %v1230 = vshrl.u32 %v908, 16
      %v1232 = vrot.slane %v1230, 4
      %v1233 = vor.u32 %v1232, %v1228
      %v1234 = vrot.slane %v1233, 4
      %v1236 = vshll.u32 %v909, 16
      %v1238 = vrot.slane %v1236, 5
      %v1239 = vsel %vm927, %v1234, %v1238
      %v1241 = vshrl.u32 %v910, 16
      %v1243 = vrot.slane %v1241, 4
      %v1244 = vshll.u32 %v910, 16
      %v1246 = vrot.slane %v1244, 5
      %v1247 = vor.u32 %v1243, %v1246
      %v1248 = vrot.slane %v1247, 4
      %v1250 = vshll.u32 %v911, 16
      %v1252 = vrot.slane %v1250, 5
      %v1253 = vsel %vm927, %v1248, %v1252
      %v1254 = vshrl.u32 %v911, 16
      %v1256 = vrot.slane %v1254, 4
      %v1257 = vor.u32 %v1256, %v1252
      %v1258 = vrot.slane %v1257, 4
      %v1260 = vshll.u32 %v912, 16
      %v1262 = vrot.slane %v1260, 5
      %v1263 = vsel %vm927, %v1258, %v1262
      %v1265 = vshrl.u32 %v913, 16
      %v1267 = vrot.slane %v1265, 4
      %v1268 = vshll.u32 %v913, 16
      %v1270 = vrot.slane %v1268, 5
      %v1271 = vor.u32 %v1267, %v1270
      %v1272 = vrot.slane %v1271, 4
      %v1274 = vshll.u32 %v914, 16
      %v1276 = vrot.slane %v1274, 5
      %v1277 = vsel %vm927, %v1272, %v1276
      %v1278 = vshrl.u32 %v914, 16
      %v1280 = vrot.slane %v1278, 4
      %v1281 = vor.u32 %v1280, %v1276
      %v1282 = vrot.slane %v1281, 4
      %v1284 = vshll.u32 %v915, 16
      %v1286 = vrot.slane %v1284, 5
      %v1287 = vsel %vm927, %v1282, %v1286
      %v1289 = vshrl.u32 %v916, 16
      %v1291 = vrot.slane %v1289, 4
      %v1292 = vshll.u32 %v916, 16
      %v1294 = vrot.slane %v1292, 5
      %v1295 = vor.u32 %v1291, %v1294
      %v1296 = vrot.slane %v1295, 4
      %v1298 = vshll.u32 %v917, 16
      %v1300 = vrot.slane %v1298, 5
      %v1301 = vsel %vm927, %v1296, %v1300
      %v1302 = vshrl.u32 %v917, 16
      %v1304 = vrot.slane %v1302, 4
      %v1305 = vor.u32 %v1304, %v1300
      %v1306 = vrot.slane %v1305, 4
      %v1308 = vshll.u32 %v918, 16
      %v1310 = vrot.slane %v1308, 5
      %v1311 = vsel %vm927, %v1306, %v1310
      %vm1360 = vcmask 1042432
      %vm1361 = vcmask 1046532
      %vm1362 = vmor %vm1360, %vm1361
      %v1363 = vrot.slane %v871, 5
      %v1364 = vrot.slane %v1363, 4
      %v1365 = vrot.slane %v872, 5
      %v1366 = vsel %vm1362, %v1364, %v1365
      %v1367 = vrot.slane %v1365, 4
      %v1368 = vrot.slane %v873, 5
      %v1369 = vsel %vm1362, %v1367, %v1368
      %v1370 = vrot.slane %v874, 5
      %v1371 = vrot.slane %v1370, 4
      %v1372 = vrot.slane %v875, 5
      %v1373 = vsel %vm1362, %v1371, %v1372
      %v1374 = vrot.slane %v1372, 4
      %v1375 = vrot.slane %v876, 5
      %v1376 = vsel %vm1362, %v1374, %v1375
      %v1377 = vrot.slane %v877, 5
      %v1378 = vrot.slane %v1377, 4
      %v1379 = vrot.slane %v878, 5
      %v1380 = vsel %vm1362, %v1378, %v1379
      %v1381 = vrot.slane %v1379, 4
      %v1382 = vrot.slane %v879, 5
      %v1383 = vsel %vm1362, %v1381, %v1382
      %v1384 = vrot.slane %v880, 5
      %v1385 = vrot.slane %v1384, 4
      %v1386 = vrot.slane %v881, 5
      %v1387 = vsel %vm1362, %v1385, %v1386
      %v1388 = vrot.slane %v1386, 4
      %v1389 = vrot.slane %v882, 5
      %v1390 = vsel %vm1362, %v1388, %v1389
      %v1391 = vrot.slane %v883, 5
      %v1392 = vrot.slane %v1391, 4
      %v1393 = vrot.slane %v884, 5
      %v1394 = vsel %vm1362, %v1392, %v1393
      %v1395 = vrot.slane %v1393, 4
      %v1396 = vrot.slane %v885, 5
      %v1397 = vsel %vm1362, %v1395, %v1396
      %v1398 = vrot.slane %v886, 5
      %v1399 = vrot.slane %v1398, 4
      %v1400 = vrot.slane %v887, 5
      %v1401 = vsel %vm1362, %v1399, %v1400
      %v1402 = vrot.slane %v1400, 4
      %v1403 = vrot.slane %v888, 5
      %v1404 = vsel %vm1362, %v1402, %v1403
      %v1405 = vrot.slane %v889, 5
      %v1406 = vrot.slane %v1405, 4
      %v1407 = vrot.slane %v890, 5
      %v1408 = vsel %vm1362, %v1406, %v1407
      %v1409 = vrot.slane %v1407, 4
      %v1410 = vrot.slane %v891, 5
      %v1411 = vsel %vm1362, %v1409, %v1410
      %v1412 = vrot.slane %v892, 5
      %v1413 = vrot.slane %v1412, 4
      %v1414 = vrot.slane %v893, 5
      %v1415 = vsel %vm1362, %v1413, %v1414
      %v1416 = vrot.slane %v1414, 4
      %v1417 = vrot.slane %v894, 5
      %v1418 = vsel %vm1362, %v1416, %v1417
      %v1419 = vrot.slane %v895, 5
      %v1420 = vrot.slane %v1419, 4
      %v1421 = vrot.slane %v896, 5
      %v1422 = vsel %vm1362, %v1420, %v1421
      %v1423 = vrot.slane %v1421, 4
      %v1424 = vrot.slane %v897, 5
      %v1425 = vsel %vm1362, %v1423, %v1424
      %v1426 = vrot.slane %v898, 5
      %v1427 = vrot.slane %v1426, 4
      %v1428 = vrot.slane %v899, 5
      %v1429 = vsel %vm1362, %v1427, %v1428
      %v1430 = vrot.slane %v1428, 4
      %v1431 = vrot.slane %v900, 5
      %v1432 = vsel %vm1362, %v1430, %v1431
      %v1433 = vrot.slane %v901, 5
      %v1434 = vrot.slane %v1433, 4
      %v1435 = vrot.slane %v902, 5
      %v1436 = vsel %vm1362, %v1434, %v1435
      %v1437 = vrot.slane %v1435, 4
      %v1438 = vrot.slane %v903, 5
      %v1439 = vsel %vm1362, %v1437, %v1438
      %v1440 = vrot.slane %v904, 5
      %v1441 = vrot.slane %v1440, 4
      %v1442 = vrot.slane %v905, 5
      %v1443 = vsel %vm1362, %v1441, %v1442
      %v1444 = vrot.slane %v1442, 4
      %v1445 = vrot.slane %v906, 5
      %v1446 = vsel %vm1362, %v1444, %v1445
      %v1447 = vrot.slane %v907, 5
      %v1448 = vrot.slane %v1447, 4
      %v1449 = vrot.slane %v908, 5
      %v1450 = vsel %vm1362, %v1448, %v1449
      %v1451 = vrot.slane %v1449, 4
      %v1452 = vrot.slane %v909, 5
      %v1453 = vsel %vm1362, %v1451, %v1452
      %v1454 = vrot.slane %v910, 5
      %v1455 = vrot.slane %v1454, 4
      %v1456 = vrot.slane %v911, 5
      %v1457 = vsel %vm1362, %v1455, %v1456
      %v1458 = vrot.slane %v1456, 4
      %v1459 = vrot.slane %v912, 5
      %v1460 = vsel %vm1362, %v1458, %v1459
      %v1461 = vrot.slane %v913, 5
      %v1462 = vrot.slane %v1461, 4
      %v1463 = vrot.slane %v914, 5
      %v1464 = vsel %vm1362, %v1462, %v1463
      %v1465 = vrot.slane %v1463, 4
      %v1466 = vrot.slane %v915, 5
      %v1467 = vsel %vm1362, %v1465, %v1466
      %v1468 = vrot.slane %v916, 5
      %v1469 = vrot.slane %v1468, 4
      %v1470 = vrot.slane %v917, 5
      %v1471 = vsel %vm1362, %v1469, %v1470
      %v1472 = vrot.slane %v1470, 4
      %v1473 = vrot.slane %v918, 5
      %v1474 = vsel %vm1362, %v1472, %v1473
      %v1476 = vshrl.u32 %v919, 16
      %v1478 = vrot.slane %v1476, 4
      %v1479 = vshll.u32 %v919, 16
      %v1481 = vrot.slane %v1479, 5
      %v1482 = vor.u32 %v1478, %v1481
      %v1483 = vrot.slane %v1482, 4
      %v1485 = vshll.u32 %v920, 16
      %v1487 = vrot.slane %v1485, 5
      %v1488 = vsel %vm927, %v1483, %v1487
      %v1489 = vshrl.u32 %v920, 16
      %v1491 = vrot.slane %v1489, 4
      %v1492 = vor.u32 %v1491, %v1487
      %v1493 = vrot.slane %v1492, 4
      %v1495 = vshll.u32 %v921, 16
      %v1497 = vrot.slane %v1495, 5
      %v1498 = vsel %vm927, %v1493, %v1497
      %v1502 = vrot.slane %v919, 5
      %v1503 = vrot.slane %v1502, 4
      %v1504 = vrot.slane %v920, 5
      %v1505 = vsel %vm1362, %v1503, %v1504
      %v1506 = vrot.slane %v1504, 4
      %v1507 = vrot.slane %v921, 5
      %v1508 = vsel %vm1362, %v1506, %v1507
      %v1510 = vshrl.u32 %v922, 16
      %v1512 = vrot.slane %v1510, 4
      %v1513 = vshll.u32 %v922, 16
      %v1515 = vrot.slane %v1513, 5
      %v1516 = vor.u32 %v1512, %v1515
      %v1517 = vrot.slane %v1516, 4
      %v1519 = vshll.u32 %v923, 16
      %v1521 = vrot.slane %v1519, 5
      %v1522 = vsel %vm927, %v1517, %v1521
      %v1523 = vshrl.u32 %v923, 16
      %v1525 = vrot.slane %v1523, 4
      %v1526 = vor.u32 %v1525, %v1521
      %v1527 = vrot.slane %v1526, 4
      %v1529 = vshll.u32 %v924, 16
      %v1531 = vrot.slane %v1529, 5
      %v1532 = vsel %vm927, %v1527, %v1531
      %v1536 = vrot.slane %v922, 5
      %v1537 = vrot.slane %v1536, 4
      %v1538 = vrot.slane %v923, 5
      %v1539 = vsel %vm1362, %v1537, %v1538
      %v1540 = vrot.slane %v1538, 4
      %v1541 = vrot.slane %v924, 5
      %v1542 = vsel %vm1362, %v1540, %v1541
      %v1543 = vunpack.c.l.b16 %v871
      %v1544 = vunpack.c.l.b16 %v872
      %v1545 = vunpack.c.l.b16 %v874
      %v1546 = vunpack.c.l.b16 %v875
      %v1547 = vunpack.c.l.b16 %v877
      %v1548 = vunpack.c.l.b16 %v878
      %v1549 = vunpack.c.l.b16 %v880
      %v1550 = vunpack.c.l.b16 %v881
      %v1551 = vunpack.c.l.b16 %v883
      %v1552 = vunpack.c.l.b16 %v884
      %v1553 = vunpack.c.l.b16 %v886
      %v1554 = vunpack.c.l.b16 %v887
      %v1555 = vunpack.c.l.b16 %v889
      %v1556 = vunpack.c.l.b16 %v890
      %v1557 = vunpack.c.l.b16 %v892
      %v1558 = vunpack.c.l.b16 %v893
      %v1559 = vunpack.c.l.b16 %v895
      %v1560 = vunpack.c.l.b16 %v896
      %v1561 = vunpack.c.l.b16 %v898
      %v1562 = vunpack.c.l.b16 %v899
      %v1563 = vunpack.c.l.b16 %v901
      %v1564 = vunpack.c.l.b16 %v902
      %v1565 = vunpack.c.l.b16 %v904
      %v1566 = vunpack.c.l.b16 %v905
      %v1567 = vunpack.c.l.b16 %v907
      %v1568 = vunpack.c.l.b16 %v908
      %v1569 = vunpack.c.l.b16 %v910
      %v1570 = vunpack.c.l.b16 %v911
      %v1571 = vunpack.c.l.b16 %v913
      %v1572 = vunpack.c.l.b16 %v914
      %v1573 = vunpack.c.l.b16 %v916
      %v1574 = vunpack.c.l.b16 %v917
      %v1575 = vpack.c.b16 %v1544, %v1543
      %v1576 = vpack.c.b16 %v1546, %v1545
      %v1577 = vpack.c.b16 %v1548, %v1547
      %v1578 = vpack.c.b16 %v1550, %v1549
      %v1579 = vpack.c.b16 %v1552, %v1551
      %v1580 = vpack.c.b16 %v1554, %v1553
      %v1581 = vpack.c.b16 %v1556, %v1555
      %v1582 = vpack.c.b16 %v1558, %v1557
      %v1583 = vpack.c.b16 %v1560, %v1559
      %v1584 = vpack.c.b16 %v1562, %v1561
      %v1585 = vpack.c.b16 %v1564, %v1563
      %v1586 = vpack.c.b16 %v1566, %v1565
      %v1587 = vpack.c.b16 %v1568, %v1567
      %v1588 = vpack.c.b16 %v1570, %v1569
      %v1589 = vpack.c.b16 %v1572, %v1571
      %v1590 = vpack.c.b16 %v1574, %v1573
      %v1591 = vunpack.c.l.b16 %v941
      %v1592 = vunpack.c.l.b16 %v951
      %v1593 = vunpack.c.l.b16 %v965
      %v1594 = vunpack.c.l.b16 %v975
      %v1595 = vunpack.c.l.b16 %v989
      %v1596 = vunpack.c.l.b16 %v999
      %v1597 = vunpack.c.l.b16 %v1013
      %v1598 = vunpack.c.l.b16 %v1023
      %v1599 = vunpack.c.l.b16 %v1037
      %v1600 = vunpack.c.l.b16 %v1047
      %v1601 = vunpack.c.l.b16 %v1061
      %v1602 = vunpack.c.l.b16 %v1071
      %v1603 = vunpack.c.l.b16 %v1085
      %v1604 = vunpack.c.l.b16 %v1095
      %v1605 = vunpack.c.l.b16 %v1109
      %v1606 = vunpack.c.l.b16 %v1119
      %v1607 = vunpack.c.l.b16 %v1133
      %v1608 = vunpack.c.l.b16 %v1143
      %v1609 = vunpack.c.l.b16 %v1157
      %v1610 = vunpack.c.l.b16 %v1167
      %v1611 = vunpack.c.l.b16 %v1181
      %v1612 = vunpack.c.l.b16 %v1191
      %v1613 = vunpack.c.l.b16 %v1205
      %v1614 = vunpack.c.l.b16 %v1215
      %v1615 = vunpack.c.l.b16 %v1229
      %v1616 = vunpack.c.l.b16 %v1239
      %v1617 = vunpack.c.l.b16 %v1253
      %v1618 = vunpack.c.l.b16 %v1263
      %v1619 = vunpack.c.l.b16 %v1277
      %v1620 = vunpack.c.l.b16 %v1287
      %v1621 = vunpack.c.l.b16 %v1301
      %v1622 = vunpack.c.l.b16 %v1311
      %v1623 = vpack.c.b16 %v1592, %v1591
      %v1624 = vpack.c.b16 %v1594, %v1593
      %v1625 = vpack.c.b16 %v1596, %v1595
      %v1626 = vpack.c.b16 %v1598, %v1597
      %v1627 = vpack.c.b16 %v1600, %v1599
      %v1628 = vpack.c.b16 %v1602, %v1601
      %v1629 = vpack.c.b16 %v1604, %v1603
      %v1630 = vpack.c.b16 %v1606, %v1605
      %v1631 = vpack.c.b16 %v1608, %v1607
      %v1632 = vpack.c.b16 %v1610, %v1609
      %v1633 = vpack.c.b16 %v1612, %v1611
      %v1634 = vpack.c.b16 %v1614, %v1613
      %v1635 = vpack.c.b16 %v1616, %v1615
      %v1636 = vpack.c.b16 %v1618, %v1617
      %v1637 = vpack.c.b16 %v1620, %v1619
      %v1638 = vpack.c.b16 %v1622, %v1621
      %1639 = vrot.lane.b32.xlu0 %v1623, 64
      %v1640 = vpop.permute.xlu0 %1639
      %1641 = vrot.lane.b32.xlu0 %v1624, 64
      %v1642 = vpop.permute.xlu0 %1641
      %1643 = vrot.lane.b32.xlu0 %v1625, 64
      %v1644 = vpop.permute.xlu0 %1643
      %1645 = vrot.lane.b32.xlu0 %v1626, 64
      %v1646 = vpop.permute.xlu0 %1645
      %1647 = vrot.lane.b32.xlu0 %v1627, 64
      %v1648 = vpop.permute.xlu0 %1647
      %1649 = vrot.lane.b32.xlu0 %v1628, 64
      %v1650 = vpop.permute.xlu0 %1649
      %1651 = vrot.lane.b32.xlu0 %v1629, 64
      %v1652 = vpop.permute.xlu0 %1651
      %1653 = vrot.lane.b32.xlu0 %v1630, 64
      %v1654 = vpop.permute.xlu0 %1653
      %1655 = vrot.lane.b32.xlu0 %v1631, 64
      %v1656 = vpop.permute.xlu0 %1655
      %1657 = vrot.lane.b32.xlu0 %v1632, 64
      %v1658 = vpop.permute.xlu0 %1657
      %1659 = vrot.lane.b32.xlu0 %v1633, 64
      %v1660 = vpop.permute.xlu0 %1659
      %1661 = vrot.lane.b32.xlu0 %v1634, 64
      %v1662 = vpop.permute.xlu0 %1661
      %1663 = vrot.lane.b32.xlu0 %v1635, 64
      %v1664 = vpop.permute.xlu0 %1663
      %1665 = vrot.lane.b32.xlu0 %v1636, 64
      %v1666 = vpop.permute.xlu0 %1665
      %1667 = vrot.lane.b32.xlu0 %v1637, 64
      %v1668 = vpop.permute.xlu0 %1667
      %1669 = vrot.lane.b32.xlu0 %v1638, 64
      %v1670 = vpop.permute.xlu0 %1669
      %v1671 = vunpack.c.l.b16 %v1366
      %v1672 = vunpack.c.l.b16 %v1369
      %v1673 = vunpack.c.l.b16 %v1373
      %v1674 = vunpack.c.l.b16 %v1376
      %v1675 = vunpack.c.l.b16 %v1380
      %v1676 = vunpack.c.l.b16 %v1383
      %v1677 = vunpack.c.l.b16 %v1387
      %v1678 = vunpack.c.l.b16 %v1390
      %v1679 = vunpack.c.l.b16 %v1394
      %v1680 = vunpack.c.l.b16 %v1397
      %v1681 = vunpack.c.l.b16 %v1401
      %v1682 = vunpack.c.l.b16 %v1404
      %v1683 = vunpack.c.l.b16 %v1408
      %v1684 = vunpack.c.l.b16 %v1411
      %v1685 = vunpack.c.l.b16 %v1415
      %v1686 = vunpack.c.l.b16 %v1418
      %v1687 = vunpack.c.l.b16 %v1422
      %v1688 = vunpack.c.l.b16 %v1425
      %v1689 = vunpack.c.l.b16 %v1429
      %v1690 = vunpack.c.l.b16 %v1432
      %v1691 = vunpack.c.l.b16 %v1436
      %v1692 = vunpack.c.l.b16 %v1439
      %v1693 = vunpack.c.l.b16 %v1443
      %v1694 = vunpack.c.l.b16 %v1446
      %v1695 = vunpack.c.l.b16 %v1450
      %v1696 = vunpack.c.l.b16 %v1453
      %v1697 = vunpack.c.l.b16 %v1457
      %v1698 = vunpack.c.l.b16 %v1460
      %v1699 = vunpack.c.l.b16 %v1464
      %v1700 = vunpack.c.l.b16 %v1467
      %v1701 = vunpack.c.l.b16 %v1471
      %v1702 = vunpack.c.l.b16 %v1474
      %v1703 = vpack.c.b16 %v1672, %v1671
      %v1704 = vpack.c.b16 %v1674, %v1673
      %v1705 = vpack.c.b16 %v1676, %v1675
      %v1706 = vpack.c.b16 %v1678, %v1677
      %v1707 = vpack.c.b16 %v1680, %v1679
      %v1708 = vpack.c.b16 %v1682, %v1681
      %v1709 = vpack.c.b16 %v1684, %v1683
      %v1710 = vpack.c.b16 %v1686, %v1685
      %v1711 = vpack.c.b16 %v1688, %v1687
      %v1712 = vpack.c.b16 %v1690, %v1689
      %v1713 = vpack.c.b16 %v1692, %v1691
      %v1714 = vpack.c.b16 %v1694, %v1693
      %v1715 = vpack.c.b16 %v1696, %v1695
      %v1716 = vpack.c.b16 %v1698, %v1697
      %v1717 = vpack.c.b16 %v1700, %v1699
      %v1718 = vpack.c.b16 %v1702, %v1701
      %v1719 = vunpack.c.l.b16 %v919
      %v1720 = vunpack.c.l.b16 %v920
      %v1721 = vpack.c.b16 %v1720, %v1719
      %1722 = vrot.lane.b32.xlu0 %v1576, 64
      %v1723 = vpop.permute.xlu0 %1722
      %1724 = vrot.lane.b32.xlu0 %v1577, 64
      %v1725 = vpop.permute.xlu0 %1724
      %1726 = vrot.lane.b32.xlu0 %v1578, 64
      %v1727 = vpop.permute.xlu0 %1726
      %1728 = vrot.lane.b32.xlu0 %v1579, 64
      %v1729 = vpop.permute.xlu0 %1728
      %1730 = vrot.lane.b32.xlu0 %v1580, 64
      %v1731 = vpop.permute.xlu0 %1730
      %1732 = vrot.lane.b32.xlu0 %v1581, 64
      %v1733 = vpop.permute.xlu0 %1732
      %1734 = vrot.lane.b32.xlu0 %v1582, 64
      %v1735 = vpop.permute.xlu0 %1734
      %1736 = vrot.lane.b32.xlu0 %v1583, 64
      %v1737 = vpop.permute.xlu0 %1736
      %1738 = vrot.lane.b32.xlu0 %v1584, 64
      %v1739 = vpop.permute.xlu0 %1738
      %1740 = vrot.lane.b32.xlu0 %v1585, 64
      %v1741 = vpop.permute.xlu0 %1740
      %1742 = vrot.lane.b32.xlu0 %v1586, 64
      %v1743 = vpop.permute.xlu0 %1742
      %1744 = vrot.lane.b32.xlu0 %v1587, 64
      %v1745 = vpop.permute.xlu0 %1744
      %1746 = vrot.lane.b32.xlu0 %v1588, 64
      %v1747 = vpop.permute.xlu0 %1746
      %1748 = vrot.lane.b32.xlu0 %v1589, 64
      %v1749 = vpop.permute.xlu0 %1748
      %1750 = vrot.lane.b32.xlu0 %v1590, 64
      %v1751 = vpop.permute.xlu0 %1750
      %1752 = vrot.lane.b32.xlu0 %v1721, 64
      %v1753 = vpop.permute.xlu0 %1752
      %v1754 = vunpack.c.l.b16 %v1488
      %v1755 = vunpack.c.l.b16 %v1498
      %v1756 = vpack.c.b16 %v1755, %v1754
      %v1757 = vunpack.c.l.b16 %v1505
      %v1758 = vunpack.c.l.b16 %v1508
      %v1759 = vpack.c.b16 %v1758, %v1757
      %1760 = vrot.lane.b32.xlu0 %v1704, 64
      %v1761 = vpop.permute.xlu0 %1760
      %1762 = vrot.lane.b32.xlu0 %v1705, 64
      %v1763 = vpop.permute.xlu0 %1762
      %1764 = vrot.lane.b32.xlu0 %v1706, 64
      %v1765 = vpop.permute.xlu0 %1764
      %1766 = vrot.lane.b32.xlu0 %v1707, 64
      %v1767 = vpop.permute.xlu0 %1766
      %1768 = vrot.lane.b32.xlu0 %v1708, 64
      %v1769 = vpop.permute.xlu0 %1768
      %1770 = vrot.lane.b32.xlu0 %v1709, 64
      %v1771 = vpop.permute.xlu0 %1770
      %1772 = vrot.lane.b32.xlu0 %v1710, 64
      %v1773 = vpop.permute.xlu0 %1772
      %1774 = vrot.lane.b32.xlu0 %v1711, 64
      %v1775 = vpop.permute.xlu0 %1774
      %1776 = vrot.lane.b32.xlu0 %v1712, 64
      %v1777 = vpop.permute.xlu0 %1776
      %1778 = vrot.lane.b32.xlu0 %v1713, 64
      %v1779 = vpop.permute.xlu0 %1778
      %1780 = vrot.lane.b32.xlu0 %v1714, 64
      %v1781 = vpop.permute.xlu0 %1780
      %1782 = vrot.lane.b32.xlu0 %v1715, 64
      %v1783 = vpop.permute.xlu0 %1782
      %1784 = vrot.lane.b32.xlu0 %v1716, 64
      %v1785 = vpop.permute.xlu0 %1784
      %1786 = vrot.lane.b32.xlu0 %v1717, 64
      %v1787 = vpop.permute.xlu0 %1786
      %1788 = vrot.lane.b32.xlu0 %v1718, 64
      %v1789 = vpop.permute.xlu0 %1788
      %1790 = vrot.lane.b32.xlu0 %v1759, 64
      %v1791 = vpop.permute.xlu0 %1790
      %v1792 = vunpack.c.l.b16 %v922
      %v1793 = vunpack.c.l.b16 %v923
      %v1794 = vpack.c.b16 %v1793, %v1792
      %v1795 = vunpack.c.l.b16 %v1522
      %v1796 = vunpack.c.l.b16 %v1532
      %v1797 = vpack.c.b16 %v1796, %v1795
      %1798 = vrot.lane.b32.xlu0 %v1756, 64
      %v1799 = vpop.permute.xlu0 %1798
      %1800 = vrot.lane.b32.xlu0 %v1797, 64
      %v1801 = vpop.permute.xlu0 %1800
      %v1802 = vunpack.c.l.b16 %v1539
      %v1803 = vunpack.c.l.b16 %v1542
      %v1804 = vpack.c.b16 %v1803, %v1802
      %vm1805 = vcmask 523264
      %v1808 = vsel %vm1805, %v1575, %v1640
      %v1812 = vsel %vm1805, %v1576, %v1642
      %v1816 = vsel %vm1805, %v1577, %v1644
      %v1820 = vsel %vm1805, %v1578, %v1646
      %v1824 = vsel %vm1805, %v1579, %v1648
      %v1828 = vsel %vm1805, %v1580, %v1650
      %v1832 = vsel %vm1805, %v1581, %v1652
      %v1836 = vsel %vm1805, %v1582, %v1654
      %v1840 = vsel %vm1805, %v1583, %v1656
      %v1844 = vsel %vm1805, %v1584, %v1658
      %v1848 = vsel %vm1805, %v1585, %v1660
      %v1852 = vsel %vm1805, %v1586, %v1662
      %v1856 = vsel %vm1805, %v1587, %v1664
      %v1860 = vsel %vm1805, %v1588, %v1666
      %v1864 = vsel %vm1805, %v1589, %v1668
      %v1868 = vsel %vm1805, %v1590, %v1670
      %v1872 = vsel %vm1805, %v1703, %v1723
      %v1876 = vsel %vm1805, %v1704, %v1725
      %v1880 = vsel %vm1805, %v1705, %v1727
      %v1884 = vsel %vm1805, %v1706, %v1729
      %v1888 = vsel %vm1805, %v1707, %v1731
      %v1892 = vsel %vm1805, %v1708, %v1733
      %v1896 = vsel %vm1805, %v1709, %v1735
      %v1900 = vsel %vm1805, %v1710, %v1737
      %v1904 = vsel %vm1805, %v1711, %v1739
      %v1908 = vsel %vm1805, %v1712, %v1741
      %v1912 = vsel %vm1805, %v1713, %v1743
      %v1916 = vsel %vm1805, %v1714, %v1745
      %v1920 = vsel %vm1805, %v1715, %v1747
      %v1924 = vsel %vm1805, %v1716, %v1749
      %v1928 = vsel %vm1805, %v1717, %v1751
      %v1932 = vsel %vm1805, %v1718, %v1753
      %v1936 = vsel %vm1805, %v1624, %v1761
      %v1940 = vsel %vm1805, %v1625, %v1763
      %v1944 = vsel %vm1805, %v1626, %v1765
      %v1948 = vsel %vm1805, %v1627, %v1767
      %v1952 = vsel %vm1805, %v1628, %v1769
      %v1956 = vsel %vm1805, %v1629, %v1771
      %v1960 = vsel %vm1805, %v1630, %v1773
      %v1964 = vsel %vm1805, %v1631, %v1775
      %v1968 = vsel %vm1805, %v1632, %v1777
      %v1972 = vsel %vm1805, %v1633, %v1779
      %v1976 = vsel %vm1805, %v1634, %v1781
      %v1980 = vsel %vm1805, %v1635, %v1783
      %v1984 = vsel %vm1805, %v1636, %v1785
      %v1988 = vsel %vm1805, %v1637, %v1787
      %v1992 = vsel %vm1805, %v1638, %v1789
      %v1996 = vsel %vm1805, %v1756, %v1791
      %v2000 = vsel %vm1805, %v1721, %v1799
      %v2004 = vsel %vm1805, %v1794, %v1801
      %v2006 = vld [vmem:[%s1] sm:$0xf]
      %v2007 = vld [vmem:[%s1 + $0x4] sm:$0xf]
      %v2008 = vld [vmem:[%s1 + $0x8] sm:$0xf]
      %v2009 = vld [vmem:[%s1 + $0xc] sm:$0xf]
      %v2010 = vld [vmem:[%s1 + $0x10] sm:$0xf]
      %v2011 = vld [vmem:[%s1 + $0x14] sm:$0xf]
      %v2012 = vld [vmem:[%s1 + $0x18] sm:$0xf]
      %v2013 = vld [vmem:[%s1 + $0x1c] sm:$0xf]
      %v2014 = vld [vmem:[%s1 + $0x20] sm:$0xf]
      %v2015 = vld [vmem:[%s1 + $0x24] sm:$0xf]
      %v2016 = vld [vmem:[%s1 + $0x28] sm:$0xf]
      %v2017 = vld [vmem:[%s1 + $0x2c] sm:$0xf]
      %v2018 = vld [vmem:[%s1 + $0x30] sm:$0xf]
      %v2019 = vld [vmem:[%s1 + $0x34] sm:$0xf]
      %v2020 = vld [vmem:[%s1 + $0x38] sm:$0xf]
      %v2021 = vld [vmem:[%s1 + $0x3c] sm:$0xf]
      %v2022 = vld [vmem:[%s1 + $0x40] sm:$0xf]
      %v2023 = vld [vmem:[%s1 + $0x44] sm:$0xf]
      %v2024 = vld [vmem:[%s1 + $0x48] sm:$0xf]
      %v2025 = vld [vmem:[%s1 + $0x4c] sm:$0xf]
      %v2026 = vld [vmem:[%s1 + $0x50] sm:$0xf]
      %v2027 = vld [vmem:[%s1 + $0x54] sm:$0xf]
      %v2028 = vld [vmem:[%s1 + $0x58] sm:$0xf]
      %v2029 = vld [vmem:[%s1 + $0x5c] sm:$0xf]
      %v2030 = vld [vmem:[%s1 + $0x60] sm:$0xf]
      %v2031 = vld [vmem:[%s1 + $0x64] sm:$0xf]
      %v2032 = vld [vmem:[%s1 + $0x68] sm:$0xf]
      %v2033 = vld [vmem:[%s1 + $0x6c] sm:$0xf]
      %v2034 = vld [vmem:[%s1 + $0x70] sm:$0xf]
      %v2035 = vld [vmem:[%s1 + $0x74] sm:$0xf]
      %v2036 = vld [vmem:[%s1 + $0x78] sm:$0xf]
      %v2037 = vld [vmem:[%s1 + $0x7c] sm:$0xf]
      %v2038 = vld [vmem:[%s1 + $0x80] sm:$0xf]
      %v2039 = vld [vmem:[%s1 + $0x84] sm:$0xf]
      %v2040 = vld [vmem:[%s1 + $0x88] sm:$0xf]
      %v2041 = vld [vmem:[%s1 + $0x8c] sm:$0xf]
      %v2042 = vld [vmem:[%s1 + $0x90] sm:$0xf]
      %v2043 = vld [vmem:[%s1 + $0x94] sm:$0xf]
      %v2044 = vld [vmem:[%s1 + $0x98] sm:$0xf]
      %v2045 = vld [vmem:[%s1 + $0x9c] sm:$0xf]
      %v2046 = vld [vmem:[%s1 + $0xa0] sm:$0xf]
      %v2047 = vld [vmem:[%s1 + $0xa4] sm:$0xf]
      %v2048 = vld [vmem:[%s1 + $0xa8] sm:$0xf]
      %v2049 = vld [vmem:[%s1 + $0xac] sm:$0xf]
      %v2050 = vld [vmem:[%s1 + $0xb0] sm:$0xf]
      %v2051 = vld [vmem:[%s1 + $0xb4] sm:$0xf]
      %v2052 = vld [vmem:[%s1 + $0xb8] sm:$0xf]
      %v2053 = vld [vmem:[%s1 + $0xbc] sm:$0xf]
      %v2054 = vld [vmem:[%s1 + $0xc0] sm:$0xf]
      %v2055 = vld [vmem:[%s1 + $0xc4] sm:$0xf]
      %v2056 = vld [vmem:[%s1 + $0xc8] sm:$0xf]
      %v2057 = vld [vmem:[%s1 + $0xcc] sm:$0xf]
      %v2058 = vld [vmem:[%s1 + $0xd0] sm:$0xf]
      %v2059 = vld [vmem:[%s1 + $0xd4] sm:$0xf]
      %v2060 = vld [vmem:[%s1 + $0xd8] sm:$0xf]
      %v2061 = vld [vmem:[%s1 + $0xdc] sm:$0xf]
      %v2062 = vld [vmem:[%s1 + $0xe0] sm:$0xf]
      %v2063 = vld [vmem:[%s1 + $0xe4] sm:$0xf]
      %v2064 = vld [vmem:[%s1 + $0xe8] sm:$0xf]
      %v2065 = vld [vmem:[%s1 + $0xec] sm:$0xf]
      %v2066 = vld [vmem:[%s1 + $0xf0] sm:$0xf]
      %v2067 = vld [vmem:[%s1 + $0xf4] sm:$0xf]
      %v2068 = vld [vmem:[%s1 + $0xf8] sm:$0xf]
      %v2069 = vld [vmem:[%s1 + $0xfc] sm:$0xf]
      %v2070 = vld [vmem:[%s1 + $0x100] sm:$0xf]
      %v2071 = vld [vmem:[%s1 + $0x104] sm:$0xf]
      %v2072 = vld [vmem:[%s1 + $0x108] sm:$0xf]
      %v2073 = vld [vmem:[%s1 + $0x10c] sm:$0xf]
      %v2074 = vld [vmem:[%s1 + $0x110] sm:$0xf]
      %v2075 = vld [vmem:[%s1 + $0x114] sm:$0xf]
      %v2076 = vld [vmem:[%s1 + $0x118] sm:$0xf]
      %v2077 = vld [vmem:[%s1 + $0x11c] sm:$0xf]
      %v2078 = vld [vmem:[%s2] sm:$0x1]
      %v2080 = vlaneseq
      %v2081 = vshrl.u32 %v2080, 7
      %v2082 = vsub.s32 0, %v2081
      %v2083 = vrot.slane %v2078, %v2082
      %v2157 = vunpack.c.l.b16 %v2006
      %v2158 = vunpack.c.l.b16 %v2007
      %v2159 = vunpack.c.l.b16 %v2008
      %v2160 = vunpack.c.l.b16 %v2009
      %v2161 = vunpack.c.l.b16 %v2010
      %v2162 = vunpack.c.l.b16 %v2011
      %v2163 = vunpack.c.l.b16 %v2012
      %v2164 = vunpack.c.l.b16 %v2013
      %v2165 = vunpack.c.l.b16 %v2014
      %v2166 = vunpack.c.l.b16 %v2015
      %v2167 = vunpack.c.l.b16 %v2016
      %v2168 = vunpack.c.l.b16 %v2017
      %v2169 = vunpack.c.l.b16 %v2018
      %v2170 = vunpack.c.l.b16 %v2019
      %v2171 = vunpack.c.l.b16 %v2020
      %v2172 = vunpack.c.l.b16 %v2021
      %v2173 = vunpack.c.l.b16 %v2022
      %v2174 = vunpack.c.l.b16 %v2023
      %v2175 = vunpack.c.l.b16 %v2024
      %v2176 = vunpack.c.l.b16 %v2025
      %v2177 = vunpack.c.l.b16 %v2026
      %v2178 = vunpack.c.l.b16 %v2027
      %v2179 = vunpack.c.l.b16 %v2028
      %v2180 = vunpack.c.l.b16 %v2029
      %v2181 = vunpack.c.l.b16 %v2030
      %v2182 = vunpack.c.l.b16 %v2031
      %v2183 = vunpack.c.l.b16 %v2032
      %v2184 = vunpack.c.l.b16 %v2033
      %v2185 = vunpack.c.l.b16 %v2034
      %v2186 = vunpack.c.l.b16 %v2035
      %v2187 = vunpack.c.l.b16 %v2036
      %v2188 = vunpack.c.l.b16 %v2037
      %v2189 = vunpack.c.l.b16 %v2038
      %v2190 = vunpack.c.l.b16 %v2039
      %v2191 = vunpack.c.l.b16 %v2040
      %v2192 = vunpack.c.l.b16 %v2041
      %v2193 = vunpack.c.l.b16 %v2042
      %v2194 = vunpack.c.l.b16 %v2043
      %v2195 = vunpack.c.l.b16 %v2044
      %v2196 = vunpack.c.l.b16 %v2045
      %v2197 = vunpack.c.l.b16 %v2046
      %v2198 = vunpack.c.l.b16 %v2047
      %v2199 = vunpack.c.l.b16 %v2048
      %v2200 = vunpack.c.l.b16 %v2049
      %v2201 = vunpack.c.l.b16 %v2050
      %v2202 = vunpack.c.l.b16 %v2051
      %v2203 = vunpack.c.l.b16 %v2052
      %v2204 = vunpack.c.l.b16 %v2053
      %v2205 = vunpack.c.l.b16 %v2054
      %v2206 = vunpack.c.l.b16 %v2055
      %v2207 = vunpack.c.l.b16 %v2056
      %v2208 = vunpack.c.l.b16 %v2057
      %v2209 = vunpack.c.l.b16 %v2058
      %v2210 = vunpack.c.l.b16 %v2059
      %v2211 = vunpack.c.l.b16 %v2060
      %v2212 = vunpack.c.l.b16 %v2061
      %v2213 = vunpack.c.l.b16 %v2062
      %v2214 = vunpack.c.l.b16 %v2063
      %v2215 = vunpack.c.l.b16 %v2064
      %v2216 = vunpack.c.l.b16 %v2065
      %v2217 = vunpack.c.l.b16 %v2066
      %v2218 = vunpack.c.l.b16 %v2067
      %v2219 = vunpack.c.l.b16 %v2068
      %v2220 = vunpack.c.l.b16 %v2069
      %v2221 = vunpack.c.l.b16 %v2070
      %v2222 = vunpack.c.l.b16 %v2071
      %v2223 = vunpack.c.l.b16 %v2072
      %v2224 = vunpack.c.l.b16 %v2073
      %v2225 = vunpack.c.l.b16 %v2074
      %v2226 = vunpack.c.l.b16 %v2075
      %v2227 = vunpack.c.l.b16 %v2076
      %v2228 = vunpack.c.l.b16 %v2077
      %v2229 = vpack.c.b16 %v2158, %v2157
      %v2230 = vpack.c.b16 %v2160, %v2159
      %v2231 = vpack.c.b16 %v2162, %v2161
      %v2232 = vpack.c.b16 %v2164, %v2163
      %v2233 = vpack.c.b16 %v2166, %v2165
      %v2234 = vpack.c.b16 %v2168, %v2167
      %v2235 = vpack.c.b16 %v2170, %v2169
      %v2236 = vpack.c.b16 %v2172, %v2171
      %v2237 = vpack.c.b16 %v2174, %v2173
      %v2238 = vpack.c.b16 %v2176, %v2175
      %v2239 = vpack.c.b16 %v2178, %v2177
      %v2240 = vpack.c.b16 %v2180, %v2179
      %v2241 = vpack.c.b16 %v2182, %v2181
      %v2242 = vpack.c.b16 %v2184, %v2183
      %v2243 = vpack.c.b16 %v2186, %v2185
      %v2244 = vpack.c.b16 %v2188, %v2187
      %v2245 = vpack.c.b16 %v2190, %v2189
      %v2246 = vpack.c.b16 %v2192, %v2191
      %v2247 = vpack.c.b16 %v2194, %v2193
      %v2248 = vpack.c.b16 %v2196, %v2195
      %v2249 = vpack.c.b16 %v2198, %v2197
      %v2250 = vpack.c.b16 %v2200, %v2199
      %v2251 = vpack.c.b16 %v2202, %v2201
      %v2252 = vpack.c.b16 %v2204, %v2203
      %v2253 = vpack.c.b16 %v2206, %v2205
      %v2254 = vpack.c.b16 %v2208, %v2207
      %v2255 = vpack.c.b16 %v2210, %v2209
      %v2256 = vpack.c.b16 %v2212, %v2211
      %v2257 = vpack.c.b16 %v2214, %v2213
      %v2258 = vpack.c.b16 %v2216, %v2215
      %v2259 = vpack.c.b16 %v2218, %v2217
      %v2260 = vpack.c.b16 %v2220, %v2219
      %v2261 = vpack.c.b16 %v2222, %v2221
      %v2262 = vpack.c.b16 %v2224, %v2223
      %v2263 = vpack.c.b16 %v2226, %v2225
      %v2264 = vpack.c.b16 %v2228, %v2227
      %v2301 = vsel %vm1805, %v1705, 0
      %v2303 = vsel %vm1805, %v1706, 0
      %v2305 = vsel %vm1805, %v1707, 0
      %v2307 = vsel %vm1805, %v1708, 0
      %v2309 = vsel %vm1805, %v1709, 0
      %v2311 = vsel %vm1805, %v1710, 0
      %v2313 = vsel %vm1805, %v1711, 0
      %v2315 = vsel %vm1805, %v1712, 0
      %v2317 = vsel %vm1805, %v1713, 0
      %v2319 = vsel %vm1805, %v1714, 0
      %v2321 = vsel %vm1805, %v1715, 0
      %v2323 = vsel %vm1805, %v1716, 0
      %v2325 = vsel %vm1805, %v1717, 0
      %v2327 = vsel %vm1805, %v1718, 0
      %v2330 = vsel %vm1805, %v1759, 0
      %v2333 = vsel %vm1805, %v1804, 0
      %2335 = vmatprep.subr.bf16.mxu0 0
      %2336 = vmatpush1.bf16.msra.mxu0 %v2229
      %2337 = vmatprep.subr.bf16.mxu0 0
      %2338 = vmatpush1.bf16.msra.mxu0 %v2230
      %2339 = vmatprep.subr.bf16.mxu0 0
      %2340 = vmatpush1.bf16.msra.mxu0 %v2231
      %2341 = vmatprep.subr.bf16.mxu0 0
      %2342 = vmatpush1.bf16.msra.mxu0 %v2232
      %2343 = vmatprep.subr.bf16.mxu0 0
      %2344 = vmatpush1.bf16.msra.mxu0 %v2233
      %2345 = vmatprep.subr.bf16.mxu0 0
      %2346 = vmatpush1.bf16.msra.mxu0 %v2234
      %2347 = vmatprep.subr.bf16.mxu0 0
      %2348 = vmatpush1.bf16.msra.mxu0 %v2235
      %2349 = vmatprep.subr.bf16.mxu0 0
      %2350 = vmatpush1.bf16.msra.mxu0 %v2236
      %2351 = vmatprep.subr.bf16.mxu0 0
      %2352 = vmatpush1.bf16.msra.mxu0 %v2237
      %2353 = vmatprep.subr.bf16.mxu0 0
      %2354 = vmatpush1.bf16.msra.mxu0 %v2238
      %2355 = vmatprep.subr.bf16.mxu0 0
      %2356 = vmatpush1.bf16.msra.mxu0 %v2239
      %2357 = vmatprep.subr.bf16.mxu0 0
      %2358 = vmatpush1.bf16.msra.mxu0 %v2240
      %2359 = vmatprep.subr.bf16.mxu0 0
      %2360 = vmatpush1.bf16.msra.mxu0 %v2241
      %2361 = vmatprep.subr.bf16.mxu0 0
      %2362 = vmatpush1.bf16.msra.mxu0 %v2242
      %2363 = vmatprep.subr.bf16.mxu0 0
      %2364 = vmatpush1.bf16.msra.mxu0 %v2243
      %2365 = vmatprep.subr.bf16.mxu0 0
      %2366 = vmatpush1.bf16.msra.mxu0 %v2244
      %2367 = vmatprep.mubr.bf16.mxu0 %v1872
      %2368 = vmatmul.mubr.bf16.gmra.mrb[0].mxu0 %v1808
      %v2369 = vpop.f32.mrb[0].mxu0
      %v2370 = vadd.f32 %v2083, %v2369
      %v2371 = vpop.f32.mrb[0].mxu0
      %v2372 = vpop.f32.mrb[0].mxu0
      %v2373 = vadd.f32 %v2083, %v2372
      %v2374 = vpop.f32.mrb[0].mxu0
      %2375 = vmatprep.mubr.bf16.mxu0 %v1876
      %2376 = vmatmul.mubr.bf16.gmra.mrb[0].mxu0 %v1812
      %v2377 = vpop.f32.mrb[0].mxu0
      %v2378 = vadd.f32 %v2083, %v2377
      %v2379 = vpop.f32.mrb[0].mxu0
      %v2380 = vpop.f32.mrb[0].mxu0
      %v2381 = vadd.f32 %v2083, %v2380
      %v2382 = vpop.f32.mrb[0].mxu0
      %2383 = vmatprep.mubr.bf16.mxu0 %v1880
      %2384 = vmatmul.mubr.bf16.gmra.mrb[0].mxu0 %v1816
      %v2385 = vpop.f32.mrb[0].mxu0
      %v2386 = vadd.f32 %v2083, %v2385
      %v2387 = vpop.f32.mrb[0].mxu0
      %v2388 = vpop.f32.mrb[0].mxu0
      %v2389 = vadd.f32 %v2083, %v2388
      %v2390 = vpop.f32.mrb[0].mxu0
      %2391 = vmatprep.mubr.bf16.mxu0 %v1884
      %2392 = vmatmul.mubr.bf16.gmra.mrb[0].mxu0 %v1820
      %v2393 = vpop.f32.mrb[0].mxu0
      %v2394 = vadd.f32 %v2083, %v2393
      %v2395 = vpop.f32.mrb[0].mxu0
      %v2396 = vpop.f32.mrb[0].mxu0
      %v2397 = vadd.f32 %v2083, %v2396
      %v2398 = vpop.f32.mrb[0].mxu0
      %2399 = vmatprep.mubr.bf16.mxu0 %v1888
      %2400 = vmatmul.mubr.bf16.gmra.mrb[0].mxu0 %v1824
      %v2401 = vpop.f32.mrb[0].mxu0
      %v2402 = vadd.f32 %v2083, %v2401
      %v2403 = vpop.f32.mrb[0].mxu0
      %v2404 = vpop.f32.mrb[0].mxu0
      %v2405 = vadd.f32 %v2083, %v2404
      %v2406 = vpop.f32.mrb[0].mxu0
      %2407 = vmatprep.mubr.bf16.mxu0 %v1892
      %2408 = vmatmul.mubr.bf16.gmra.mrb[0].mxu0 %v1828
      %v2409 = vpop.f32.mrb[0].mxu0
      %v2410 = vadd.f32 %v2083, %v2409
      %v2411 = vpop.f32.mrb[0].mxu0
      %v2412 = vpop.f32.mrb[0].mxu0
      %v2413 = vadd.f32 %v2083, %v2412
      %v2414 = vpop.f32.mrb[0].mxu0
      %2415 = vmatprep.mubr.bf16.mxu0 %v1896
      %2416 = vmatmul.mubr.bf16.gmra.mrb[0].mxu0 %v1832
      %v2417 = vpop.f32.mrb[0].mxu0
      %v2418 = vadd.f32 %v2083, %v2417
      %v2419 = vpop.f32.mrb[0].mxu0
      %v2420 = vpop.f32.mrb[0].mxu0
      %v2421 = vadd.f32 %v2083, %v2420
      %v2422 = vpop.f32.mrb[0].mxu0
      %2423 = vmatprep.mubr.bf16.mxu0 %v1900
      %2424 = vmatmul.mubr.bf16.gmra.mrb[0].mxu0 %v1836
      %v2425 = vpop.f32.mrb[0].mxu0
      %v2426 = vadd.f32 %v2083, %v2425
      %v2427 = vpop.f32.mrb[0].mxu0
      %v2428 = vpop.f32.mrb[0].mxu0
      %v2429 = vadd.f32 %v2083, %v2428
      %v2430 = vpop.f32.mrb[0].mxu0
      %2431 = vmatprep.mubr.bf16.mxu0 %v1904
      %2432 = vmatmul.mubr.bf16.gmra.mrb[0].mxu0 %v1840
      %v2433 = vpop.f32.mrb[0].mxu0
      %v2434 = vadd.f32 %v2083, %v2433
      %v2435 = vpop.f32.mrb[0].mxu0
      %v2436 = vpop.f32.mrb[0].mxu0
      %v2437 = vadd.f32 %v2083, %v2436
      %v2438 = vpop.f32.mrb[0].mxu0
      %2439 = vmatprep.mubr.bf16.mxu0 %v1908
      %2440 = vmatmul.mubr.bf16.gmra.mrb[0].mxu0 %v1844
      %v2441 = vpop.f32.mrb[0].mxu0
      %v2442 = vadd.f32 %v2083, %v2441
      %v2443 = vpop.f32.mrb[0].mxu0
      %v2444 = vpop.f32.mrb[0].mxu0
      %v2445 = vadd.f32 %v2083, %v2444
      %v2446 = vpop.f32.mrb[0].mxu0
      %2447 = vmatprep.mubr.bf16.mxu0 %v1912
      %2448 = vmatmul.mubr.bf16.gmra.mrb[0].mxu0 %v1848
      %v2449 = vpop.f32.mrb[0].mxu0
      %v2450 = vadd.f32 %v2083, %v2449
      %v2451 = vpop.f32.mrb[0].mxu0
      %v2452 = vpop.f32.mrb[0].mxu0
      %v2453 = vadd.f32 %v2083, %v2452
      %v2454 = vpop.f32.mrb[0].mxu0
      %2455 = vmatprep.mubr.bf16.mxu0 %v1916
      %2456 = vmatmul.mubr.bf16.gmra.mrb[0].mxu0 %v1852
      %v2457 = vpop.f32.mrb[0].mxu0
      %v2458 = vadd.f32 %v2083, %v2457
      %v2459 = vpop.f32.mrb[0].mxu0
      %v2460 = vpop.f32.mrb[0].mxu0
      %v2461 = vadd.f32 %v2083, %v2460
      %v2462 = vpop.f32.mrb[0].mxu0
      %2463 = vmatprep.mubr.bf16.mxu0 %v1920
      %2464 = vmatmul.mubr.bf16.gmra.mrb[0].mxu0 %v1856
      %v2465 = vpop.f32.mrb[0].mxu0
      %v2466 = vadd.f32 %v2083, %v2465
      %v2467 = vpop.f32.mrb[0].mxu0
      %v2468 = vpop.f32.mrb[0].mxu0
      %v2469 = vadd.f32 %v2083, %v2468
      %v2470 = vpop.f32.mrb[0].mxu0
      %2471 = vmatprep.mubr.bf16.mxu0 %v1924
      %2472 = vmatmul.mubr.bf16.gmra.mrb[0].mxu0 %v1860
      %v2473 = vpop.f32.mrb[0].mxu0
      %v2474 = vadd.f32 %v2083, %v2473
      %v2475 = vpop.f32.mrb[0].mxu0
      %v2476 = vpop.f32.mrb[0].mxu0
      %v2477 = vadd.f32 %v2083, %v2476
      %v2478 = vpop.f32.mrb[0].mxu0
      %2479 = vmatprep.mubr.bf16.mxu0 %v1928
      %2480 = vmatmul.mubr.bf16.gmra.mrb[0].mxu0 %v1864
      %v2481 = vpop.f32.mrb[0].mxu0
      %v2482 = vadd.f32 %v2083, %v2481
      %v2483 = vpop.f32.mrb[0].mxu0
      %v2484 = vpop.f32.mrb[0].mxu0
      %v2485 = vadd.f32 %v2083, %v2484
      %v2486 = vpop.f32.mrb[0].mxu0
      %2487 = vmatprep.mubr.bf16.mxu0 %v1932
      %2488 = vmatmul.mubr.bf16.gmra.mrb[0].mxu0 %v1868
      %v2489 = vpop.f32.mrb[0].mxu0
      %v2490 = vadd.f32 %v2083, %v2489
      %v2491 = vpop.f32.mrb[0].mxu0
      %v2492 = vpop.f32.mrb[0].mxu0
      %v2493 = vadd.f32 %v2083, %v2492
      %v2494 = vpop.f32.mrb[0].mxu0
      %2495 = vdwg.mxu0
      %2496 = vmatprep.subr.bf16.mxu0 0
      %2497 = vmatpush1.bf16.msra.mxu0 %v2245
      %2498 = vmatprep.subr.bf16.mxu0 0
      %2499 = vmatpush1.bf16.msra.mxu0 %v2246
      %2500 = vmatprep.subr.bf16.mxu0 0
      %2501 = vmatpush1.bf16.msra.mxu0 %v2247
      %2502 = vmatprep.subr.bf16.mxu0 0
      %2503 = vmatpush1.bf16.msra.mxu0 %v2248
      %2504 = vmatprep.subr.bf16.mxu0 0
      %2505 = vmatpush1.bf16.msra.mxu0 %v2249
      %2506 = vmatprep.subr.bf16.mxu0 0
      %2507 = vmatpush1.bf16.msra.mxu0 %v2250
      %2508 = vmatprep.subr.bf16.mxu0 0
      %2509 = vmatpush1.bf16.msra.mxu0 %v2251
      %2510 = vmatprep.subr.bf16.mxu0 0
      %2511 = vmatpush1.bf16.msra.mxu0 %v2252
      %2512 = vmatprep.subr.bf16.mxu0 0
      %2513 = vmatpush1.bf16.msra.mxu0 %v2253
      %2514 = vmatprep.subr.bf16.mxu0 0
      %2515 = vmatpush1.bf16.msra.mxu0 %v2254
      %2516 = vmatprep.subr.bf16.mxu0 0
      %2517 = vmatpush1.bf16.msra.mxu0 %v2255
      %2518 = vmatprep.subr.bf16.mxu0 0
      %2519 = vmatpush1.bf16.msra.mxu0 %v2256
      %2520 = vmatprep.subr.bf16.mxu0 0
      %2521 = vmatpush1.bf16.msra.mxu0 %v2257
      %2522 = vmatprep.subr.bf16.mxu0 0
      %2523 = vmatpush1.bf16.msra.mxu0 %v2258
      %2524 = vmatprep.subr.bf16.mxu0 0
      %2525 = vmatpush1.bf16.msra.mxu0 %v2259
      %2526 = vmatprep.subr.bf16.mxu0 0
      %2527 = vmatpush1.bf16.msra.mxu0 %v2260
      %2528 = vmatprep.mubr.bf16.mxu0 %v1816
      %2529 = vmatmul.mubr.bf16.gmra.mrb[0].mxu0 %v1936
      %v2530 = vpop.f32.mrb[0].mxu0
      %v2531 = vadd.f32 %v2370, %v2530
      %v2532 = vpop.f32.mrb[0].mxu0
      %v2533 = vpop.f32.mrb[0].mxu0
      %v2534 = vadd.f32 %v2373, %v2533
      %v2535 = vpop.f32.mrb[0].mxu0
      %2536 = vmatprep.mubr.bf16.mxu0 %v1820
      %2537 = vmatmul.mubr.bf16.gmra.mrb[0].mxu0 %v1940
      %v2538 = vpop.f32.mrb[0].mxu0
      %v2539 = vadd.f32 %v2378, %v2538
      %v2540 = vpop.f32.mrb[0].mxu0
      %v2541 = vpop.f32.mrb[0].mxu0
      %v2542 = vadd.f32 %v2381, %v2541
      %v2543 = vpop.f32.mrb[0].mxu0
      %2544 = vmatprep.mubr.bf16.mxu0 %v1824
      %2545 = vmatmul.mubr.bf16.gmra.mrb[0].mxu0 %v1944
      %v2546 = vpop.f32.mrb[0].mxu0
      %v2547 = vadd.f32 %v2386, %v2546
      %v2548 = vpop.f32.mrb[0].mxu0
      %v2549 = vpop.f32.mrb[0].mxu0
      %v2550 = vadd.f32 %v2389, %v2549
      %v2551 = vpop.f32.mrb[0].mxu0
      %2552 = vmatprep.mubr.bf16.mxu0 %v1828
      %2553 = vmatmul.mubr.bf16.gmra.mrb[0].mxu0 %v1948
      %v2554 = vpop.f32.mrb[0].mxu0
      %v2555 = vadd.f32 %v2394, %v2554
      %v2556 = vpop.f32.mrb[0].mxu0
      %v2557 = vpop.f32.mrb[0].mxu0
      %v2558 = vadd.f32 %v2397, %v2557
      %v2559 = vpop.f32.mrb[0].mxu0
      %2560 = vmatprep.mubr.bf16.mxu0 %v1832
      %2561 = vmatmul.mubr.bf16.gmra.mrb[0].mxu0 %v1952
      %v2562 = vpop.f32.mrb[0].mxu0
      %v2563 = vadd.f32 %v2402, %v2562
      %v2564 = vpop.f32.mrb[0].mxu0
      %v2565 = vpop.f32.mrb[0].mxu0
      %v2566 = vadd.f32 %v2405, %v2565
      %v2567 = vpop.f32.mrb[0].mxu0
      %2568 = vmatprep.mubr.bf16.mxu0 %v1836
      %2569 = vmatmul.mubr.bf16.gmra.mrb[0].mxu0 %v1956
      %v2570 = vpop.f32.mrb[0].mxu0
      %v2571 = vadd.f32 %v2410, %v2570
      %v2572 = vpop.f32.mrb[0].mxu0
      %v2573 = vpop.f32.mrb[0].mxu0
      %v2574 = vadd.f32 %v2413, %v2573
      %v2575 = vpop.f32.mrb[0].mxu0
      %2576 = vmatprep.mubr.bf16.mxu0 %v1840
      %2577 = vmatmul.mubr.bf16.gmra.mrb[0].mxu0 %v1960
      %v2578 = vpop.f32.mrb[0].mxu0
      %v2579 = vadd.f32 %v2418, %v2578
      %v2580 = vpop.f32.mrb[0].mxu0
      %v2581 = vpop.f32.mrb[0].mxu0
      %v2582 = vadd.f32 %v2421, %v2581
      %v2583 = vpop.f32.mrb[0].mxu0
      %2584 = vmatprep.mubr.bf16.mxu0 %v1844
      %2585 = vmatmul.mubr.bf16.gmra.mrb[0].mxu0 %v1964
      %v2586 = vpop.f32.mrb[0].mxu0
      %v2587 = vadd.f32 %v2426, %v2586
      %v2588 = vpop.f32.mrb[0].mxu0
      %v2589 = vpop.f32.mrb[0].mxu0
      %v2590 = vadd.f32 %v2429, %v2589
      %v2591 = vpop.f32.mrb[0].mxu0
      %2592 = vmatprep.mubr.bf16.mxu0 %v1848
      %2593 = vmatmul.mubr.bf16.gmra.mrb[0].mxu0 %v1968
      %v2594 = vpop.f32.mrb[0].mxu0
      %v2595 = vadd.f32 %v2434, %v2594
      %v2596 = vpop.f32.mrb[0].mxu0
      %v2597 = vpop.f32.mrb[0].mxu0
      %v2598 = vadd.f32 %v2437, %v2597
      %v2599 = vpop.f32.mrb[0].mxu0
      %2600 = vmatprep.mubr.bf16.mxu0 %v1852
      %2601 = vmatmul.mubr.bf16.gmra.mrb[0].mxu0 %v1972
      %v2602 = vpop.f32.mrb[0].mxu0
      %v2603 = vadd.f32 %v2442, %v2602
      %v2604 = vpop.f32.mrb[0].mxu0
      %v2605 = vpop.f32.mrb[0].mxu0
      %v2606 = vadd.f32 %v2445, %v2605
      %v2607 = vpop.f32.mrb[0].mxu0
      %2608 = vmatprep.mubr.bf16.mxu0 %v1856
      %2609 = vmatmul.mubr.bf16.gmra.mrb[0].mxu0 %v1976
      %v2610 = vpop.f32.mrb[0].mxu0
      %v2611 = vadd.f32 %v2450, %v2610
      %v2612 = vpop.f32.mrb[0].mxu0
      %v2613 = vpop.f32.mrb[0].mxu0
      %v2614 = vadd.f32 %v2453, %v2613
      %v2615 = vpop.f32.mrb[0].mxu0
      %2616 = vmatprep.mubr.bf16.mxu0 %v1860
      %2617 = vmatmul.mubr.bf16.gmra.mrb[0].mxu0 %v1980
      %v2618 = vpop.f32.mrb[0].mxu0
      %v2619 = vadd.f32 %v2458, %v2618
      %v2620 = vpop.f32.mrb[0].mxu0
      %v2621 = vpop.f32.mrb[0].mxu0
      %v2622 = vadd.f32 %v2461, %v2621
      %v2623 = vpop.f32.mrb[0].mxu0
      %2624 = vmatprep.mubr.bf16.mxu0 %v1864
      %2625 = vmatmul.mubr.bf16.gmra.mrb[0].mxu0 %v1984
      %v2626 = vpop.f32.mrb[0].mxu0
      %v2627 = vadd.f32 %v2466, %v2626
      %v2628 = vpop.f32.mrb[0].mxu0
      %v2629 = vpop.f32.mrb[0].mxu0
      %v2630 = vadd.f32 %v2469, %v2629
      %v2631 = vpop.f32.mrb[0].mxu0
      %2632 = vmatprep.mubr.bf16.mxu0 %v1868
      %2633 = vmatmul.mubr.bf16.gmra.mrb[0].mxu0 %v1988
      %v2634 = vpop.f32.mrb[0].mxu0
      %v2635 = vadd.f32 %v2474, %v2634
      %v2636 = vpop.f32.mrb[0].mxu0
      %v2637 = vpop.f32.mrb[0].mxu0
      %v2638 = vadd.f32 %v2477, %v2637
      %v2639 = vpop.f32.mrb[0].mxu0
      %2640 = vmatprep.mubr.bf16.mxu0 %v2000
      %2641 = vmatmul.mubr.bf16.gmra.mrb[0].mxu0 %v1992
      %v2642 = vpop.f32.mrb[0].mxu0
      %v2643 = vadd.f32 %v2482, %v2642
      %v2644 = vpop.f32.mrb[0].mxu0
      %v2645 = vpop.f32.mrb[0].mxu0
      %v2646 = vadd.f32 %v2485, %v2645
      %v2647 = vpop.f32.mrb[0].mxu0
      %2648 = vmatprep.mubr.bf16.mxu0 %v2004
      %2649 = vmatmul.mubr.bf16.gmra.mrb[0].mxu0 %v1996
      %v2650 = vpop.f32.mrb[0].mxu0
      %v2651 = vadd.f32 %v2490, %v2650
      %v2652 = vpop.f32.mrb[0].mxu0
      %v2653 = vpop.f32.mrb[0].mxu0
      %v2654 = vadd.f32 %v2493, %v2653
      %v2655 = vpop.f32.mrb[0].mxu0
      %2656 = vdwg.mxu0
      %2657 = vmatprep.subr.bf16.mxu0 0
      %2658 = vmatpush1.bf16.msra.mxu0 %v2261
      %2659 = vmatprep.subr.bf16.mxu0 0
      %2660 = vmatpush1.bf16.msra.mxu0 %v2262
      %2661 = vmatprep.subr.bf16.mxu0 0
      %2662 = vmatpush1.bf16.msra.mxu0 %v2263
      %2663 = vmatprep.subr.bf16.mxu0 0
      %2664 = vmatpush1.bf16.msra.mxu0 %v2264
      %2665 = vmatprep.subr.bf16.mxu0 0
      %2666 = vmatpush1.bf16.msra.mxu0 0
      %2667 = vmatprep.subr.bf16.mxu0 0
      %2668 = vmatpush1.bf16.msra.mxu0 0
      %2669 = vmatprep.subr.bf16.mxu0 0
      %2670 = vmatpush1.bf16.msra.mxu0 0
      %2671 = vmatprep.subr.bf16.mxu0 0
      %2672 = vmatpush1.bf16.msra.mxu0 0
      %2673 = vmatprep.subr.bf16.mxu0 0
      %2674 = vmatpush1.bf16.msra.mxu0 0
      %2675 = vmatprep.subr.bf16.mxu0 0
      %2676 = vmatpush1.bf16.msra.mxu0 0
      %2677 = vmatprep.subr.bf16.mxu0 0
      %2678 = vmatpush1.bf16.msra.mxu0 0
      %2679 = vmatprep.subr.bf16.mxu0 0
      %2680 = vmatpush1.bf16.msra.mxu0 0
      %2681 = vmatprep.subr.bf16.mxu0 0
      %2682 = vmatpush1.bf16.msra.mxu0 0
      %2683 = vmatprep.subr.bf16.mxu0 0
      %2684 = vmatpush1.bf16.msra.mxu0 0
      %2685 = vmatprep.subr.bf16.mxu0 0
      %2686 = vmatpush1.bf16.msra.mxu0 0
      %2687 = vmatprep.subr.bf16.mxu0 0
      %2688 = vmatpush1.bf16.msra.mxu0 0
      %2689 = vmatprep.mubr.bf16.mxu0 0
      %2690 = vmatmul.mubr.bf16.gmra.mrb[0].mxu0 %v2301
      %v2691 = vpop.f32.mrb[0].mxu0
      %v2692 = vadd.f32 %v2531, %v2691
      %v2693 = vpop.f32.mrb[0].mxu0
      %v2694 = vpop.f32.mrb[0].mxu0
      %v2695 = vadd.f32 %v2534, %v2694
      %v2696 = vpop.f32.mrb[0].mxu0
      %2697 = vmatprep.mubr.bf16.mxu0 0
      %2698 = vmatmul.mubr.bf16.gmra.mrb[0].mxu0 %v2303
      %v2699 = vpop.f32.mrb[0].mxu0
      %v2700 = vadd.f32 %v2539, %v2699
      %v2701 = vpop.f32.mrb[0].mxu0
      %v2702 = vpop.f32.mrb[0].mxu0
      %v2703 = vadd.f32 %v2542, %v2702
      %v2704 = vpop.f32.mrb[0].mxu0
      %2705 = vmatprep.mubr.bf16.mxu0 0
      %2706 = vmatmul.mubr.bf16.gmra.mrb[0].mxu0 %v2305
      %v2707 = vpop.f32.mrb[0].mxu0
      %v2708 = vadd.f32 %v2547, %v2707
      %v2709 = vpop.f32.mrb[0].mxu0
      %v2710 = vpop.f32.mrb[0].mxu0
      %v2711 = vadd.f32 %v2550, %v2710
      %v2712 = vpop.f32.mrb[0].mxu0
      %2713 = vmatprep.mubr.bf16.mxu0 0
      %2714 = vmatmul.mubr.bf16.gmra.mrb[0].mxu0 %v2307
      %v2715 = vpop.f32.mrb[0].mxu0
      %v2716 = vadd.f32 %v2555, %v2715
      %v2717 = vpop.f32.mrb[0].mxu0
      %v2718 = vpop.f32.mrb[0].mxu0
      %v2719 = vadd.f32 %v2558, %v2718
      %v2720 = vpop.f32.mrb[0].mxu0
      %2721 = vmatprep.mubr.bf16.mxu0 0
      %2722 = vmatmul.mubr.bf16.gmra.mrb[0].mxu0 %v2309
      %v2723 = vpop.f32.mrb[0].mxu0
      %v2724 = vadd.f32 %v2563, %v2723
      %v2725 = vpop.f32.mrb[0].mxu0
      %v2726 = vpop.f32.mrb[0].mxu0
      %v2727 = vadd.f32 %v2566, %v2726
      %v2728 = vpop.f32.mrb[0].mxu0
      %2729 = vmatprep.mubr.bf16.mxu0 0
      %2730 = vmatmul.mubr.bf16.gmra.mrb[0].mxu0 %v2311
      %v2731 = vpop.f32.mrb[0].mxu0
      %v2732 = vadd.f32 %v2571, %v2731
      %v2733 = vpop.f32.mrb[0].mxu0
      %v2734 = vpop.f32.mrb[0].mxu0
      %v2735 = vadd.f32 %v2574, %v2734
      %v2736 = vpop.f32.mrb[0].mxu0
      %2737 = vmatprep.mubr.bf16.mxu0 0
      %2738 = vmatmul.mubr.bf16.gmra.mrb[0].mxu0 %v2313
      %v2739 = vpop.f32.mrb[0].mxu0
      %v2740 = vadd.f32 %v2579, %v2739
      %v2741 = vpop.f32.mrb[0].mxu0
      %v2742 = vpop.f32.mrb[0].mxu0
      %v2743 = vadd.f32 %v2582, %v2742
      %v2744 = vpop.f32.mrb[0].mxu0
      %2745 = vmatprep.mubr.bf16.mxu0 0
      %2746 = vmatmul.mubr.bf16.gmra.mrb[0].mxu0 %v2315
      %v2747 = vpop.f32.mrb[0].mxu0
      %v2748 = vadd.f32 %v2587, %v2747
      %v2749 = vpop.f32.mrb[0].mxu0
      %v2750 = vpop.f32.mrb[0].mxu0
      %v2751 = vadd.f32 %v2590, %v2750
      %v2752 = vpop.f32.mrb[0].mxu0
      %2753 = vmatprep.mubr.bf16.mxu0 0
      %2754 = vmatmul.mubr.bf16.gmra.mrb[0].mxu0 %v2317
      %v2755 = vpop.f32.mrb[0].mxu0
      %v2756 = vadd.f32 %v2595, %v2755
      %v2757 = vpop.f32.mrb[0].mxu0
      %v2758 = vpop.f32.mrb[0].mxu0
      %v2759 = vadd.f32 %v2598, %v2758
      %v2760 = vpop.f32.mrb[0].mxu0
      %2761 = vmatprep.mubr.bf16.mxu0 0
      %2762 = vmatmul.mubr.bf16.gmra.mrb[0].mxu0 %v2319
      %v2763 = vpop.f32.mrb[0].mxu0
      %v2764 = vadd.f32 %v2603, %v2763
      %v2765 = vpop.f32.mrb[0].mxu0
      %v2766 = vpop.f32.mrb[0].mxu0
      %v2767 = vadd.f32 %v2606, %v2766
      %v2768 = vpop.f32.mrb[0].mxu0
      %2769 = vmatprep.mubr.bf16.mxu0 0
      %2770 = vmatmul.mubr.bf16.gmra.mrb[0].mxu0 %v2321
      %v2771 = vpop.f32.mrb[0].mxu0
      %v2772 = vadd.f32 %v2611, %v2771
      %v2773 = vpop.f32.mrb[0].mxu0
      %v2774 = vpop.f32.mrb[0].mxu0
      %v2775 = vadd.f32 %v2614, %v2774
      %v2776 = vpop.f32.mrb[0].mxu0
      %2777 = vmatprep.mubr.bf16.mxu0 0
      %2778 = vmatmul.mubr.bf16.gmra.mrb[0].mxu0 %v2323
      %v2779 = vpop.f32.mrb[0].mxu0
      %v2780 = vadd.f32 %v2619, %v2779
      %v2781 = vpop.f32.mrb[0].mxu0
      %v2782 = vpop.f32.mrb[0].mxu0
      %v2783 = vadd.f32 %v2622, %v2782
      %v2784 = vpop.f32.mrb[0].mxu0
      %2785 = vmatprep.mubr.bf16.mxu0 0
      %2786 = vmatmul.mubr.bf16.gmra.mrb[0].mxu0 %v2325
      %v2787 = vpop.f32.mrb[0].mxu0
      %v2788 = vadd.f32 %v2627, %v2787
      %v2789 = vpop.f32.mrb[0].mxu0
      %v2790 = vpop.f32.mrb[0].mxu0
      %v2791 = vadd.f32 %v2630, %v2790
      %v2792 = vpop.f32.mrb[0].mxu0
      %2793 = vmatprep.mubr.bf16.mxu0 0
      %2794 = vmatmul.mubr.bf16.gmra.mrb[0].mxu0 %v2327
      %v2795 = vpop.f32.mrb[0].mxu0
      %v2796 = vadd.f32 %v2635, %v2795
      %v2797 = vpop.f32.mrb[0].mxu0
      %v2798 = vpop.f32.mrb[0].mxu0
      %v2799 = vadd.f32 %v2638, %v2798
      %v2800 = vpop.f32.mrb[0].mxu0
      %2801 = vmatprep.mubr.bf16.mxu0 0
      %2802 = vmatmul.mubr.bf16.gmra.mrb[0].mxu0 %v2330
      %v2803 = vpop.f32.mrb[0].mxu0
      %v2804 = vadd.f32 %v2643, %v2803
      %v2805 = vpop.f32.mrb[0].mxu0
      %v2806 = vpop.f32.mrb[0].mxu0
      %v2807 = vadd.f32 %v2646, %v2806
      %v2808 = vpop.f32.mrb[0].mxu0
      %2809 = vmatprep.mubr.bf16.mxu0 0
      %2810 = vmatmul.mubr.bf16.gmra.mrb[0].mxu0 %v2333
      %v2811 = vpop.f32.mrb[0].mxu0
      %v2812 = vadd.f32 %v2651, %v2811
      %v2813 = vpop.f32.mrb[0].mxu0
      %v2814 = vpop.f32.mrb[0].mxu0
      %v2815 = vadd.f32 %v2654, %v2814
      %v2816 = vpop.f32.mrb[0].mxu0
      %2817 = vdwg.mxu0
      %v2818 = vmax.f32 %v2692, 0.0
      %v2819 = vmax.f32 %v2695, 0.0
      %v2820 = vmax.f32 %v2700, 0.0
      %v2821 = vmax.f32 %v2703, 0.0
      %v2822 = vmax.f32 %v2708, 0.0
      %v2823 = vmax.f32 %v2711, 0.0
      %v2824 = vmax.f32 %v2716, 0.0
      %v2825 = vmax.f32 %v2719, 0.0
      %v2826 = vmax.f32 %v2724, 0.0
      %v2827 = vmax.f32 %v2727, 0.0
      %v2828 = vmax.f32 %v2732, 0.0
      %v2829 = vmax.f32 %v2735, 0.0
      %v2830 = vmax.f32 %v2740, 0.0
      %v2831 = vmax.f32 %v2743, 0.0
      %v2832 = vmax.f32 %v2748, 0.0
      %v2833 = vmax.f32 %v2751, 0.0
      %v2834 = vmax.f32 %v2756, 0.0
      %v2835 = vmax.f32 %v2759, 0.0
      %v2836 = vmax.f32 %v2764, 0.0
      %v2837 = vmax.f32 %v2767, 0.0
      %v2838 = vmax.f32 %v2772, 0.0
      %v2839 = vmax.f32 %v2775, 0.0
      %v2840 = vmax.f32 %v2780, 0.0
      %v2841 = vmax.f32 %v2783, 0.0
      %v2842 = vmax.f32 %v2788, 0.0
      %v2843 = vmax.f32 %v2791, 0.0
      %v2844 = vmax.f32 %v2796, 0.0
      %v2845 = vmax.f32 %v2799, 0.0
      %v2846 = vmax.f32 %v2804, 0.0
      %v2847 = vmax.f32 %v2807, 0.0
      %v2848 = vmax.f32 %v2812, 0.0
      %v2849 = vmax.f32 %v2815, 0.0
      %v2850 = vpack.c.bf16 %v2819, %v2818
      %v2851 = vpack.c.bf16 %v2821, %v2820
      %v2852 = vpack.c.bf16 %v2823, %v2822
      %v2853 = vpack.c.bf16 %v2825, %v2824
      %v2854 = vpack.c.bf16 %v2827, %v2826
      %v2855 = vpack.c.bf16 %v2829, %v2828
      %v2856 = vpack.c.bf16 %v2831, %v2830
      %v2857 = vpack.c.bf16 %v2833, %v2832
      %v2858 = vpack.c.bf16 %v2835, %v2834
      %v2859 = vpack.c.bf16 %v2837, %v2836
      %v2860 = vpack.c.bf16 %v2839, %v2838
      %v2861 = vpack.c.bf16 %v2841, %v2840
      %v2862 = vpack.c.bf16 %v2843, %v2842
      %v2863 = vpack.c.bf16 %v2845, %v2844
      %v2864 = vpack.c.bf16 %v2847, %v2846
      %v2865 = vpack.c.bf16 %v2849, %v2848
      %2866 = vst [vmem:[#allocation3] sm:$0xf] 0
      %2867 = vst [vmem:[#allocation3 + $0x4] sm:$0xf] 0
      %2868 = vst [vmem:[#allocation3 + $0x8] sm:$0x1] 0
      %s2869 = scalar_lea.vmem [#allocation3], 204
      %2870 = vst [vmem:[%s2869] sm:$0xf] 0
      %2871 = vst [vmem:[%s2869 + $0x4] sm:$0xf] 0
      %2872 = vst [vmem:[%s2869 + $0x8] sm:$0x1] 0
      %vm2873 = vcmask 1040384
      %vm2874 = vmand %vm2873, %vm290
      %v2875 = vld [vmem:[#allocation3] sm:$0x1]
      %v2876 = vsel %vm2874, 0, %v2875
      %2877 = vst [vmem:[#allocation3] sm:$0x1] %v2876
      %v2878 = vld [vmem:[#allocation3 + $0xc] sm:$0x1]
      %v2879 = vsel %vm2874, 0, %v2878
      %2880 = vst [vmem:[#allocation3 + $0xc] sm:$0x1] %v2879
      %v2881 = vld [vmem:[#allocation3 + $0x18] sm:$0x1]
      %v2882 = vsel %vm2874, 0, %v2881
      %2883 = vst [vmem:[#allocation3 + $0x18] sm:$0x1] %v2882
      %v2884 = vld [vmem:[#allocation3 + $0x24] sm:$0x1]
      %v2885 = vsel %vm2874, 0, %v2884
      %2886 = vst [vmem:[#allocation3 + $0x24] sm:$0x1] %v2885
      %v2887 = vld [vmem:[#allocation3 + $0x30] sm:$0x1]
      %v2888 = vsel %vm2874, 0, %v2887
      %2889 = vst [vmem:[#allocation3 + $0x30] sm:$0x1] %v2888
      %v2890 = vld [vmem:[#allocation3 + $0x3c] sm:$0x1]
      %v2891 = vsel %vm2874, 0, %v2890
      %2892 = vst [vmem:[#allocation3 + $0x3c] sm:$0x1] %v2891
      %v2893 = vld [vmem:[#allocation3 + $0x48] sm:$0x1]
      %v2894 = vsel %vm2874, 0, %v2893
      %2895 = vst [vmem:[#allocation3 + $0x48] sm:$0x1] %v2894
      %v2896 = vld [vmem:[#allocation3 + $0x54] sm:$0x1]
      %v2897 = vsel %vm2874, 0, %v2896
      %2898 = vst [vmem:[#allocation3 + $0x54] sm:$0x1] %v2897
      %v2899 = vld [vmem:[#allocation3 + $0x60] sm:$0x1]
      %v2900 = vsel %vm2874, 0, %v2899
      %2901 = vst [vmem:[#allocation3 + $0x60] sm:$0x1] %v2900
      %v2902 = vld [vmem:[#allocation3 + $0x6c] sm:$0x1]
      %v2903 = vsel %vm2874, 0, %v2902
      %2904 = vst [vmem:[#allocation3 + $0x6c] sm:$0x1] %v2903
      %v2905 = vld [vmem:[#allocation3 + $0x78] sm:$0x1]
      %v2906 = vsel %vm2874, 0, %v2905
      %2907 = vst [vmem:[#allocation3 + $0x78] sm:$0x1] %v2906
      %v2908 = vld [vmem:[#allocation3 + $0x84] sm:$0x1]
      %v2909 = vsel %vm2874, 0, %v2908
      %2910 = vst [vmem:[#allocation3 + $0x84] sm:$0x1] %v2909
      %v2911 = vld [vmem:[#allocation3 + $0x90] sm:$0x1]
      %v2912 = vsel %vm2874, 0, %v2911
      %2913 = vst [vmem:[#allocation3 + $0x90] sm:$0x1] %v2912
      %v2914 = vld [vmem:[#allocation3 + $0x9c] sm:$0x1]
      %v2915 = vsel %vm2874, 0, %v2914
      %2916 = vst [vmem:[#allocation3 + $0x9c] sm:$0x1] %v2915
      %v2917 = vld [vmem:[#allocation3 + $0xa8] sm:$0x1]
      %v2918 = vsel %vm2874, 0, %v2917
      %2919 = vst [vmem:[#allocation3 + $0xa8] sm:$0x1] %v2918
      %v2920 = vld [vmem:[#allocation3 + $0xb4] sm:$0x1]
      %v2921 = vsel %vm2874, 0, %v2920
      %2922 = vst [vmem:[#allocation3 + $0xb4] sm:$0x1] %v2921
      %v2923 = vld [vmem:[#allocation3 + $0xc0] sm:$0x1]
      %v2924 = vsel %vm2874, 0, %v2923
      %2925 = vst [vmem:[#allocation3 + $0xc0] sm:$0x1] %v2924
      %v2926 = vld [vmem:[#allocation3 + $0xcc] sm:$0x1]
      %v2927 = vsel %vm2874, 0, %v2926
      %2928 = vst [vmem:[#allocation3 + $0xcc] sm:$0x1] %v2927
      %vm2929 = vmand %vm2873, %vm346
      %v2930 = vld [vmem:[#allocation3 + $0x8] sm:$0x1]
      %v2931 = vsel %vm2929, 0, %v2930
      %2932 = vst [vmem:[#allocation3 + $0x8] sm:$0x1] %v2931
      %v2933 = vld [vmem:[#allocation3 + $0x14] sm:$0x1]
      %v2934 = vsel %vm2929, 0, %v2933
      %2935 = vst [vmem:[#allocation3 + $0x14] sm:$0x1] %v2934
      %v2936 = vld [vmem:[#allocation3 + $0x20] sm:$0x1]
      %v2937 = vsel %vm2929, 0, %v2936
      %2938 = vst [vmem:[#allocation3 + $0x20] sm:$0x1] %v2937
      %v2939 = vld [vmem:[#allocation3 + $0x2c] sm:$0x1]
      %v2940 = vsel %vm2929, 0, %v2939
      %2941 = vst [vmem:[#allocation3 + $0x2c] sm:$0x1] %v2940
      %v2942 = vld [vmem:[#allocation3 + $0x38] sm:$0x1]
      %v2943 = vsel %vm2929, 0, %v2942
      %2944 = vst [vmem:[#allocation3 + $0x38] sm:$0x1] %v2943
      %v2945 = vld [vmem:[#allocation3 + $0x44] sm:$0x1]
      %v2946 = vsel %vm2929, 0, %v2945
      %2947 = vst [vmem:[#allocation3 + $0x44] sm:$0x1] %v2946
      %v2948 = vld [vmem:[#allocation3 + $0x50] sm:$0x1]
      %v2949 = vsel %vm2929, 0, %v2948
      %2950 = vst [vmem:[#allocation3 + $0x50] sm:$0x1] %v2949
      %v2951 = vld [vmem:[#allocation3 + $0x5c] sm:$0x1]
      %v2952 = vsel %vm2929, 0, %v2951
      %2953 = vst [vmem:[#allocation3 + $0x5c] sm:$0x1] %v2952
      %v2954 = vld [vmem:[#allocation3 + $0x68] sm:$0x1]
      %v2955 = vsel %vm2929, 0, %v2954
      %2956 = vst [vmem:[#allocation3 + $0x68] sm:$0x1] %v2955
      %v2957 = vld [vmem:[#allocation3 + $0x74] sm:$0x1]
      %v2958 = vsel %vm2929, 0, %v2957
      %2959 = vst [vmem:[#allocation3 + $0x74] sm:$0x1] %v2958
      %v2960 = vld [vmem:[#allocation3 + $0x80] sm:$0x1]
      %v2961 = vsel %vm2929, 0, %v2960
      %2962 = vst [vmem:[#allocation3 + $0x80] sm:$0x1] %v2961
      %v2963 = vld [vmem:[#allocation3 + $0x8c] sm:$0x1]
      %v2964 = vsel %vm2929, 0, %v2963
      %2965 = vst [vmem:[#allocation3 + $0x8c] sm:$0x1] %v2964
      %v2966 = vld [vmem:[#allocation3 + $0x98] sm:$0x1]
      %v2967 = vsel %vm2929, 0, %v2966
      %2968 = vst [vmem:[#allocation3 + $0x98] sm:$0x1] %v2967
      %v2969 = vld [vmem:[#allocation3 + $0xa4] sm:$0x1]
      %v2970 = vsel %vm2929, 0, %v2969
      %2971 = vst [vmem:[#allocation3 + $0xa4] sm:$0x1] %v2970
      %v2972 = vld [vmem:[#allocation3 + $0xb0] sm:$0x1]
      %v2973 = vsel %vm2929, 0, %v2972
      %2974 = vst [vmem:[#allocation3 + $0xb0] sm:$0x1] %v2973
      %v2975 = vld [vmem:[#allocation3 + $0xbc] sm:$0x1]
      %v2976 = vsel %vm2929, 0, %v2975
      %2977 = vst [vmem:[#allocation3 + $0xbc] sm:$0x1] %v2976
      %v2978 = vld [vmem:[#allocation3 + $0xc8] sm:$0x1]
      %v2979 = vsel %vm2929, 0, %v2978
      %2980 = vst [vmem:[#allocation3 + $0xc8] sm:$0x1] %v2979
      %v2981 = vld [vmem:[#allocation3 + $0xd4] sm:$0x1]
      %v2982 = vsel %vm2929, 0, %v2981
      %2983 = vst [vmem:[#allocation3 + $0xd4] sm:$0x1] %v2982
      %v3000 = vunpack.c.l.b16 %v2850
      %v3001 = vunpack.c.h.b16 %v2850
      %v3002 = vunpack.c.l.b16 %v2851
      %v3003 = vunpack.c.h.b16 %v2851
      %v3004 = vunpack.c.l.b16 %v2852
      %v3005 = vunpack.c.h.b16 %v2852
      %v3006 = vunpack.c.l.b16 %v2853
      %v3007 = vunpack.c.h.b16 %v2853
      %v3008 = vunpack.c.l.b16 %v2854
      %v3009 = vunpack.c.h.b16 %v2854
      %v3010 = vunpack.c.l.b16 %v2855
      %v3011 = vunpack.c.h.b16 %v2855
      %v3012 = vunpack.c.l.b16 %v2856
      %v3013 = vunpack.c.h.b16 %v2856
      %v3014 = vunpack.c.l.b16 %v2857
      %v3015 = vunpack.c.h.b16 %v2857
      %v3016 = vunpack.c.l.b16 %v2858
      %v3017 = vunpack.c.h.b16 %v2858
      %v3018 = vunpack.c.l.b16 %v2859
      %v3019 = vunpack.c.h.b16 %v2859
      %v3020 = vunpack.c.l.b16 %v2860
      %v3021 = vunpack.c.h.b16 %v2860
      %v3022 = vunpack.c.l.b16 %v2861
      %v3023 = vunpack.c.h.b16 %v2861
      %v3024 = vunpack.c.l.b16 %v2862
      %v3025 = vunpack.c.h.b16 %v2862
      %v3026 = vunpack.c.l.b16 %v2863
      %v3027 = vunpack.c.h.b16 %v2863
      %v3028 = vunpack.c.l.b16 %v2864
      %v3029 = vunpack.c.h.b16 %v2864
      %v3030 = vunpack.c.l.b16 %v2865
      %v3031 = vunpack.c.h.b16 %v2865
      %v3032 = vpack.c.b16 %v3000, %v3000
      %v3033 = vpack.c.b16 %v3001, %v3001
      %v3034 = vpack.c.b16 %v3002, %v3002
      %v3035 = vpack.c.b16 %v3003, %v3003
      %v3036 = vpack.c.b16 %v3004, %v3004
      %v3037 = vpack.c.b16 %v3005, %v3005
      %v3038 = vpack.c.b16 %v3006, %v3006
      %v3039 = vpack.c.b16 %v3007, %v3007
      %v3040 = vpack.c.b16 %v3008, %v3008
      %v3041 = vpack.c.b16 %v3009, %v3009
      %v3042 = vpack.c.b16 %v3010, %v3010
      %v3043 = vpack.c.b16 %v3011, %v3011
      %v3044 = vpack.c.b16 %v3012, %v3012
      %v3045 = vpack.c.b16 %v3013, %v3013
      %v3046 = vpack.c.b16 %v3014, %v3014
      %v3047 = vpack.c.b16 %v3015, %v3015
      %v3048 = vpack.c.b16 %v3016, %v3016
      %v3049 = vpack.c.b16 %v3017, %v3017
      %v3050 = vpack.c.b16 %v3018, %v3018
      %v3051 = vpack.c.b16 %v3019, %v3019
      %v3052 = vpack.c.b16 %v3020, %v3020
      %v3053 = vpack.c.b16 %v3021, %v3021
      %v3054 = vpack.c.b16 %v3022, %v3022
      %v3055 = vpack.c.b16 %v3023, %v3023
      %v3056 = vpack.c.b16 %v3024, %v3024
      %v3057 = vpack.c.b16 %v3025, %v3025
      %v3058 = vpack.c.b16 %v3026, %v3026
      %v3059 = vpack.c.b16 %v3027, %v3027
      %v3060 = vpack.c.b16 %v3028, %v3028
      %v3061 = vpack.c.b16 %v3029, %v3029
      %v3062 = vpack.c.b16 %v3030, %v3030
      %v3063 = vpack.c.b16 %v3031, %v3031
      %v3065 = vshrl.u32 %v3032, 16
      %v3067 = vrot.slane %v3065, 7
      %v3068 = vshll.u32 %v3032, 16
      %v3070 = vor.u32 %v3067, %v3068
      %v3071 = vrot.slane %v3067, 4
      %v3073 = vshrl.u32 %v3033, 16
      %v3075 = vrot.slane %v3073, 7
      %v3076 = vshll.u32 %v3033, 16
      %v3078 = vor.u32 %v3075, %v3076
      %v3079 = vsel %vm435, %v3071, %v3078
      %v3080 = vrot.slane %v3075, 4
      %v3082 = vshrl.u32 %v3034, 16
      %v3084 = vrot.slane %v3082, 7
      %v3085 = vshll.u32 %v3034, 16
      %v3087 = vor.u32 %v3084, %v3085
      %v3088 = vrot.slane %v3084, 4
      %v3090 = vshrl.u32 %v3035, 16
      %v3092 = vrot.slane %v3090, 7
      %v3093 = vshll.u32 %v3035, 16
      %v3095 = vor.u32 %v3092, %v3093
      %v3096 = vsel %vm435, %v3088, %v3095
      %v3097 = vrot.slane %v3092, 4
      %v3099 = vshrl.u32 %v3036, 16
      %v3101 = vrot.slane %v3099, 7
      %v3102 = vshll.u32 %v3036, 16
      %v3104 = vor.u32 %v3101, %v3102
      %v3105 = vrot.slane %v3101, 4
      %v3107 = vshrl.u32 %v3037, 16
      %v3109 = vrot.slane %v3107, 7
      %v3110 = vshll.u32 %v3037, 16
      %v3112 = vor.u32 %v3109, %v3110
      %v3113 = vsel %vm435, %v3105, %v3112
      %v3114 = vrot.slane %v3109, 4
      %v3116 = vshrl.u32 %v3038, 16
      %v3118 = vrot.slane %v3116, 7
      %v3119 = vshll.u32 %v3038, 16
      %v3121 = vor.u32 %v3118, %v3119
      %v3122 = vrot.slane %v3118, 4
      %v3124 = vshrl.u32 %v3039, 16
      %v3126 = vrot.slane %v3124, 7
      %v3127 = vshll.u32 %v3039, 16
      %v3129 = vor.u32 %v3126, %v3127
      %v3130 = vsel %vm435, %v3122, %v3129
      %v3131 = vrot.slane %v3126, 4
      %v3133 = vshrl.u32 %v3040, 16
      %v3135 = vrot.slane %v3133, 7
      %v3136 = vshll.u32 %v3040, 16
      %v3138 = vor.u32 %v3135, %v3136
      %v3139 = vrot.slane %v3135, 4
      %v3141 = vshrl.u32 %v3041, 16
      %v3143 = vrot.slane %v3141, 7
      %v3144 = vshll.u32 %v3041, 16
      %v3146 = vor.u32 %v3143, %v3144
      %v3147 = vsel %vm435, %v3139, %v3146
      %v3148 = vrot.slane %v3143, 4
      %v3150 = vshrl.u32 %v3042, 16
      %v3152 = vrot.slane %v3150, 7
      %v3153 = vshll.u32 %v3042, 16
      %v3155 = vor.u32 %v3152, %v3153
      %v3156 = vrot.slane %v3152, 4
      %v3158 = vshrl.u32 %v3043, 16
      %v3160 = vrot.slane %v3158, 7
      %v3161 = vshll.u32 %v3043, 16
      %v3163 = vor.u32 %v3160, %v3161
      %v3164 = vsel %vm435, %v3156, %v3163
      %v3165 = vrot.slane %v3160, 4
      %v3167 = vshrl.u32 %v3044, 16
      %v3169 = vrot.slane %v3167, 7
      %v3170 = vshll.u32 %v3044, 16
      %v3172 = vor.u32 %v3169, %v3170
      %v3173 = vrot.slane %v3169, 4
      %v3175 = vshrl.u32 %v3045, 16
      %v3177 = vrot.slane %v3175, 7
      %v3178 = vshll.u32 %v3045, 16
      %v3180 = vor.u32 %v3177, %v3178
      %v3181 = vsel %vm435, %v3173, %v3180
      %v3182 = vrot.slane %v3177, 4
      %v3184 = vshrl.u32 %v3046, 16
      %v3186 = vrot.slane %v3184, 7
      %v3187 = vshll.u32 %v3046, 16
      %v3189 = vor.u32 %v3186, %v3187
      %v3190 = vrot.slane %v3186, 4
      %v3192 = vshrl.u32 %v3047, 16
      %v3194 = vrot.slane %v3192, 7
      %v3195 = vshll.u32 %v3047, 16
      %v3197 = vor.u32 %v3194, %v3195
      %v3198 = vsel %vm435, %v3190, %v3197
      %v3199 = vrot.slane %v3194, 4
      %v3201 = vshrl.u32 %v3048, 16
      %v3203 = vrot.slane %v3201, 7
      %v3204 = vshll.u32 %v3048, 16
      %v3206 = vor.u32 %v3203, %v3204
      %v3207 = vrot.slane %v3203, 4
      %v3209 = vshrl.u32 %v3049, 16
      %v3211 = vrot.slane %v3209, 7
      %v3212 = vshll.u32 %v3049, 16
      %v3214 = vor.u32 %v3211, %v3212
      %v3215 = vsel %vm435, %v3207, %v3214
      %v3216 = vrot.slane %v3211, 4
      %v3218 = vshrl.u32 %v3050, 16
      %v3220 = vrot.slane %v3218, 7
      %v3221 = vshll.u32 %v3050, 16
      %v3223 = vor.u32 %v3220, %v3221
      %v3224 = vrot.slane %v3220, 4
      %v3226 = vshrl.u32 %v3051, 16
      %v3228 = vrot.slane %v3226, 7
      %v3229 = vshll.u32 %v3051, 16
      %v3231 = vor.u32 %v3228, %v3229
      %v3232 = vsel %vm435, %v3224, %v3231
      %v3233 = vrot.slane %v3228, 4
      %v3235 = vshrl.u32 %v3052, 16
      %v3237 = vrot.slane %v3235, 7
      %v3238 = vshll.u32 %v3052, 16
      %v3240 = vor.u32 %v3237, %v3238
      %v3241 = vrot.slane %v3237, 4
      %v3243 = vshrl.u32 %v3053, 16
      %v3245 = vrot.slane %v3243, 7
      %v3246 = vshll.u32 %v3053, 16
      %v3248 = vor.u32 %v3245, %v3246
      %v3249 = vsel %vm435, %v3241, %v3248
      %v3250 = vrot.slane %v3245, 4
      %v3252 = vshrl.u32 %v3054, 16
      %v3254 = vrot.slane %v3252, 7
      %v3255 = vshll.u32 %v3054, 16
      %v3257 = vor.u32 %v3254, %v3255
      %v3258 = vrot.slane %v3254, 4
      %v3260 = vshrl.u32 %v3055, 16
      %v3262 = vrot.slane %v3260, 7
      %v3263 = vshll.u32 %v3055, 16
      %v3265 = vor.u32 %v3262, %v3263
      %v3266 = vsel %vm435, %v3258, %v3265
      %v3267 = vrot.slane %v3262, 4
      %v3269 = vshrl.u32 %v3056, 16
      %v3271 = vrot.slane %v3269, 7
      %v3272 = vshll.u32 %v3056, 16
      %v3274 = vor.u32 %v3271, %v3272
      %v3275 = vrot.slane %v3271, 4
      %v3277 = vshrl.u32 %v3057, 16
      %v3279 = vrot.slane %v3277, 7
      %v3280 = vshll.u32 %v3057, 16
      %v3282 = vor.u32 %v3279, %v3280
      %v3283 = vsel %vm435, %v3275, %v3282
      %v3284 = vrot.slane %v3279, 4
      %v3286 = vshrl.u32 %v3058, 16
      %v3288 = vrot.slane %v3286, 7
      %v3289 = vshll.u32 %v3058, 16
      %v3291 = vor.u32 %v3288, %v3289
      %v3292 = vrot.slane %v3288, 4
      %v3294 = vshrl.u32 %v3059, 16
      %v3296 = vrot.slane %v3294, 7
      %v3297 = vshll.u32 %v3059, 16
      %v3299 = vor.u32 %v3296, %v3297
      %v3300 = vsel %vm435, %v3292, %v3299
      %v3301 = vrot.slane %v3296, 4
      %v3303 = vshrl.u32 %v3060, 16
      %v3305 = vrot.slane %v3303, 7
      %v3306 = vshll.u32 %v3060, 16
      %v3308 = vor.u32 %v3305, %v3306
      %v3309 = vrot.slane %v3305, 4
      %v3311 = vshrl.u32 %v3061, 16
      %v3313 = vrot.slane %v3311, 7
      %v3314 = vshll.u32 %v3061, 16
      %v3316 = vor.u32 %v3313, %v3314
      %v3317 = vsel %vm435, %v3309, %v3316
      %v3318 = vrot.slane %v3313, 4
      %v3320 = vshrl.u32 %v3062, 16
      %v3322 = vrot.slane %v3320, 7
      %v3323 = vshll.u32 %v3062, 16
      %v3325 = vor.u32 %v3322, %v3323
      %v3326 = vrot.slane %v3322, 4
      %v3328 = vshrl.u32 %v3063, 16
      %v3330 = vrot.slane %v3328, 7
      %v3331 = vshll.u32 %v3063, 16
      %v3333 = vor.u32 %v3330, %v3331
      %v3334 = vsel %vm435, %v3326, %v3333
      %v3335 = vrot.slane %v3330, 4
      %s3384 = scalar_lea.vmem [#allocation3], 12
      %vm3385 = vcmask 1043456
      %vm3386 = vmand %vm3385, %vm346
      %v3387 = vld [vmem:[%s3384] sm:$0xf]
      %v3388 = vsel %vm3386, %v3070, %v3387
      %3389 = vst [vmem:[%s3384] sm:$0xf] %v3388
      %3390 = vst [vmem:[%s3384 + $0x4] sm:$0xf] %v3079
      %v3391 = vld [vmem:[%s3384 + $0x8] sm:$0x1]
      %v3392 = vsel %vm2874, %v3080, %v3391
      %3393 = vst [vmem:[%s3384 + $0x8] sm:$0x1] %v3392
      %v3394 = vld [vmem:[%s3384 + $0xc] sm:$0xf]
      %v3395 = vsel %vm3386, %v3087, %v3394
      %3396 = vst [vmem:[%s3384 + $0xc] sm:$0xf] %v3395
      %3397 = vst [vmem:[%s3384 + $0x10] sm:$0xf] %v3096
      %v3398 = vld [vmem:[%s3384 + $0x14] sm:$0x1]
      %v3399 = vsel %vm2874, %v3097, %v3398
      %3400 = vst [vmem:[%s3384 + $0x14] sm:$0x1] %v3399
      %v3401 = vld [vmem:[%s3384 + $0x18] sm:$0xf]
      %v3402 = vsel %vm3386, %v3104, %v3401
      %3403 = vst [vmem:[%s3384 + $0x18] sm:$0xf] %v3402
      %3404 = vst [vmem:[%s3384 + $0x1c] sm:$0xf] %v3113
      %v3405 = vld [vmem:[%s3384 + $0x20] sm:$0x1]
      %v3406 = vsel %vm2874, %v3114, %v3405
      %3407 = vst [vmem:[%s3384 + $0x20] sm:$0x1] %v3406
      %v3408 = vld [vmem:[%s3384 + $0x24] sm:$0xf]
      %v3409 = vsel %vm3386, %v3121, %v3408
      %3410 = vst [vmem:[%s3384 + $0x24] sm:$0xf] %v3409
      %3411 = vst [vmem:[%s3384 + $0x28] sm:$0xf] %v3130
      %v3412 = vld [vmem:[%s3384 + $0x2c] sm:$0x1]
      %v3413 = vsel %vm2874, %v3131, %v3412
      %3414 = vst [vmem:[%s3384 + $0x2c] sm:$0x1] %v3413
      %v3415 = vld [vmem:[%s3384 + $0x30] sm:$0xf]
      %v3416 = vsel %vm3386, %v3138, %v3415
      %3417 = vst [vmem:[%s3384 + $0x30] sm:$0xf] %v3416
      %3418 = vst [vmem:[%s3384 + $0x34] sm:$0xf] %v3147
      %v3419 = vld [vmem:[%s3384 + $0x38] sm:$0x1]
      %v3420 = vsel %vm2874, %v3148, %v3419
      %3421 = vst [vmem:[%s3384 + $0x38] sm:$0x1] %v3420
      %v3422 = vld [vmem:[%s3384 + $0x3c] sm:$0xf]
      %v3423 = vsel %vm3386, %v3155, %v3422
      %3424 = vst [vmem:[%s3384 + $0x3c] sm:$0xf] %v3423
      %3425 = vst [vmem:[%s3384 + $0x40] sm:$0xf] %v3164
      %v3426 = vld [vmem:[%s3384 + $0x44] sm:$0x1]
      %v3427 = vsel %vm2874, %v3165, %v3426
      %3428 = vst [vmem:[%s3384 + $0x44] sm:$0x1] %v3427
      %v3429 = vld [vmem:[%s3384 + $0x48] sm:$0xf]
      %v3430 = vsel %vm3386, %v3172, %v3429
      %3431 = vst [vmem:[%s3384 + $0x48] sm:$0xf] %v3430
      %3432 = vst [vmem:[%s3384 + $0x4c] sm:$0xf] %v3181
      %v3433 = vld [vmem:[%s3384 + $0x50] sm:$0x1]
      %v3434 = vsel %vm2874, %v3182, %v3433
      %3435 = vst [vmem:[%s3384 + $0x50] sm:$0x1] %v3434
      %v3436 = vld [vmem:[%s3384 + $0x54] sm:$0xf]
      %v3437 = vsel %vm3386, %v3189, %v3436
      %3438 = vst [vmem:[%s3384 + $0x54] sm:$0xf] %v3437
      %3439 = vst [vmem:[%s3384 + $0x58] sm:$0xf] %v3198
      %v3440 = vld [vmem:[%s3384 + $0x5c] sm:$0x1]
      %v3441 = vsel %vm2874, %v3199, %v3440
      %3442 = vst [vmem:[%s3384 + $0x5c] sm:$0x1] %v3441
      %v3443 = vld [vmem:[%s3384 + $0x60] sm:$0xf]
      %v3444 = vsel %vm3386, %v3206, %v3443
      %3445 = vst [vmem:[%s3384 + $0x60] sm:$0xf] %v3444
      %3446 = vst [vmem:[%s3384 + $0x64] sm:$0xf] %v3215
      %v3447 = vld [vmem:[%s3384 + $0x68] sm:$0x1]
      %v3448 = vsel %vm2874, %v3216, %v3447
      %3449 = vst [vmem:[%s3384 + $0x68] sm:$0x1] %v3448
      %v3450 = vld [vmem:[%s3384 + $0x6c] sm:$0xf]
      %v3451 = vsel %vm3386, %v3223, %v3450
      %3452 = vst [vmem:[%s3384 + $0x6c] sm:$0xf] %v3451
      %3453 = vst [vmem:[%s3384 + $0x70] sm:$0xf] %v3232
      %v3454 = vld [vmem:[%s3384 + $0x74] sm:$0x1]
      %v3455 = vsel %vm2874, %v3233, %v3454
      %3456 = vst [vmem:[%s3384 + $0x74] sm:$0x1] %v3455
      %v3457 = vld [vmem:[%s3384 + $0x78] sm:$0xf]
      %v3458 = vsel %vm3386, %v3240, %v3457
      %3459 = vst [vmem:[%s3384 + $0x78] sm:$0xf] %v3458
      %3460 = vst [vmem:[%s3384 + $0x7c] sm:$0xf] %v3249
      %v3461 = vld [vmem:[%s3384 + $0x80] sm:$0x1]
      %v3462 = vsel %vm2874, %v3250, %v3461
      %3463 = vst [vmem:[%s3384 + $0x80] sm:$0x1] %v3462
      %v3464 = vld [vmem:[%s3384 + $0x84] sm:$0xf]
      %v3465 = vsel %vm3386, %v3257, %v3464
      %3466 = vst [vmem:[%s3384 + $0x84] sm:$0xf] %v3465
      %3467 = vst [vmem:[%s3384 + $0x88] sm:$0xf] %v3266
      %v3468 = vld [vmem:[%s3384 + $0x8c] sm:$0x1]
      %v3469 = vsel %vm2874, %v3267, %v3468
      %3470 = vst [vmem:[%s3384 + $0x8c] sm:$0x1] %v3469
      %v3471 = vld [vmem:[%s3384 + $0x90] sm:$0xf]
      %v3472 = vsel %vm3386, %v3274, %v3471
      %3473 = vst [vmem:[%s3384 + $0x90] sm:$0xf] %v3472
      %3474 = vst [vmem:[%s3384 + $0x94] sm:$0xf] %v3283
      %v3475 = vld [vmem:[%s3384 + $0x98] sm:$0x1]
      %v3476 = vsel %vm2874, %v3284, %v3475
      %3477 = vst [vmem:[%s3384 + $0x98] sm:$0x1] %v3476
      %v3478 = vld [vmem:[%s3384 + $0x9c] sm:$0xf]
      %v3479 = vsel %vm3386, %v3291, %v3478
      %3480 = vst [vmem:[%s3384 + $0x9c] sm:$0xf] %v3479
      %3481 = vst [vmem:[%s3384 + $0xa0] sm:$0xf] %v3300
      %v3482 = vld [vmem:[%s3384 + $0xa4] sm:$0x1]
      %v3483 = vsel %vm2874, %v3301, %v3482
      %3484 = vst [vmem:[%s3384 + $0xa4] sm:$0x1] %v3483
      %v3485 = vld [vmem:[%s3384 + $0xa8] sm:$0xf]
      %v3486 = vsel %vm3386, %v3308, %v3485
      %3487 = vst [vmem:[%s3384 + $0xa8] sm:$0xf] %v3486
      %3488 = vst [vmem:[%s3384 + $0xac] sm:$0xf] %v3317
      %v3489 = vld [vmem:[%s3384 + $0xb0] sm:$0x1]
      %v3490 = vsel %vm2874, %v3318, %v3489
      %3491 = vst [vmem:[%s3384 + $0xb0] sm:$0x1] %v3490
      %v3492 = vld [vmem:[%s3384 + $0xb4] sm:$0xf]
      %v3493 = vsel %vm3386, %v3325, %v3492
      %3494 = vst [vmem:[%s3384 + $0xb4] sm:$0xf] %v3493
      %3495 = vst [vmem:[%s3384 + $0xb8] sm:$0xf] %v3334
      %v3496 = vld [vmem:[%s3384 + $0xbc] sm:$0x1]
      %v3497 = vsel %vm2874, %v3335, %v3496
      %3498 = vst [vmem:[%s3384 + $0xbc] sm:$0x1] %v3497
      %v3499 = vld [vmem:[#allocation3] sm:$0xf]
      %v3500 = vld [vmem:[#allocation3 + $0x4] sm:$0xf]
      %v3501 = vld [vmem:[#allocation3 + $0x8] sm:$0x1]
      %v3502 = vld [vmem:[#allocation3 + $0xc] sm:$0xf]
      %v3503 = vld [vmem:[#allocation3 + $0x10] sm:$0xf]
      %v3504 = vld [vmem:[#allocation3 + $0x14] sm:$0x1]
      %v3505 = vld [vmem:[#allocation3 + $0x18] sm:$0xf]
      %v3506 = vld [vmem:[#allocation3 + $0x1c] sm:$0xf]
      %v3507 = vld [vmem:[#allocation3 + $0x20] sm:$0x1]
      %v3508 = vld [vmem:[#allocation3 + $0x24] sm:$0xf]
      %v3509 = vld [vmem:[#allocation3 + $0x28] sm:$0xf]
      %v3510 = vld [vmem:[#allocation3 + $0x2c] sm:$0x1]
      %v3511 = vld [vmem:[#allocation3 + $0x30] sm:$0xf]
      %v3512 = vld [vmem:[#allocation3 + $0x34] sm:$0xf]
      %v3513 = vld [vmem:[#allocation3 + $0x38] sm:$0x1]
      %v3514 = vld [vmem:[#allocation3 + $0x3c] sm:$0xf]
      %v3515 = vld [vmem:[#allocation3 + $0x40] sm:$0xf]
      %v3516 = vld [vmem:[#allocation3 + $0x44] sm:$0x1]
      %v3517 = vld [vmem:[#allocation3 + $0x48] sm:$0xf]
      %v3518 = vld [vmem:[#allocation3 + $0x4c] sm:$0xf]
      %v3519 = vld [vmem:[#allocation3 + $0x50] sm:$0x1]
      %v3520 = vld [vmem:[#allocation3 + $0x54] sm:$0xf]
      %v3521 = vld [vmem:[#allocation3 + $0x58] sm:$0xf]
      %v3522 = vld [vmem:[#allocation3 + $0x5c] sm:$0x1]
      %v3523 = vld [vmem:[#allocation3 + $0x60] sm:$0xf]
      %v3524 = vld [vmem:[#allocation3 + $0x64] sm:$0xf]
      %v3525 = vld [vmem:[#allocation3 + $0x68] sm:$0x1]
      %v3526 = vld [vmem:[#allocation3 + $0x6c] sm:$0xf]
      %v3527 = vld [vmem:[#allocation3 + $0x70] sm:$0xf]
      %v3528 = vld [vmem:[#allocation3 + $0x74] sm:$0x1]
      %v3529 = vld [vmem:[#allocation3 + $0x78] sm:$0xf]
      %v3530 = vld [vmem:[#allocation3 + $0x7c] sm:$0xf]
      %v3531 = vld [vmem:[#allocation3 + $0x80] sm:$0x1]
      %v3532 = vld [vmem:[#allocation3 + $0x84] sm:$0xf]
      %v3533 = vld [vmem:[#allocation3 + $0x88] sm:$0xf]
      %v3534 = vld [vmem:[#allocation3 + $0x8c] sm:$0x1]
      %v3535 = vld [vmem:[#allocation3 + $0x90] sm:$0xf]
      %v3536 = vld [vmem:[#allocation3 + $0x94] sm:$0xf]
      %v3537 = vld [vmem:[#allocation3 + $0x98] sm:$0x1]
      %v3538 = vld [vmem:[#allocation3 + $0x9c] sm:$0xf]
      %v3539 = vld [vmem:[#allocation3 + $0xa0] sm:$0xf]
      %v3540 = vld [vmem:[#allocation3 + $0xa4] sm:$0x1]
      %v3541 = vld [vmem:[#allocation3 + $0xa8] sm:$0xf]
      %v3542 = vld [vmem:[#allocation3 + $0xac] sm:$0xf]
      %v3543 = vld [vmem:[#allocation3 + $0xb0] sm:$0x1]
      %v3544 = vld [vmem:[#allocation3 + $0xb4] sm:$0xf]
      %v3545 = vld [vmem:[#allocation3 + $0xb8] sm:$0xf]
      %v3546 = vld [vmem:[#allocation3 + $0xbc] sm:$0x1]
      %v3547 = vld [vmem:[#allocation3 + $0xc0] sm:$0xf]
      %v3548 = vld [vmem:[#allocation3 + $0xc4] sm:$0xf]
      %v3549 = vld [vmem:[#allocation3 + $0xc8] sm:$0x1]
      %v3550 = vld [vmem:[#allocation3 + $0xcc] sm:$0xf]
      %v3551 = vld [vmem:[#allocation3 + $0xd0] sm:$0xf]
      %v3552 = vld [vmem:[#allocation3 + $0xd4] sm:$0x1]
      %v3554 = vshrl.u32 %v3499, 16
      %v3556 = vrot.slane %v3554, 4
      %v3557 = vshll.u32 %v3499, 16
      %v3559 = vrot.slane %v3557, 5
      %v3560 = vor.u32 %v3556, %v3559
      %v3561 = vrot.slane %v3560, 4
      %v3563 = vshll.u32 %v3500, 16
      %v3565 = vrot.slane %v3563, 5
      %v3566 = vsel %vm927, %v3561, %v3565
      %v3567 = vshrl.u32 %v3500, 16
      %v3569 = vrot.slane %v3567, 4
      %v3570 = vor.u32 %v3569, %v3565
      %v3571 = vrot.slane %v3570, 4
      %v3573 = vshll.u32 %v3501, 16
      %v3575 = vrot.slane %v3573, 5
      %v3576 = vsel %vm927, %v3571, %v3575
      %v3578 = vshrl.u32 %v3502, 16
      %v3580 = vrot.slane %v3578, 4
      %v3581 = vshll.u32 %v3502, 16
      %v3583 = vrot.slane %v3581, 5
      %v3584 = vor.u32 %v3580, %v3583
      %v3585 = vrot.slane %v3584, 4
      %v3587 = vshll.u32 %v3503, 16
      %v3589 = vrot.slane %v3587, 5
      %v3590 = vsel %vm927, %v3585, %v3589
      %v3591 = vshrl.u32 %v3503, 16
      %v3593 = vrot.slane %v3591, 4
      %v3594 = vor.u32 %v3593, %v3589
      %v3595 = vrot.slane %v3594, 4
      %v3597 = vshll.u32 %v3504, 16
      %v3599 = vrot.slane %v3597, 5
      %v3600 = vsel %vm927, %v3595, %v3599
      %v3602 = vshrl.u32 %v3505, 16
      %v3604 = vrot.slane %v3602, 4
      %v3605 = vshll.u32 %v3505, 16
      %v3607 = vrot.slane %v3605, 5
      %v3608 = vor.u32 %v3604, %v3607
      %v3609 = vrot.slane %v3608, 4
      %v3611 = vshll.u32 %v3506, 16
      %v3613 = vrot.slane %v3611, 5
      %v3614 = vsel %vm927, %v3609, %v3613
      %v3615 = vshrl.u32 %v3506, 16
      %v3617 = vrot.slane %v3615, 4
      %v3618 = vor.u32 %v3617, %v3613
      %v3619 = vrot.slane %v3618, 4
      %v3621 = vshll.u32 %v3507, 16
      %v3623 = vrot.slane %v3621, 5
      %v3624 = vsel %vm927, %v3619, %v3623
      %v3626 = vshrl.u32 %v3508, 16
      %v3628 = vrot.slane %v3626, 4
      %v3629 = vshll.u32 %v3508, 16
      %v3631 = vrot.slane %v3629, 5
      %v3632 = vor.u32 %v3628, %v3631
      %v3633 = vrot.slane %v3632, 4
      %v3635 = vshll.u32 %v3509, 16
      %v3637 = vrot.slane %v3635, 5
      %v3638 = vsel %vm927, %v3633, %v3637
      %v3639 = vshrl.u32 %v3509, 16
      %v3641 = vrot.slane %v3639, 4
      %v3642 = vor.u32 %v3641, %v3637
      %v3643 = vrot.slane %v3642, 4
      %v3645 = vshll.u32 %v3510, 16
      %v3647 = vrot.slane %v3645, 5
      %v3648 = vsel %vm927, %v3643, %v3647
      %v3650 = vshrl.u32 %v3511, 16
      %v3652 = vrot.slane %v3650, 4
      %v3653 = vshll.u32 %v3511, 16
      %v3655 = vrot.slane %v3653, 5
      %v3656 = vor.u32 %v3652, %v3655
      %v3657 = vrot.slane %v3656, 4
      %v3659 = vshll.u32 %v3512, 16
      %v3661 = vrot.slane %v3659, 5
      %v3662 = vsel %vm927, %v3657, %v3661
      %v3663 = vshrl.u32 %v3512, 16
      %v3665 = vrot.slane %v3663, 4
      %v3666 = vor.u32 %v3665, %v3661
      %v3667 = vrot.slane %v3666, 4
      %v3669 = vshll.u32 %v3513, 16
      %v3671 = vrot.slane %v3669, 5
      %v3672 = vsel %vm927, %v3667, %v3671
      %v3674 = vshrl.u32 %v3514, 16
      %v3676 = vrot.slane %v3674, 4
      %v3677 = vshll.u32 %v3514, 16
      %v3679 = vrot.slane %v3677, 5
      %v3680 = vor.u32 %v3676, %v3679
      %v3681 = vrot.slane %v3680, 4
      %v3683 = vshll.u32 %v3515, 16
      %v3685 = vrot.slane %v3683, 5
      %v3686 = vsel %vm927, %v3681, %v3685
      %v3687 = vshrl.u32 %v3515, 16
      %v3689 = vrot.slane %v3687, 4
      %v3690 = vor.u32 %v3689, %v3685
      %v3691 = vrot.slane %v3690, 4
      %v3693 = vshll.u32 %v3516, 16
      %v3695 = vrot.slane %v3693, 5
      %v3696 = vsel %vm927, %v3691, %v3695
      %v3698 = vshrl.u32 %v3517, 16
      %v3700 = vrot.slane %v3698, 4
      %v3701 = vshll.u32 %v3517, 16
      %v3703 = vrot.slane %v3701, 5
      %v3704 = vor.u32 %v3700, %v3703
      %v3705 = vrot.slane %v3704, 4
      %v3707 = vshll.u32 %v3518, 16
      %v3709 = vrot.slane %v3707, 5
      %v3710 = vsel %vm927, %v3705, %v3709
      %v3711 = vshrl.u32 %v3518, 16
      %v3713 = vrot.slane %v3711, 4
      %v3714 = vor.u32 %v3713, %v3709
      %v3715 = vrot.slane %v3714, 4
      %v3717 = vshll.u32 %v3519, 16
      %v3719 = vrot.slane %v3717, 5
      %v3720 = vsel %vm927, %v3715, %v3719
      %v3722 = vshrl.u32 %v3520, 16
      %v3724 = vrot.slane %v3722, 4
      %v3725 = vshll.u32 %v3520, 16
      %v3727 = vrot.slane %v3725, 5
      %v3728 = vor.u32 %v3724, %v3727
      %v3729 = vrot.slane %v3728, 4
      %v3731 = vshll.u32 %v3521, 16
      %v3733 = vrot.slane %v3731, 5
      %v3734 = vsel %vm927, %v3729, %v3733
      %v3735 = vshrl.u32 %v3521, 16
      %v3737 = vrot.slane %v3735, 4
      %v3738 = vor.u32 %v3737, %v3733
      %v3739 = vrot.slane %v3738, 4
      %v3741 = vshll.u32 %v3522, 16
      %v3743 = vrot.slane %v3741, 5
      %v3744 = vsel %vm927, %v3739, %v3743
      %v3746 = vshrl.u32 %v3523, 16
      %v3748 = vrot.slane %v3746, 4
      %v3749 = vshll.u32 %v3523, 16
      %v3751 = vrot.slane %v3749, 5
      %v3752 = vor.u32 %v3748, %v3751
      %v3753 = vrot.slane %v3752, 4
      %v3755 = vshll.u32 %v3524, 16
      %v3757 = vrot.slane %v3755, 5
      %v3758 = vsel %vm927, %v3753, %v3757
      %v3759 = vshrl.u32 %v3524, 16
      %v3761 = vrot.slane %v3759, 4
      %v3762 = vor.u32 %v3761, %v3757
      %v3763 = vrot.slane %v3762, 4
      %v3765 = vshll.u32 %v3525, 16
      %v3767 = vrot.slane %v3765, 5
      %v3768 = vsel %vm927, %v3763, %v3767
      %v3770 = vshrl.u32 %v3526, 16
      %v3772 = vrot.slane %v3770, 4
      %v3773 = vshll.u32 %v3526, 16
      %v3775 = vrot.slane %v3773, 5
      %v3776 = vor.u32 %v3772, %v3775
      %v3777 = vrot.slane %v3776, 4
      %v3779 = vshll.u32 %v3527, 16
      %v3781 = vrot.slane %v3779, 5
      %v3782 = vsel %vm927, %v3777, %v3781
      %v3783 = vshrl.u32 %v3527, 16
      %v3785 = vrot.slane %v3783, 4
      %v3786 = vor.u32 %v3785, %v3781
      %v3787 = vrot.slane %v3786, 4
      %v3789 = vshll.u32 %v3528, 16
      %v3791 = vrot.slane %v3789, 5
      %v3792 = vsel %vm927, %v3787, %v3791
      %v3794 = vshrl.u32 %v3529, 16
      %v3796 = vrot.slane %v3794, 4
      %v3797 = vshll.u32 %v3529, 16
      %v3799 = vrot.slane %v3797, 5
      %v3800 = vor.u32 %v3796, %v3799
      %v3801 = vrot.slane %v3800, 4
      %v3803 = vshll.u32 %v3530, 16
      %v3805 = vrot.slane %v3803, 5
      %v3806 = vsel %vm927, %v3801, %v3805
      %v3807 = vshrl.u32 %v3530, 16
      %v3809 = vrot.slane %v3807, 4
      %v3810 = vor.u32 %v3809, %v3805
      %v3811 = vrot.slane %v3810, 4
      %v3813 = vshll.u32 %v3531, 16
      %v3815 = vrot.slane %v3813, 5
      %v3816 = vsel %vm927, %v3811, %v3815
      %v3818 = vshrl.u32 %v3532, 16
      %v3820 = vrot.slane %v3818, 4
      %v3821 = vshll.u32 %v3532, 16
      %v3823 = vrot.slane %v3821, 5
      %v3824 = vor.u32 %v3820, %v3823
      %v3825 = vrot.slane %v3824, 4
      %v3827 = vshll.u32 %v3533, 16
      %v3829 = vrot.slane %v3827, 5
      %v3830 = vsel %vm927, %v3825, %v3829
      %v3831 = vshrl.u32 %v3533, 16
      %v3833 = vrot.slane %v3831, 4
      %v3834 = vor.u32 %v3833, %v3829
      %v3835 = vrot.slane %v3834, 4
      %v3837 = vshll.u32 %v3534, 16
      %v3839 = vrot.slane %v3837, 5
      %v3840 = vsel %vm927, %v3835, %v3839
      %v3842 = vshrl.u32 %v3535, 16
      %v3844 = vrot.slane %v3842, 4
      %v3845 = vshll.u32 %v3535, 16
      %v3847 = vrot.slane %v3845, 5
      %v3848 = vor.u32 %v3844, %v3847
      %v3849 = vrot.slane %v3848, 4
      %v3851 = vshll.u32 %v3536, 16
      %v3853 = vrot.slane %v3851, 5
      %v3854 = vsel %vm927, %v3849, %v3853
      %v3855 = vshrl.u32 %v3536, 16
      %v3857 = vrot.slane %v3855, 4
      %v3858 = vor.u32 %v3857, %v3853
      %v3859 = vrot.slane %v3858, 4
      %v3861 = vshll.u32 %v3537, 16
      %v3863 = vrot.slane %v3861, 5
      %v3864 = vsel %vm927, %v3859, %v3863
      %v3866 = vshrl.u32 %v3538, 16
      %v3868 = vrot.slane %v3866, 4
      %v3869 = vshll.u32 %v3538, 16
      %v3871 = vrot.slane %v3869, 5
      %v3872 = vor.u32 %v3868, %v3871
      %v3873 = vrot.slane %v3872, 4
      %v3875 = vshll.u32 %v3539, 16
      %v3877 = vrot.slane %v3875, 5
      %v3878 = vsel %vm927, %v3873, %v3877
      %v3879 = vshrl.u32 %v3539, 16
      %v3881 = vrot.slane %v3879, 4
      %v3882 = vor.u32 %v3881, %v3877
      %v3883 = vrot.slane %v3882, 4
      %v3885 = vshll.u32 %v3540, 16
      %v3887 = vrot.slane %v3885, 5
      %v3888 = vsel %vm927, %v3883, %v3887
      %v3890 = vshrl.u32 %v3541, 16
      %v3892 = vrot.slane %v3890, 4
      %v3893 = vshll.u32 %v3541, 16
      %v3895 = vrot.slane %v3893, 5
      %v3896 = vor.u32 %v3892, %v3895
      %v3897 = vrot.slane %v3896, 4
      %v3899 = vshll.u32 %v3542, 16
      %v3901 = vrot.slane %v3899, 5
      %v3902 = vsel %vm927, %v3897, %v3901
      %v3903 = vshrl.u32 %v3542, 16
      %v3905 = vrot.slane %v3903, 4
      %v3906 = vor.u32 %v3905, %v3901
      %v3907 = vrot.slane %v3906, 4
      %v3909 = vshll.u32 %v3543, 16
      %v3911 = vrot.slane %v3909, 5
      %v3912 = vsel %vm927, %v3907, %v3911
      %v3914 = vshrl.u32 %v3544, 16
      %v3916 = vrot.slane %v3914, 4
      %v3917 = vshll.u32 %v3544, 16
      %v3919 = vrot.slane %v3917, 5
      %v3920 = vor.u32 %v3916, %v3919
      %v3921 = vrot.slane %v3920, 4
      %v3923 = vshll.u32 %v3545, 16
      %v3925 = vrot.slane %v3923, 5
      %v3926 = vsel %vm927, %v3921, %v3925
      %v3927 = vshrl.u32 %v3545, 16
      %v3929 = vrot.slane %v3927, 4
      %v3930 = vor.u32 %v3929, %v3925
      %v3931 = vrot.slane %v3930, 4
      %v3933 = vshll.u32 %v3546, 16
      %v3935 = vrot.slane %v3933, 5
      %v3936 = vsel %vm927, %v3931, %v3935
      %v3985 = vrot.slane %v3499, 5
      %v3986 = vrot.slane %v3985, 4
      %v3987 = vrot.slane %v3500, 5
      %v3988 = vsel %vm1362, %v3986, %v3987
      %v3989 = vrot.slane %v3987, 4
      %v3990 = vrot.slane %v3501, 5
      %v3991 = vsel %vm1362, %v3989, %v3990
      %v3992 = vrot.slane %v3502, 5
      %v3993 = vrot.slane %v3992, 4
      %v3994 = vrot.slane %v3503, 5
      %v3995 = vsel %vm1362, %v3993, %v3994
      %v3996 = vrot.slane %v3994, 4
      %v3997 = vrot.slane %v3504, 5
      %v3998 = vsel %vm1362, %v3996, %v3997
      %v3999 = vrot.slane %v3505, 5
      %v4000 = vrot.slane %v3999, 4
      %v4001 = vrot.slane %v3506, 5
      %v4002 = vsel %vm1362, %v4000, %v4001
      %v4003 = vrot.slane %v4001, 4
      %v4004 = vrot.slane %v3507, 5
      %v4005 = vsel %vm1362, %v4003, %v4004
      %v4006 = vrot.slane %v3508, 5
      %v4007 = vrot.slane %v4006, 4
      %v4008 = vrot.slane %v3509, 5
      %v4009 = vsel %vm1362, %v4007, %v4008
      %v4010 = vrot.slane %v4008, 4
      %v4011 = vrot.slane %v3510, 5
      %v4012 = vsel %vm1362, %v4010, %v4011
      %v4013 = vrot.slane %v3511, 5
      %v4014 = vrot.slane %v4013, 4
      %v4015 = vrot.slane %v3512, 5
      %v4016 = vsel %vm1362, %v4014, %v4015
      %v4017 = vrot.slane %v4015, 4
      %v4018 = vrot.slane %v3513, 5
      %v4019 = vsel %vm1362, %v4017, %v4018
      %v4020 = vrot.slane %v3514, 5
      %v4021 = vrot.slane %v4020, 4
      %v4022 = vrot.slane %v3515, 5
      %v4023 = vsel %vm1362, %v4021, %v4022
      %v4024 = vrot.slane %v4022, 4
      %v4025 = vrot.slane %v3516, 5
      %v4026 = vsel %vm1362, %v4024, %v4025
      %v4027 = vrot.slane %v3517, 5
      %v4028 = vrot.slane %v4027, 4
      %v4029 = vrot.slane %v3518, 5
      %v4030 = vsel %vm1362, %v4028, %v4029
      %v4031 = vrot.slane %v4029, 4
      %v4032 = vrot.slane %v3519, 5
      %v4033 = vsel %vm1362, %v4031, %v4032
      %v4034 = vrot.slane %v3520, 5
      %v4035 = vrot.slane %v4034, 4
      %v4036 = vrot.slane %v3521, 5
      %v4037 = vsel %vm1362, %v4035, %v4036
      %v4038 = vrot.slane %v4036, 4
      %v4039 = vrot.slane %v3522, 5
      %v4040 = vsel %vm1362, %v4038, %v4039
      %v4041 = vrot.slane %v3523, 5
      %v4042 = vrot.slane %v4041, 4
      %v4043 = vrot.slane %v3524, 5
      %v4044 = vsel %vm1362, %v4042, %v4043
      %v4045 = vrot.slane %v4043, 4
      %v4046 = vrot.slane %v3525, 5
      %v4047 = vsel %vm1362, %v4045, %v4046
      %v4048 = vrot.slane %v3526, 5
      %v4049 = vrot.slane %v4048, 4
      %v4050 = vrot.slane %v3527, 5
      %v4051 = vsel %vm1362, %v4049, %v4050
      %v4052 = vrot.slane %v4050, 4
      %v4053 = vrot.slane %v3528, 5
      %v4054 = vsel %vm1362, %v4052, %v4053
      %v4055 = vrot.slane %v3529, 5
      %v4056 = vrot.slane %v4055, 4
      %v4057 = vrot.slane %v3530, 5
      %v4058 = vsel %vm1362, %v4056, %v4057
      %v4059 = vrot.slane %v4057, 4
      %v4060 = vrot.slane %v3531, 5
      %v4061 = vsel %vm1362, %v4059, %v4060
      %v4062 = vrot.slane %v3532, 5
      %v4063 = vrot.slane %v4062, 4
      %v4064 = vrot.slane %v3533, 5
      %v4065 = vsel %vm1362, %v4063, %v4064
      %v4066 = vrot.slane %v4064, 4
      %v4067 = vrot.slane %v3534, 5
      %v4068 = vsel %vm1362, %v4066, %v4067
      %v4069 = vrot.slane %v3535, 5
      %v4070 = vrot.slane %v4069, 4
      %v4071 = vrot.slane %v3536, 5
      %v4072 = vsel %vm1362, %v4070, %v4071
      %v4073 = vrot.slane %v4071, 4
      %v4074 = vrot.slane %v3537, 5
      %v4075 = vsel %vm1362, %v4073, %v4074
      %v4076 = vrot.slane %v3538, 5
      %v4077 = vrot.slane %v4076, 4
      %v4078 = vrot.slane %v3539, 5
      %v4079 = vsel %vm1362, %v4077, %v4078
      %v4080 = vrot.slane %v4078, 4
      %v4081 = vrot.slane %v3540, 5
      %v4082 = vsel %vm1362, %v4080, %v4081
      %v4083 = vrot.slane %v3541, 5
      %v4084 = vrot.slane %v4083, 4
      %v4085 = vrot.slane %v3542, 5
      %v4086 = vsel %vm1362, %v4084, %v4085
      %v4087 = vrot.slane %v4085, 4
      %v4088 = vrot.slane %v3543, 5
      %v4089 = vsel %vm1362, %v4087, %v4088
      %v4090 = vrot.slane %v3544, 5
      %v4091 = vrot.slane %v4090, 4
      %v4092 = vrot.slane %v3545, 5
      %v4093 = vsel %vm1362, %v4091, %v4092
      %v4094 = vrot.slane %v4092, 4
      %v4095 = vrot.slane %v3546, 5
      %v4096 = vsel %vm1362, %v4094, %v4095
      %v4098 = vshrl.u32 %v3547, 16
      %v4100 = vrot.slane %v4098, 4
      %v4101 = vshll.u32 %v3547, 16
      %v4103 = vrot.slane %v4101, 5
      %v4104 = vor.u32 %v4100, %v4103
      %v4105 = vrot.slane %v4104, 4
      %v4107 = vshll.u32 %v3548, 16
      %v4109 = vrot.slane %v4107, 5
      %v4110 = vsel %vm927, %v4105, %v4109
      %v4111 = vshrl.u32 %v3548, 16
      %v4113 = vrot.slane %v4111, 4
      %v4114 = vor.u32 %v4113, %v4109
      %v4115 = vrot.slane %v4114, 4
      %v4117 = vshll.u32 %v3549, 16
      %v4119 = vrot.slane %v4117, 5
      %v4120 = vsel %vm927, %v4115, %v4119
      %v4124 = vrot.slane %v3547, 5
      %v4125 = vrot.slane %v4124, 4
      %v4126 = vrot.slane %v3548, 5
      %v4127 = vsel %vm1362, %v4125, %v4126
      %v4128 = vrot.slane %v4126, 4
      %v4129 = vrot.slane %v3549, 5
      %v4130 = vsel %vm1362, %v4128, %v4129
      %v4132 = vshrl.u32 %v3550, 16
      %v4134 = vrot.slane %v4132, 4
      %v4135 = vshll.u32 %v3550, 16
      %v4137 = vrot.slane %v4135, 5
      %v4138 = vor.u32 %v4134, %v4137
      %v4139 = vrot.slane %v4138, 4
      %v4141 = vshll.u32 %v3551, 16
      %v4143 = vrot.slane %v4141, 5
      %v4144 = vsel %vm927, %v4139, %v4143
      %v4145 = vshrl.u32 %v3551, 16
      %v4147 = vrot.slane %v4145, 4
      %v4148 = vor.u32 %v4147, %v4143
      %v4149 = vrot.slane %v4148, 4
      %v4151 = vshll.u32 %v3552, 16
      %v4153 = vrot.slane %v4151, 5
      %v4154 = vsel %vm927, %v4149, %v4153
      %v4158 = vrot.slane %v3550, 5
      %v4159 = vrot.slane %v4158, 4
      %v4160 = vrot.slane %v3551, 5
      %v4161 = vsel %vm1362, %v4159, %v4160
      %v4162 = vrot.slane %v4160, 4
      %v4163 = vrot.slane %v3552, 5
      %v4164 = vsel %vm1362, %v4162, %v4163
      %v4165 = vunpack.c.l.b16 %v3499
      %v4166 = vunpack.c.l.b16 %v3500
      %v4167 = vunpack.c.l.b16 %v3502
      %v4168 = vunpack.c.l.b16 %v3503
      %v4169 = vunpack.c.l.b16 %v3505
      %v4170 = vunpack.c.l.b16 %v3506
      %v4171 = vunpack.c.l.b16 %v3508
      %v4172 = vunpack.c.l.b16 %v3509
      %v4173 = vunpack.c.l.b16 %v3511
      %v4174 = vunpack.c.l.b16 %v3512
      %v4175 = vunpack.c.l.b16 %v3514
      %v4176 = vunpack.c.l.b16 %v3515
      %v4177 = vunpack.c.l.b16 %v3517
      %v4178 = vunpack.c.l.b16 %v3518
      %v4179 = vunpack.c.l.b16 %v3520
      %v4180 = vunpack.c.l.b16 %v3521
      %v4181 = vunpack.c.l.b16 %v3523
      %v4182 = vunpack.c.l.b16 %v3524
      %v4183 = vunpack.c.l.b16 %v3526
      %v4184 = vunpack.c.l.b16 %v3527
      %v4185 = vunpack.c.l.b16 %v3529
      %v4186 = vunpack.c.l.b16 %v3530
      %v4187 = vunpack.c.l.b16 %v3532
      %v4188 = vunpack.c.l.b16 %v3533
      %v4189 = vunpack.c.l.b16 %v3535
      %v4190 = vunpack.c.l.b16 %v3536
      %v4191 = vunpack.c.l.b16 %v3538
      %v4192 = vunpack.c.l.b16 %v3539
      %v4193 = vunpack.c.l.b16 %v3541
      %v4194 = vunpack.c.l.b16 %v3542
      %v4195 = vunpack.c.l.b16 %v3544
      %v4196 = vunpack.c.l.b16 %v3545
      %v4197 = vpack.c.b16 %v4166, %v4165
      %v4198 = vpack.c.b16 %v4168, %v4167
      %v4199 = vpack.c.b16 %v4170, %v4169
      %v4200 = vpack.c.b16 %v4172, %v4171
      %v4201 = vpack.c.b16 %v4174, %v4173
      %v4202 = vpack.c.b16 %v4176, %v4175
      %v4203 = vpack.c.b16 %v4178, %v4177
      %v4204 = vpack.c.b16 %v4180, %v4179
      %v4205 = vpack.c.b16 %v4182, %v4181
      %v4206 = vpack.c.b16 %v4184, %v4183
      %v4207 = vpack.c.b16 %v4186, %v4185
      %v4208 = vpack.c.b16 %v4188, %v4187
      %v4209 = vpack.c.b16 %v4190, %v4189
      %v4210 = vpack.c.b16 %v4192, %v4191
      %v4211 = vpack.c.b16 %v4194, %v4193
      %v4212 = vpack.c.b16 %v4196, %v4195
      %v4229 = vunpack.c.l.b16 %v3566
      %v4230 = vunpack.c.l.b16 %v3576
      %v4231 = vunpack.c.l.b16 %v3590
      %v4232 = vunpack.c.l.b16 %v3600
      %v4233 = vunpack.c.l.b16 %v3614
      %v4234 = vunpack.c.l.b16 %v3624
      %v4235 = vunpack.c.l.b16 %v3638
      %v4236 = vunpack.c.l.b16 %v3648
      %v4237 = vunpack.c.l.b16 %v3662
      %v4238 = vunpack.c.l.b16 %v3672
      %v4239 = vunpack.c.l.b16 %v3686
      %v4240 = vunpack.c.l.b16 %v3696
      %v4241 = vunpack.c.l.b16 %v3710
      %v4242 = vunpack.c.l.b16 %v3720
      %v4243 = vunpack.c.l.b16 %v3734
      %v4244 = vunpack.c.l.b16 %v3744
      %v4245 = vunpack.c.l.b16 %v3758
      %v4246 = vunpack.c.l.b16 %v3768
      %v4247 = vunpack.c.l.b16 %v3782
      %v4248 = vunpack.c.l.b16 %v3792
      %v4249 = vunpack.c.l.b16 %v3806
      %v4250 = vunpack.c.l.b16 %v3816
      %v4251 = vunpack.c.l.b16 %v3830
      %v4252 = vunpack.c.l.b16 %v3840
      %v4253 = vunpack.c.l.b16 %v3854
      %v4254 = vunpack.c.l.b16 %v3864
      %v4255 = vunpack.c.l.b16 %v3878
      %v4256 = vunpack.c.l.b16 %v3888
      %v4257 = vunpack.c.l.b16 %v3902
      %v4258 = vunpack.c.l.b16 %v3912
      %v4259 = vunpack.c.l.b16 %v3926
      %v4260 = vunpack.c.l.b16 %v3936
      %v4261 = vpack.c.b16 %v4230, %v4229
      %v4262 = vpack.c.b16 %v4232, %v4231
      %v4263 = vpack.c.b16 %v4234, %v4233
      %v4264 = vpack.c.b16 %v4236, %v4235
      %v4265 = vpack.c.b16 %v4238, %v4237
      %v4266 = vpack.c.b16 %v4240, %v4239
      %v4267 = vpack.c.b16 %v4242, %v4241
      %v4268 = vpack.c.b16 %v4244, %v4243
      %v4269 = vpack.c.b16 %v4246, %v4245
      %v4270 = vpack.c.b16 %v4248, %v4247
      %v4271 = vpack.c.b16 %v4250, %v4249
      %v4272 = vpack.c.b16 %v4252, %v4251
      %v4273 = vpack.c.b16 %v4254, %v4253
      %v4274 = vpack.c.b16 %v4256, %v4255
      %v4275 = vpack.c.b16 %v4258, %v4257
      %v4276 = vpack.c.b16 %v4260, %v4259
      %v4293 = vunpack.c.l.b16 %v3988
      %v4294 = vunpack.c.l.b16 %v3991
      %v4295 = vunpack.c.l.b16 %v3995
      %v4296 = vunpack.c.l.b16 %v3998
      %v4297 = vunpack.c.l.b16 %v4002
      %v4298 = vunpack.c.l.b16 %v4005
      %v4299 = vunpack.c.l.b16 %v4009
      %v4300 = vunpack.c.l.b16 %v4012
      %v4301 = vunpack.c.l.b16 %v4016
      %v4302 = vunpack.c.l.b16 %v4019
      %v4303 = vunpack.c.l.b16 %v4023
      %v4304 = vunpack.c.l.b16 %v4026
      %v4305 = vunpack.c.l.b16 %v4030
      %v4306 = vunpack.c.l.b16 %v4033
      %v4307 = vunpack.c.l.b16 %v4037
      %v4308 = vunpack.c.l.b16 %v4040
      %v4309 = vunpack.c.l.b16 %v4044
      %v4310 = vunpack.c.l.b16 %v4047
      %v4311 = vunpack.c.l.b16 %v4051
      %v4312 = vunpack.c.l.b16 %v4054
      %v4313 = vunpack.c.l.b16 %v4058
      %v4314 = vunpack.c.l.b16 %v4061
      %v4315 = vunpack.c.l.b16 %v4065
      %v4316 = vunpack.c.l.b16 %v4068
      %v4317 = vunpack.c.l.b16 %v4072
      %v4318 = vunpack.c.l.b16 %v4075
      %v4319 = vunpack.c.l.b16 %v4079
      %v4320 = vunpack.c.l.b16 %v4082
      %v4321 = vunpack.c.l.b16 %v4086
      %v4322 = vunpack.c.l.b16 %v4089
      %v4323 = vunpack.c.l.b16 %v4093
      %v4324 = vunpack.c.l.b16 %v4096
      %v4325 = vpack.c.b16 %v4294, %v4293
      %v4326 = vpack.c.b16 %v4296, %v4295
      %v4327 = vpack.c.b16 %v4298, %v4297
      %v4328 = vpack.c.b16 %v4300, %v4299
      %v4329 = vpack.c.b16 %v4302, %v4301
      %v4330 = vpack.c.b16 %v4304, %v4303
      %v4331 = vpack.c.b16 %v4306, %v4305
      %v4332 = vpack.c.b16 %v4308, %v4307
      %v4333 = vpack.c.b16 %v4310, %v4309
      %v4334 = vpack.c.b16 %v4312, %v4311
      %v4335 = vpack.c.b16 %v4314, %v4313
      %v4336 = vpack.c.b16 %v4316, %v4315
      %v4337 = vpack.c.b16 %v4318, %v4317
      %v4338 = vpack.c.b16 %v4320, %v4319
      %v4339 = vpack.c.b16 %v4322, %v4321
      %v4340 = vpack.c.b16 %v4324, %v4323
      %v4357 = vunpack.c.l.b16 %v3547
      %v4358 = vunpack.c.l.b16 %v3548
      %v4359 = vpack.c.b16 %v4358, %v4357
      %v4361 = vunpack.c.l.b16 %v4110
      %v4362 = vunpack.c.l.b16 %v4120
      %v4363 = vpack.c.b16 %v4362, %v4361
      %v4365 = vunpack.c.l.b16 %v4127
      %v4366 = vunpack.c.l.b16 %v4130
      %v4367 = vpack.c.b16 %v4366, %v4365
      %v4369 = vunpack.c.l.b16 %v3550
      %v4370 = vunpack.c.l.b16 %v3551
      %v4371 = vpack.c.b16 %v4370, %v4369
      %v4373 = vunpack.c.l.b16 %v4144
      %v4374 = vunpack.c.l.b16 %v4154
      %v4375 = vpack.c.b16 %v4374, %v4373
      %v4377 = vunpack.c.l.b16 %v4161
      %v4378 = vunpack.c.l.b16 %v4164
      %v4379 = vpack.c.b16 %v4378, %v4377
      %v4381 = vld [vmem:[%s3] sm:$0xf]
      %v4382 = vld [vmem:[%s3 + $0x4] sm:$0xf]
      %v4383 = vld [vmem:[%s3 + $0x8] sm:$0xf]
      %v4384 = vld [vmem:[%s3 + $0xc] sm:$0xf]
      %v4385 = vld [vmem:[%s3 + $0x10] sm:$0xf]
      %v4386 = vld [vmem:[%s3 + $0x14] sm:$0xf]
      %v4387 = vld [vmem:[%s3 + $0x18] sm:$0xf]
      %v4388 = vld [vmem:[%s3 + $0x1c] sm:$0xf]
      %v4389 = vld [vmem:[%s3 + $0x20] sm:$0xf]
      %v4390 = vld [vmem:[%s3 + $0x24] sm:$0xf]
      %v4391 = vld [vmem:[%s3 + $0x28] sm:$0xf]
      %v4392 = vld [vmem:[%s3 + $0x2c] sm:$0xf]
      %v4393 = vld [vmem:[%s3 + $0x30] sm:$0xf]
      %v4394 = vld [vmem:[%s3 + $0x34] sm:$0xf]
      %v4395 = vld [vmem:[%s3 + $0x38] sm:$0xf]
      %v4396 = vld [vmem:[%s3 + $0x3c] sm:$0xf]
      %v4397 = vld [vmem:[%s3 + $0x40] sm:$0xf]
      %v4398 = vld [vmem:[%s3 + $0x44] sm:$0xf]
      %v4399 = vld [vmem:[%s3 + $0x48] sm:$0xf]
      %v4400 = vld [vmem:[%s3 + $0x4c] sm:$0xf]
      %v4401 = vld [vmem:[%s3 + $0x50] sm:$0xf]
      %v4402 = vld [vmem:[%s3 + $0x54] sm:$0xf]
      %v4403 = vld [vmem:[%s3 + $0x58] sm:$0xf]
      %v4404 = vld [vmem:[%s3 + $0x5c] sm:$0xf]
      %v4405 = vld [vmem:[%s3 + $0x60] sm:$0xf]
      %v4406 = vld [vmem:[%s3 + $0x64] sm:$0xf]
      %v4407 = vld [vmem:[%s3 + $0x68] sm:$0xf]
      %v4408 = vld [vmem:[%s3 + $0x6c] sm:$0xf]
      %v4409 = vld [vmem:[%s3 + $0x70] sm:$0xf]
      %v4410 = vld [vmem:[%s3 + $0x74] sm:$0xf]
      %v4411 = vld [vmem:[%s3 + $0x78] sm:$0xf]
      %v4412 = vld [vmem:[%s3 + $0x7c] sm:$0xf]
      %v4413 = vld [vmem:[%s3 + $0x80] sm:$0xf]
      %v4414 = vld [vmem:[%s3 + $0x84] sm:$0xf]
      %v4415 = vld [vmem:[%s3 + $0x88] sm:$0xf]
      %v4416 = vld [vmem:[%s3 + $0x8c] sm:$0xf]
      %v4417 = vld [vmem:[%s3 + $0x90] sm:$0xf]
      %v4418 = vld [vmem:[%s3 + $0x94] sm:$0xf]
      %v4419 = vld [vmem:[%s3 + $0x98] sm:$0xf]
      %v4420 = vld [vmem:[%s3 + $0x9c] sm:$0xf]
      %v4421 = vld [vmem:[%s3 + $0xa0] sm:$0xf]
      %v4422 = vld [vmem:[%s3 + $0xa4] sm:$0xf]
      %v4423 = vld [vmem:[%s3 + $0xa8] sm:$0xf]
      %v4424 = vld [vmem:[%s3 + $0xac] sm:$0xf]
      %v4425 = vld [vmem:[%s3 + $0xb0] sm:$0xf]
      %v4426 = vld [vmem:[%s3 + $0xb4] sm:$0xf]
      %v4427 = vld [vmem:[%s3 + $0xb8] sm:$0xf]
      %v4428 = vld [vmem:[%s3 + $0xbc] sm:$0xf]
      %v4429 = vld [vmem:[%s3 + $0xc0] sm:$0xf]
      %v4430 = vld [vmem:[%s3 + $0xc4] sm:$0xf]
      %v4431 = vld [vmem:[%s3 + $0xc8] sm:$0xf]
      %v4432 = vld [vmem:[%s3 + $0xcc] sm:$0xf]
      %v4433 = vld [vmem:[%s3 + $0xd0] sm:$0xf]
      %v4434 = vld [vmem:[%s3 + $0xd4] sm:$0xf]
      %v4435 = vld [vmem:[%s3 + $0xd8] sm:$0xf]
      %v4436 = vld [vmem:[%s3 + $0xdc] sm:$0xf]
      %v4437 = vld [vmem:[%s3 + $0xe0] sm:$0xf]
      %v4438 = vld [vmem:[%s3 + $0xe4] sm:$0xf]
      %v4439 = vld [vmem:[%s3 + $0xe8] sm:$0xf]
      %v4440 = vld [vmem:[%s3 + $0xec] sm:$0xf]
      %v4441 = vld [vmem:[%s3 + $0xf0] sm:$0xf]
      %v4442 = vld [vmem:[%s3 + $0xf4] sm:$0xf]
      %v4443 = vld [vmem:[%s3 + $0xf8] sm:$0xf]
      %v4444 = vld [vmem:[%s3 + $0xfc] sm:$0xf]
      %v4445 = vld [vmem:[%s3 + $0x100] sm:$0xf]
      %v4446 = vld [vmem:[%s3 + $0x104] sm:$0xf]
      %v4447 = vld [vmem:[%s3 + $0x108] sm:$0xf]
      %v4448 = vld [vmem:[%s3 + $0x10c] sm:$0xf]
      %v4449 = vld [vmem:[%s3 + $0x110] sm:$0xf]
      %v4450 = vld [vmem:[%s3 + $0x114] sm:$0xf]
      %v4451 = vld [vmem:[%s3 + $0x118] sm:$0xf]
      %v4452 = vld [vmem:[%s3 + $0x11c] sm:$0xf]
      %v4453 = vld [vmem:[%s3 + $0x120] sm:$0xf]
      %v4454 = vld [vmem:[%s3 + $0x124] sm:$0xf]
      %v4455 = vld [vmem:[%s3 + $0x128] sm:$0xf]
      %v4456 = vld [vmem:[%s3 + $0x12c] sm:$0xf]
      %v4457 = vld [vmem:[%s3 + $0x130] sm:$0xf]
      %v4458 = vld [vmem:[%s3 + $0x134] sm:$0xf]
      %v4459 = vld [vmem:[%s3 + $0x138] sm:$0xf]
      %v4460 = vld [vmem:[%s3 + $0x13c] sm:$0xf]
      %v4461 = vld [vmem:[%s3 + $0x140] sm:$0xf]
      %v4462 = vld [vmem:[%s3 + $0x144] sm:$0xf]
      %v4463 = vld [vmem:[%s3 + $0x148] sm:$0xf]
      %v4464 = vld [vmem:[%s3 + $0x14c] sm:$0xf]
      %v4465 = vld [vmem:[%s3 + $0x150] sm:$0xf]
      %v4466 = vld [vmem:[%s3 + $0x154] sm:$0xf]
      %v4467 = vld [vmem:[%s3 + $0x158] sm:$0xf]
      %v4468 = vld [vmem:[%s3 + $0x15c] sm:$0xf]
      %v4469 = vld [vmem:[%s3 + $0x160] sm:$0xf]
      %v4470 = vld [vmem:[%s3 + $0x164] sm:$0xf]
      %v4471 = vld [vmem:[%s3 + $0x168] sm:$0xf]
      %v4472 = vld [vmem:[%s3 + $0x16c] sm:$0xf]
      %v4473 = vld [vmem:[%s3 + $0x170] sm:$0xf]
      %v4474 = vld [vmem:[%s3 + $0x174] sm:$0xf]
      %v4475 = vld [vmem:[%s3 + $0x178] sm:$0xf]
      %v4476 = vld [vmem:[%s3 + $0x17c] sm:$0xf]
      %v4477 = vld [vmem:[%s3 + $0x180] sm:$0xf]
      %v4478 = vld [vmem:[%s3 + $0x184] sm:$0xf]
      %v4479 = vld [vmem:[%s3 + $0x188] sm:$0xf]
      %v4480 = vld [vmem:[%s3 + $0x18c] sm:$0xf]
      %v4481 = vld [vmem:[%s3 + $0x190] sm:$0xf]
      %v4482 = vld [vmem:[%s3 + $0x194] sm:$0xf]
      %v4483 = vld [vmem:[%s3 + $0x198] sm:$0xf]
      %v4484 = vld [vmem:[%s3 + $0x19c] sm:$0xf]
      %v4485 = vld [vmem:[%s3 + $0x1a0] sm:$0xf]
      %v4486 = vld [vmem:[%s3 + $0x1a4] sm:$0xf]
      %v4487 = vld [vmem:[%s3 + $0x1a8] sm:$0xf]
      %v4488 = vld [vmem:[%s3 + $0x1ac] sm:$0xf]
      %v4489 = vld [vmem:[%s3 + $0x1b0] sm:$0xf]
      %v4490 = vld [vmem:[%s3 + $0x1b4] sm:$0xf]
      %v4491 = vld [vmem:[%s3 + $0x1b8] sm:$0xf]
      %v4492 = vld [vmem:[%s3 + $0x1bc] sm:$0xf]
      %v4493 = vld [vmem:[%s3 + $0x1c0] sm:$0xf]
      %v4494 = vld [vmem:[%s3 + $0x1c4] sm:$0xf]
      %v4495 = vld [vmem:[%s3 + $0x1c8] sm:$0xf]
      %v4496 = vld [vmem:[%s3 + $0x1cc] sm:$0xf]
      %v4497 = vld [vmem:[%s3 + $0x1d0] sm:$0xf]
      %v4498 = vld [vmem:[%s3 + $0x1d4] sm:$0xf]
      %v4499 = vld [vmem:[%s3 + $0x1d8] sm:$0xf]
      %v4500 = vld [vmem:[%s3 + $0x1dc] sm:$0xf]
      %v4501 = vld [vmem:[%s3 + $0x1e0] sm:$0xf]
      %v4502 = vld [vmem:[%s3 + $0x1e4] sm:$0xf]
      %v4503 = vld [vmem:[%s3 + $0x1e8] sm:$0xf]
      %v4504 = vld [vmem:[%s3 + $0x1ec] sm:$0xf]
      %v4505 = vld [vmem:[%s3 + $0x1f0] sm:$0xf]
      %v4506 = vld [vmem:[%s3 + $0x1f4] sm:$0xf]
      %v4507 = vld [vmem:[%s3 + $0x1f8] sm:$0xf]
      %v4508 = vld [vmem:[%s3 + $0x1fc] sm:$0xf]
      %v4509 = vld [vmem:[%s3 + $0x200] sm:$0xf]
      %v4510 = vld [vmem:[%s3 + $0x204] sm:$0xf]
      %v4511 = vld [vmem:[%s3 + $0x208] sm:$0xf]
      %v4512 = vld [vmem:[%s3 + $0x20c] sm:$0xf]
      %v4513 = vld [vmem:[%s3 + $0x210] sm:$0xf]
      %v4514 = vld [vmem:[%s3 + $0x214] sm:$0xf]
      %v4515 = vld [vmem:[%s3 + $0x218] sm:$0xf]
      %v4516 = vld [vmem:[%s3 + $0x21c] sm:$0xf]
      %v4517 = vld [vmem:[%s3 + $0x220] sm:$0xf]
      %v4518 = vld [vmem:[%s3 + $0x224] sm:$0xf]
      %v4519 = vld [vmem:[%s3 + $0x228] sm:$0xf]
      %v4520 = vld [vmem:[%s3 + $0x22c] sm:$0xf]
      %v4521 = vld [vmem:[%s3 + $0x230] sm:$0xf]
      %v4522 = vld [vmem:[%s3 + $0x234] sm:$0xf]
      %v4523 = vld [vmem:[%s3 + $0x238] sm:$0xf]
      %v4524 = vld [vmem:[%s3 + $0x23c] sm:$0xf]
      %v4525 = vld [vmem:[%s4] sm:$0x1]
      %v4527 = vlaneseq
      %v4528 = vshrl.u32 %v4527, 7
      %v4529 = vsub.s32 0, %v4528
      %v4530 = vrot.slane %v4525, %v4529
      %v4676 = vunpack.c.l.b16 %v4381
      %v4677 = vunpack.c.l.b16 %v4382
      %v4678 = vunpack.c.l.b16 %v4383
      %v4679 = vunpack.c.l.b16 %v4384
      %v4680 = vunpack.c.l.b16 %v4385
      %v4681 = vunpack.c.l.b16 %v4386
      %v4682 = vunpack.c.l.b16 %v4387
      %v4683 = vunpack.c.l.b16 %v4388
      %v4684 = vunpack.c.l.b16 %v4389
      %v4685 = vunpack.c.l.b16 %v4390
      %v4686 = vunpack.c.l.b16 %v4391
      %v4687 = vunpack.c.l.b16 %v4392
      %v4688 = vunpack.c.l.b16 %v4393
      %v4689 = vunpack.c.l.b16 %v4394
      %v4690 = vunpack.c.l.b16 %v4395
      %v4691 = vunpack.c.l.b16 %v4396
      %v4692 = vunpack.c.l.b16 %v4397
      %v4693 = vunpack.c.l.b16 %v4398
      %v4694 = vunpack.c.l.b16 %v4399
      %v4695 = vunpack.c.l.b16 %v4400
      %v4696 = vunpack.c.l.b16 %v4401
      %v4697 = vunpack.c.l.b16 %v4402
      %v4698 = vunpack.c.l.b16 %v4403
      %v4699 = vunpack.c.l.b16 %v4404
      %v4700 = vunpack.c.l.b16 %v4405
      %v4701 = vunpack.c.l.b16 %v4406
      %v4702 = vunpack.c.l.b16 %v4407
      %v4703 = vunpack.c.l.b16 %v4408
      %v4704 = vunpack.c.l.b16 %v4409
      %v4705 = vunpack.c.l.b16 %v4410
      %v4706 = vunpack.c.l.b16 %v4411
      %v4707 = vunpack.c.l.b16 %v4412
      %v4708 = vunpack.c.l.b16 %v4413
      %v4709 = vunpack.c.l.b16 %v4414
      %v4710 = vunpack.c.l.b16 %v4415
      %v4711 = vunpack.c.l.b16 %v4416
      %v4712 = vunpack.c.l.b16 %v4417
      %v4713 = vunpack.c.l.b16 %v4418
      %v4714 = vunpack.c.l.b16 %v4419
      %v4715 = vunpack.c.l.b16 %v4420
      %v4716 = vunpack.c.l.b16 %v4421
      %v4717 = vunpack.c.l.b16 %v4422
      %v4718 = vunpack.c.l.b16 %v4423
      %v4719 = vunpack.c.l.b16 %v4424
      %v4720 = vunpack.c.l.b16 %v4425
      %v4721 = vunpack.c.l.b16 %v4426
      %v4722 = vunpack.c.l.b16 %v4427
      %v4723 = vunpack.c.l.b16 %v4428
      %v4724 = vunpack.c.l.b16 %v4429
      %v4725 = vunpack.c.l.b16 %v4430
      %v4726 = vunpack.c.l.b16 %v4431
      %v4727 = vunpack.c.l.b16 %v4432
      %v4728 = vunpack.c.l.b16 %v4433
      %v4729 = vunpack.c.l.b16 %v4434
      %v4730 = vunpack.c.l.b16 %v4435
      %v4731 = vunpack.c.l.b16 %v4436
      %v4732 = vunpack.c.l.b16 %v4437
      %v4733 = vunpack.c.l.b16 %v4438
      %v4734 = vunpack.c.l.b16 %v4439
      %v4735 = vunpack.c.l.b16 %v4440
      %v4736 = vunpack.c.l.b16 %v4441
      %v4737 = vunpack.c.l.b16 %v4442
      %v4738 = vunpack.c.l.b16 %v4443
      %v4739 = vunpack.c.l.b16 %v4444
      %v4740 = vunpack.c.l.b16 %v4445
      %v4741 = vunpack.c.l.b16 %v4446
      %v4742 = vunpack.c.l.b16 %v4447
      %v4743 = vunpack.c.l.b16 %v4448
      %v4744 = vunpack.c.l.b16 %v4449
      %v4745 = vunpack.c.l.b16 %v4450
      %v4746 = vunpack.c.l.b16 %v4451
      %v4747 = vunpack.c.l.b16 %v4452
      %v4748 = vunpack.c.l.b16 %v4453
      %v4749 = vunpack.c.l.b16 %v4454
      %v4750 = vunpack.c.l.b16 %v4455
      %v4751 = vunpack.c.l.b16 %v4456
      %v4752 = vunpack.c.l.b16 %v4457
      %v4753 = vunpack.c.l.b16 %v4458
      %v4754 = vunpack.c.l.b16 %v4459
      %v4755 = vunpack.c.l.b16 %v4460
      %v4756 = vunpack.c.l.b16 %v4461
      %v4757 = vunpack.c.l.b16 %v4462
      %v4758 = vunpack.c.l.b16 %v4463
      %v4759 = vunpack.c.l.b16 %v4464
      %v4760 = vunpack.c.l.b16 %v4465
      %v4761 = vunpack.c.l.b16 %v4466
      %v4762 = vunpack.c.l.b16 %v4467
      %v4763 = vunpack.c.l.b16 %v4468
      %v4764 = vunpack.c.l.b16 %v4469
      %v4765 = vunpack.c.l.b16 %v4470
      %v4766 = vunpack.c.l.b16 %v4471
      %v4767 = vunpack.c.l.b16 %v4472
      %v4768 = vunpack.c.l.b16 %v4473
      %v4769 = vunpack.c.l.b16 %v4474
      %v4770 = vunpack.c.l.b16 %v4475
      %v4771 = vunpack.c.l.b16 %v4476
      %v4772 = vunpack.c.l.b16 %v4477
      %v4773 = vunpack.c.l.b16 %v4478
      %v4774 = vunpack.c.l.b16 %v4479
      %v4775 = vunpack.c.l.b16 %v4480
      %v4776 = vunpack.c.l.b16 %v4481
      %v4777 = vunpack.c.l.b16 %v4482
      %v4778 = vunpack.c.l.b16 %v4483
      %v4779 = vunpack.c.l.b16 %v4484
      %v4780 = vunpack.c.l.b16 %v4485
      %v4781 = vunpack.c.l.b16 %v4486
      %v4782 = vunpack.c.l.b16 %v4487
      %v4783 = vunpack.c.l.b16 %v4488
      %v4784 = vunpack.c.l.b16 %v4489
      %v4785 = vunpack.c.l.b16 %v4490
      %v4786 = vunpack.c.l.b16 %v4491
      %v4787 = vunpack.c.l.b16 %v4492
      %v4788 = vunpack.c.l.b16 %v4493
      %v4789 = vunpack.c.l.b16 %v4494
      %v4790 = vunpack.c.l.b16 %v4495
      %v4791 = vunpack.c.l.b16 %v4496
      %v4792 = vunpack.c.l.b16 %v4497
      %v4793 = vunpack.c.l.b16 %v4498
      %v4794 = vunpack.c.l.b16 %v4499
      %v4795 = vunpack.c.l.b16 %v4500
      %v4796 = vunpack.c.l.b16 %v4501
      %v4797 = vunpack.c.l.b16 %v4502
      %v4798 = vunpack.c.l.b16 %v4503
      %v4799 = vunpack.c.l.b16 %v4504
      %v4800 = vunpack.c.l.b16 %v4505
      %v4801 = vunpack.c.l.b16 %v4506
      %v4802 = vunpack.c.l.b16 %v4507
      %v4803 = vunpack.c.l.b16 %v4508
      %v4804 = vunpack.c.l.b16 %v4509
      %v4805 = vunpack.c.l.b16 %v4510
      %v4806 = vunpack.c.l.b16 %v4511
      %v4807 = vunpack.c.l.b16 %v4512
      %v4808 = vunpack.c.l.b16 %v4513
      %v4809 = vunpack.c.l.b16 %v4514
      %v4810 = vunpack.c.l.b16 %v4515
      %v4811 = vunpack.c.l.b16 %v4516
      %v4812 = vunpack.c.l.b16 %v4517
      %v4813 = vunpack.c.l.b16 %v4518
      %v4814 = vunpack.c.l.b16 %v4519
      %v4815 = vunpack.c.l.b16 %v4520
      %v4816 = vunpack.c.l.b16 %v4521
      %v4817 = vunpack.c.l.b16 %v4522
      %v4818 = vunpack.c.l.b16 %v4523
      %v4819 = vunpack.c.l.b16 %v4524
      %v4820 = vpack.c.b16 %v4677, %v4676
      %v4821 = vpack.c.b16 %v4679, %v4678
      %v4822 = vpack.c.b16 %v4681, %v4680
      %v4823 = vpack.c.b16 %v4683, %v4682
      %v4824 = vpack.c.b16 %v4685, %v4684
      %v4825 = vpack.c.b16 %v4687, %v4686
      %v4826 = vpack.c.b16 %v4689, %v4688
      %v4827 = vpack.c.b16 %v4691, %v4690
      %v4828 = vpack.c.b16 %v4693, %v4692
      %v4829 = vpack.c.b16 %v4695, %v4694
      %v4830 = vpack.c.b16 %v4697, %v4696
      %v4831 = vpack.c.b16 %v4699, %v4698
      %v4832 = vpack.c.b16 %v4701, %v4700
      %v4833 = vpack.c.b16 %v4703, %v4702
      %v4834 = vpack.c.b16 %v4705, %v4704
      %v4835 = vpack.c.b16 %v4707, %v4706
      %v4836 = vpack.c.b16 %v4709, %v4708
      %v4837 = vpack.c.b16 %v4711, %v4710
      %v4838 = vpack.c.b16 %v4713, %v4712
      %v4839 = vpack.c.b16 %v4715, %v4714
      %v4840 = vpack.c.b16 %v4717, %v4716
      %v4841 = vpack.c.b16 %v4719, %v4718
      %v4842 = vpack.c.b16 %v4721, %v4720
      %v4843 = vpack.c.b16 %v4723, %v4722
      %v4844 = vpack.c.b16 %v4725, %v4724
      %v4845 = vpack.c.b16 %v4727, %v4726
      %v4846 = vpack.c.b16 %v4729, %v4728
      %v4847 = vpack.c.b16 %v4731, %v4730
      %v4848 = vpack.c.b16 %v4733, %v4732
      %v4849 = vpack.c.b16 %v4735, %v4734
      %v4850 = vpack.c.b16 %v4737, %v4736
      %v4851 = vpack.c.b16 %v4739, %v4738
      %v4852 = vpack.c.b16 %v4741, %v4740
      %v4853 = vpack.c.b16 %v4743, %v4742
      %v4854 = vpack.c.b16 %v4745, %v4744
      %v4855 = vpack.c.b16 %v4747, %v4746
      %v4856 = vpack.c.b16 %v4749, %v4748
      %v4857 = vpack.c.b16 %v4751, %v4750
      %v4858 = vpack.c.b16 %v4753, %v4752
      %v4859 = vpack.c.b16 %v4755, %v4754
      %v4860 = vpack.c.b16 %v4757, %v4756
      %v4861 = vpack.c.b16 %v4759, %v4758
      %v4862 = vpack.c.b16 %v4761, %v4760
      %v4863 = vpack.c.b16 %v4763, %v4762
      %v4864 = vpack.c.b16 %v4765, %v4764
      %v4865 = vpack.c.b16 %v4767, %v4766
      %v4866 = vpack.c.b16 %v4769, %v4768
      %v4867 = vpack.c.b16 %v4771, %v4770
      %v4868 = vpack.c.b16 %v4773, %v4772
      %v4869 = vpack.c.b16 %v4775, %v4774
      %v4870 = vpack.c.b16 %v4777, %v4776
      %v4871 = vpack.c.b16 %v4779, %v4778
      %v4872 = vpack.c.b16 %v4781, %v4780
      %v4873 = vpack.c.b16 %v4783, %v4782
      %v4874 = vpack.c.b16 %v4785, %v4784
      %v4875 = vpack.c.b16 %v4787, %v4786
      %v4876 = vpack.c.b16 %v4789, %v4788
      %v4877 = vpack.c.b16 %v4791, %v4790
      %v4878 = vpack.c.b16 %v4793, %v4792
      %v4879 = vpack.c.b16 %v4795, %v4794
      %v4880 = vpack.c.b16 %v4797, %v4796
      %v4881 = vpack.c.b16 %v4799, %v4798
      %v4882 = vpack.c.b16 %v4801, %v4800
      %v4883 = vpack.c.b16 %v4803, %v4802
      %v4884 = vpack.c.b16 %v4805, %v4804
      %v4885 = vpack.c.b16 %v4807, %v4806
      %v4886 = vpack.c.b16 %v4809, %v4808
      %v4887 = vpack.c.b16 %v4811, %v4810
      %v4888 = vpack.c.b16 %v4813, %v4812
      %v4889 = vpack.c.b16 %v4815, %v4814
      %v4890 = vpack.c.b16 %v4817, %v4816
      %v4891 = vpack.c.b16 %v4819, %v4818
      %4964 = vmatprep.subr.bf16.mxu0 0
      %4965 = vmatpush1.bf16.msra.mxu0 %v4820
      %4966 = vmatprep.subr.bf16.mxu0 0
      %4967 = vmatpush1.bf16.msra.mxu0 %v4821
      %4968 = vmatprep.subr.bf16.mxu0 0
      %4969 = vmatpush1.bf16.msra.mxu0 %v4822
      %4970 = vmatprep.subr.bf16.mxu0 0
      %4971 = vmatpush1.bf16.msra.mxu0 %v4823
      %4972 = vmatprep.subr.bf16.mxu0 0
      %4973 = vmatpush1.bf16.msra.mxu0 %v4824
      %4974 = vmatprep.subr.bf16.mxu0 0
      %4975 = vmatpush1.bf16.msra.mxu0 %v4825
      %4976 = vmatprep.subr.bf16.mxu0 0
      %4977 = vmatpush1.bf16.msra.mxu0 %v4826
      %4978 = vmatprep.subr.bf16.mxu0 0
      %4979 = vmatpush1.bf16.msra.mxu0 %v4827
      %4980 = vmatprep.subr.bf16.mxu0 0
      %4981 = vmatpush1.bf16.msra.mxu0 %v4828
      %4982 = vmatprep.subr.bf16.mxu0 0
      %4983 = vmatpush1.bf16.msra.mxu0 %v4829
      %4984 = vmatprep.subr.bf16.mxu0 0
      %4985 = vmatpush1.bf16.msra.mxu0 %v4830
      %4986 = vmatprep.subr.bf16.mxu0 0
      %4987 = vmatpush1.bf16.msra.mxu0 %v4831
      %4988 = vmatprep.subr.bf16.mxu0 0
      %4989 = vmatpush1.bf16.msra.mxu0 %v4832
      %4990 = vmatprep.subr.bf16.mxu0 0
      %4991 = vmatpush1.bf16.msra.mxu0 %v4833
      %4992 = vmatprep.subr.bf16.mxu0 0
      %4993 = vmatpush1.bf16.msra.mxu0 %v4834
      %4994 = vmatprep.subr.bf16.mxu0 0
      %4995 = vmatpush1.bf16.msra.mxu0 %v4835
      %4996 = vmatprep.mubr.bf16.mxu0 %v4261
      %4997 = vmatmul.mubr.bf16.gmra.mrb[0].mxu0 %v4197
      %v4998 = vpop.f32.mrb[0].mxu0
      %v4999 = vadd.f32 %v4530, %v4998
      %v5000 = vpop.f32.mrb[0].mxu0
      %v5001 = vpop.f32.mrb[0].mxu0
      %v5002 = vadd.f32 %v4530, %v5001
      %v5003 = vpop.f32.mrb[0].mxu0
      %5004 = vmatprep.mubr.bf16.mxu0 %v4262
      %5005 = vmatmul.mubr.bf16.gmra.mrb[0].mxu0 %v4198
      %v5006 = vpop.f32.mrb[0].mxu0
      %v5007 = vadd.f32 %v4530, %v5006
      %v5008 = vpop.f32.mrb[0].mxu0
      %v5009 = vpop.f32.mrb[0].mxu0
      %v5010 = vadd.f32 %v4530, %v5009
      %v5011 = vpop.f32.mrb[0].mxu0
      %5012 = vmatprep.mubr.bf16.mxu0 %v4263
      %5013 = vmatmul.mubr.bf16.gmra.mrb[0].mxu0 %v4199
      %v5014 = vpop.f32.mrb[0].mxu0
      %v5015 = vadd.f32 %v4530, %v5014
      %v5016 = vpop.f32.mrb[0].mxu0
      %v5017 = vpop.f32.mrb[0].mxu0
      %v5018 = vadd.f32 %v4530, %v5017
      %v5019 = vpop.f32.mrb[0].mxu0
      %5020 = vmatprep.mubr.bf16.mxu0 %v4264
      %5021 = vmatmul.mubr.bf16.gmra.mrb[0].mxu0 %v4200
      %v5022 = vpop.f32.mrb[0].mxu0
      %v5023 = vadd.f32 %v4530, %v5022
      %v5024 = vpop.f32.mrb[0].mxu0
      %v5025 = vpop.f32.mrb[0].mxu0
      %v5026 = vadd.f32 %v4530, %v5025
      %v5027 = vpop.f32.mrb[0].mxu0
      %5028 = vmatprep.mubr.bf16.mxu0 %v4265
      %5029 = vmatmul.mubr.bf16.gmra.mrb[0].mxu0 %v4201
      %v5030 = vpop.f32.mrb[0].mxu0
      %v5031 = vadd.f32 %v4530, %v5030
      %v5032 = vpop.f32.mrb[0].mxu0
      %v5033 = vpop.f32.mrb[0].mxu0
      %v5034 = vadd.f32 %v4530, %v5033
      %v5035 = vpop.f32.mrb[0].mxu0
      %5036 = vmatprep.mubr.bf16.mxu0 %v4266
      %5037 = vmatmul.mubr.bf16.gmra.mrb[0].mxu0 %v4202
      %v5038 = vpop.f32.mrb[0].mxu0
      %v5039 = vadd.f32 %v4530, %v5038
      %v5040 = vpop.f32.mrb[0].mxu0
      %v5041 = vpop.f32.mrb[0].mxu0
      %v5042 = vadd.f32 %v4530, %v5041
      %v5043 = vpop.f32.mrb[0].mxu0
      %5044 = vmatprep.mubr.bf16.mxu0 %v4267
      %5045 = vmatmul.mubr.bf16.gmra.mrb[0].mxu0 %v4203
      %v5046 = vpop.f32.mrb[0].mxu0
      %v5047 = vadd.f32 %v4530, %v5046
      %v5048 = vpop.f32.mrb[0].mxu0
      %v5049 = vpop.f32.mrb[0].mxu0
      %v5050 = vadd.f32 %v4530, %v5049
      %v5051 = vpop.f32.mrb[0].mxu0
      %5052 = vmatprep.mubr.bf16.mxu0 %v4268
      %5053 = vmatmul.mubr.bf16.gmra.mrb[0].mxu0 %v4204
      %v5054 = vpop.f32.mrb[0].mxu0
      %v5055 = vadd.f32 %v4530, %v5054
      %v5056 = vpop.f32.mrb[0].mxu0
      %v5057 = vpop.f32.mrb[0].mxu0
      %v5058 = vadd.f32 %v4530, %v5057
      %v5059 = vpop.f32.mrb[0].mxu0
      %5060 = vmatprep.mubr.bf16.mxu0 %v4269
      %5061 = vmatmul.mubr.bf16.gmra.mrb[0].mxu0 %v4205
      %v5062 = vpop.f32.mrb[0].mxu0
      %v5063 = vadd.f32 %v4530, %v5062
      %v5064 = vpop.f32.mrb[0].mxu0
      %v5065 = vpop.f32.mrb[0].mxu0
      %v5066 = vadd.f32 %v4530, %v5065
      %v5067 = vpop.f32.mrb[0].mxu0
      %5068 = vmatprep.mubr.bf16.mxu0 %v4270
      %5069 = vmatmul.mubr.bf16.gmra.mrb[0].mxu0 %v4206
      %v5070 = vpop.f32.mrb[0].mxu0
      %v5071 = vadd.f32 %v4530, %v5070
      %v5072 = vpop.f32.mrb[0].mxu0
      %v5073 = vpop.f32.mrb[0].mxu0
      %v5074 = vadd.f32 %v4530, %v5073
      %v5075 = vpop.f32.mrb[0].mxu0
      %5076 = vmatprep.mubr.bf16.mxu0 %v4271
      %5077 = vmatmul.mubr.bf16.gmra.mrb[0].mxu0 %v4207
      %v5078 = vpop.f32.mrb[0].mxu0
      %v5079 = vadd.f32 %v4530, %v5078
      %v5080 = vpop.f32.mrb[0].mxu0
      %v5081 = vpop.f32.mrb[0].mxu0
      %v5082 = vadd.f32 %v4530, %v5081
      %v5083 = vpop.f32.mrb[0].mxu0
      %5084 = vmatprep.mubr.bf16.mxu0 %v4272
      %5085 = vmatmul.mubr.bf16.gmra.mrb[0].mxu0 %v4208
      %v5086 = vpop.f32.mrb[0].mxu0
      %v5087 = vadd.f32 %v4530, %v5086
      %v5088 = vpop.f32.mrb[0].mxu0
      %v5089 = vpop.f32.mrb[0].mxu0
      %v5090 = vadd.f32 %v4530, %v5089
      %v5091 = vpop.f32.mrb[0].mxu0
      %5092 = vmatprep.mubr.bf16.mxu0 %v4273
      %5093 = vmatmul.mubr.bf16.gmra.mrb[0].mxu0 %v4209
      %v5094 = vpop.f32.mrb[0].mxu0
      %v5095 = vadd.f32 %v4530, %v5094
      %v5096 = vpop.f32.mrb[0].mxu0
      %v5097 = vpop.f32.mrb[0].mxu0
      %v5098 = vadd.f32 %v4530, %v5097
      %v5099 = vpop.f32.mrb[0].mxu0
      %5100 = vmatprep.mubr.bf16.mxu0 %v4274
      %5101 = vmatmul.mubr.bf16.gmra.mrb[0].mxu0 %v4210
      %v5102 = vpop.f32.mrb[0].mxu0
      %v5103 = vadd.f32 %v4530, %v5102
      %v5104 = vpop.f32.mrb[0].mxu0
      %v5105 = vpop.f32.mrb[0].mxu0
      %v5106 = vadd.f32 %v4530, %v5105
      %v5107 = vpop.f32.mrb[0].mxu0
      %5108 = vmatprep.mubr.bf16.mxu0 %v4275
      %5109 = vmatmul.mubr.bf16.gmra.mrb[0].mxu0 %v4211
      %v5110 = vpop.f32.mrb[0].mxu0
      %v5111 = vadd.f32 %v4530, %v5110
      %v5112 = vpop.f32.mrb[0].mxu0
      %v5113 = vpop.f32.mrb[0].mxu0
      %v5114 = vadd.f32 %v4530, %v5113
      %v5115 = vpop.f32.mrb[0].mxu0
      %5116 = vmatprep.mubr.bf16.mxu0 %v4276
      %5117 = vmatmul.mubr.bf16.gmra.mrb[0].mxu0 %v4212
      %v5118 = vpop.f32.mrb[0].mxu0
      %v5119 = vadd.f32 %v4530, %v5118
      %v5120 = vpop.f32.mrb[0].mxu0
      %v5121 = vpop.f32.mrb[0].mxu0
      %v5122 = vadd.f32 %v4530, %v5121
      %v5123 = vpop.f32.mrb[0].mxu0
      %5124 = vdwg.mxu0
      %5125 = vmatprep.subr.bf16.mxu0 0
      %5126 = vmatpush1.bf16.msra.mxu0 %v4836
      %5127 = vmatprep.subr.bf16.mxu0 0
      %5128 = vmatpush1.bf16.msra.mxu0 %v4837
      %5129 = vmatprep.subr.bf16.mxu0 0
      %5130 = vmatpush1.bf16.msra.mxu0 %v4838
      %5131 = vmatprep.subr.bf16.mxu0 0
      %5132 = vmatpush1.bf16.msra.mxu0 %v4839
      %5133 = vmatprep.subr.bf16.mxu0 0
      %5134 = vmatpush1.bf16.msra.mxu0 %v4840
      %5135 = vmatprep.subr.bf16.mxu0 0
      %5136 = vmatpush1.bf16.msra.mxu0 %v4841
      %5137 = vmatprep.subr.bf16.mxu0 0
      %5138 = vmatpush1.bf16.msra.mxu0 %v4842
      %5139 = vmatprep.subr.bf16.mxu0 0
      %5140 = vmatpush1.bf16.msra.mxu0 %v4843
      %5141 = vmatprep.subr.bf16.mxu0 0
      %5142 = vmatpush1.bf16.msra.mxu0 %v4844
      %5143 = vmatprep.subr.bf16.mxu0 0
      %5144 = vmatpush1.bf16.msra.mxu0 %v4845
      %5145 = vmatprep.subr.bf16.mxu0 0
      %5146 = vmatpush1.bf16.msra.mxu0 %v4846
      %5147 = vmatprep.subr.bf16.mxu0 0
      %5148 = vmatpush1.bf16.msra.mxu0 %v4847
      %5149 = vmatprep.subr.bf16.mxu0 0
      %5150 = vmatpush1.bf16.msra.mxu0 %v4848
      %5151 = vmatprep.subr.bf16.mxu0 0
      %5152 = vmatpush1.bf16.msra.mxu0 %v4849
      %5153 = vmatprep.subr.bf16.mxu0 0
      %5154 = vmatpush1.bf16.msra.mxu0 %v4850
      %5155 = vmatprep.subr.bf16.mxu0 0
      %5156 = vmatpush1.bf16.msra.mxu0 %v4851
      %5157 = vmatprep.mubr.bf16.mxu0 %v4198
      %5158 = vmatmul.mubr.bf16.gmra.mrb[0].mxu0 %v4325
      %v5159 = vpop.f32.mrb[0].mxu0
      %v5160 = vadd.f32 %v4999, %v5159
      %v5161 = vpop.f32.mrb[0].mxu0
      %v5162 = vpop.f32.mrb[0].mxu0
      %v5163 = vadd.f32 %v5002, %v5162
      %v5164 = vpop.f32.mrb[0].mxu0
      %5165 = vmatprep.mubr.bf16.mxu0 %v4199
      %5166 = vmatmul.mubr.bf16.gmra.mrb[0].mxu0 %v4326
      %v5167 = vpop.f32.mrb[0].mxu0
      %v5168 = vadd.f32 %v5007, %v5167
      %v5169 = vpop.f32.mrb[0].mxu0
      %v5170 = vpop.f32.mrb[0].mxu0
      %v5171 = vadd.f32 %v5010, %v5170
      %v5172 = vpop.f32.mrb[0].mxu0
      %5173 = vmatprep.mubr.bf16.mxu0 %v4200
      %5174 = vmatmul.mubr.bf16.gmra.mrb[0].mxu0 %v4327
      %v5175 = vpop.f32.mrb[0].mxu0
      %v5176 = vadd.f32 %v5015, %v5175
      %v5177 = vpop.f32.mrb[0].mxu0
      %v5178 = vpop.f32.mrb[0].mxu0
      %v5179 = vadd.f32 %v5018, %v5178
      %v5180 = vpop.f32.mrb[0].mxu0
      %5181 = vmatprep.mubr.bf16.mxu0 %v4201
      %5182 = vmatmul.mubr.bf16.gmra.mrb[0].mxu0 %v4328
      %v5183 = vpop.f32.mrb[0].mxu0
      %v5184 = vadd.f32 %v5023, %v5183
      %v5185 = vpop.f32.mrb[0].mxu0
      %v5186 = vpop.f32.mrb[0].mxu0
      %v5187 = vadd.f32 %v5026, %v5186
      %v5188 = vpop.f32.mrb[0].mxu0
      %5189 = vmatprep.mubr.bf16.mxu0 %v4202
      %5190 = vmatmul.mubr.bf16.gmra.mrb[0].mxu0 %v4329
      %v5191 = vpop.f32.mrb[0].mxu0
      %v5192 = vadd.f32 %v5031, %v5191
      %v5193 = vpop.f32.mrb[0].mxu0
      %v5194 = vpop.f32.mrb[0].mxu0
      %v5195 = vadd.f32 %v5034, %v5194
      %v5196 = vpop.f32.mrb[0].mxu0
      %5197 = vmatprep.mubr.bf16.mxu0 %v4203
      %5198 = vmatmul.mubr.bf16.gmra.mrb[0].mxu0 %v4330
      %v5199 = vpop.f32.mrb[0].mxu0
      %v5200 = vadd.f32 %v5039, %v5199
      %v5201 = vpop.f32.mrb[0].mxu0
      %v5202 = vpop.f32.mrb[0].mxu0
      %v5203 = vadd.f32 %v5042, %v5202
      %v5204 = vpop.f32.mrb[0].mxu0
      %5205 = vmatprep.mubr.bf16.mxu0 %v4204
      %5206 = vmatmul.mubr.bf16.gmra.mrb[0].mxu0 %v4331
      %v5207 = vpop.f32.mrb[0].mxu0
      %v5208 = vadd.f32 %v5047, %v5207
      %v5209 = vpop.f32.mrb[0].mxu0
      %v5210 = vpop.f32.mrb[0].mxu0
      %v5211 = vadd.f32 %v5050, %v5210
      %v5212 = vpop.f32.mrb[0].mxu0
      %5213 = vmatprep.mubr.bf16.mxu0 %v4205
      %5214 = vmatmul.mubr.bf16.gmra.mrb[0].mxu0 %v4332
      %v5215 = vpop.f32.mrb[0].mxu0
      %v5216 = vadd.f32 %v5055, %v5215
      %v5217 = vpop.f32.mrb[0].mxu0
      %v5218 = vpop.f32.mrb[0].mxu0
      %v5219 = vadd.f32 %v5058, %v5218
      %v5220 = vpop.f32.mrb[0].mxu0
      %5221 = vmatprep.mubr.bf16.mxu0 %v4206
      %5222 = vmatmul.mubr.bf16.gmra.mrb[0].mxu0 %v4333
      %v5223 = vpop.f32.mrb[0].mxu0
      %v5224 = vadd.f32 %v5063, %v5223
      %v5225 = vpop.f32.mrb[0].mxu0
      %v5226 = vpop.f32.mrb[0].mxu0
      %v5227 = vadd.f32 %v5066, %v5226
      %v5228 = vpop.f32.mrb[0].mxu0
      %5229 = vmatprep.mubr.bf16.mxu0 %v4207
      %5230 = vmatmul.mubr.bf16.gmra.mrb[0].mxu0 %v4334
      %v5231 = vpop.f32.mrb[0].mxu0
      %v5232 = vadd.f32 %v5071, %v5231
      %v5233 = vpop.f32.mrb[0].mxu0
      %v5234 = vpop.f32.mrb[0].mxu0
      %v5235 = vadd.f32 %v5074, %v5234
      %v5236 = vpop.f32.mrb[0].mxu0
      %5237 = vmatprep.mubr.bf16.mxu0 %v4208
      %5238 = vmatmul.mubr.bf16.gmra.mrb[0].mxu0 %v4335
      %v5239 = vpop.f32.mrb[0].mxu0
      %v5240 = vadd.f32 %v5079, %v5239
      %v5241 = vpop.f32.mrb[0].mxu0
      %v5242 = vpop.f32.mrb[0].mxu0
      %v5243 = vadd.f32 %v5082, %v5242
      %v5244 = vpop.f32.mrb[0].mxu0
      %5245 = vmatprep.mubr.bf16.mxu0 %v4209
      %5246 = vmatmul.mubr.bf16.gmra.mrb[0].mxu0 %v4336
      %v5247 = vpop.f32.mrb[0].mxu0
      %v5248 = vadd.f32 %v5087, %v5247
      %v5249 = vpop.f32.mrb[0].mxu0
      %v5250 = vpop.f32.mrb[0].mxu0
      %v5251 = vadd.f32 %v5090, %v5250
      %v5252 = vpop.f32.mrb[0].mxu0
      %5253 = vmatprep.mubr.bf16.mxu0 %v4210
      %5254 = vmatmul.mubr.bf16.gmra.mrb[0].mxu0 %v4337
      %v5255 = vpop.f32.mrb[0].mxu0
      %v5256 = vadd.f32 %v5095, %v5255
      %v5257 = vpop.f32.mrb[0].mxu0
      %v5258 = vpop.f32.mrb[0].mxu0
      %v5259 = vadd.f32 %v5098, %v5258
      %v5260 = vpop.f32.mrb[0].mxu0
      %5261 = vmatprep.mubr.bf16.mxu0 %v4211
      %5262 = vmatmul.mubr.bf16.gmra.mrb[0].mxu0 %v4338
      %v5263 = vpop.f32.mrb[0].mxu0
      %v5264 = vadd.f32 %v5103, %v5263
      %v5265 = vpop.f32.mrb[0].mxu0
      %v5266 = vpop.f32.mrb[0].mxu0
      %v5267 = vadd.f32 %v5106, %v5266
      %v5268 = vpop.f32.mrb[0].mxu0
      %5269 = vmatprep.mubr.bf16.mxu0 %v4212
      %5270 = vmatmul.mubr.bf16.gmra.mrb[0].mxu0 %v4339
      %v5271 = vpop.f32.mrb[0].mxu0
      %v5272 = vadd.f32 %v5111, %v5271
      %v5273 = vpop.f32.mrb[0].mxu0
      %v5274 = vpop.f32.mrb[0].mxu0
      %v5275 = vadd.f32 %v5114, %v5274
      %v5276 = vpop.f32.mrb[0].mxu0
      %5277 = vmatprep.mubr.bf16.mxu0 %v4359
      %5278 = vmatmul.mubr.bf16.gmra.mrb[0].mxu0 %v4340
      %v5279 = vpop.f32.mrb[0].mxu0
      %v5280 = vadd.f32 %v5119, %v5279
      %v5281 = vpop.f32.mrb[0].mxu0
      %v5282 = vpop.f32.mrb[0].mxu0
      %v5283 = vadd.f32 %v5122, %v5282
      %v5284 = vpop.f32.mrb[0].mxu0
      %5285 = vdwg.mxu0
      %5286 = vmatprep.subr.bf16.mxu0 0
      %5287 = vmatpush1.bf16.msra.mxu0 %v4852
      %5288 = vmatprep.subr.bf16.mxu0 0
      %5289 = vmatpush1.bf16.msra.mxu0 %v4853
      %5290 = vmatprep.subr.bf16.mxu0 0
      %5291 = vmatpush1.bf16.msra.mxu0 %v4854
      %5292 = vmatprep.subr.bf16.mxu0 0
      %5293 = vmatpush1.bf16.msra.mxu0 %v4855
      %5294 = vmatprep.subr.bf16.mxu0 0
      %5295 = vmatpush1.bf16.msra.mxu0 %v4856
      %5296 = vmatprep.subr.bf16.mxu0 0
      %5297 = vmatpush1.bf16.msra.mxu0 %v4857
      %5298 = vmatprep.subr.bf16.mxu0 0
      %5299 = vmatpush1.bf16.msra.mxu0 %v4858
      %5300 = vmatprep.subr.bf16.mxu0 0
      %5301 = vmatpush1.bf16.msra.mxu0 %v4859
      %5302 = vmatprep.subr.bf16.mxu0 0
      %5303 = vmatpush1.bf16.msra.mxu0 %v4860
      %5304 = vmatprep.subr.bf16.mxu0 0
      %5305 = vmatpush1.bf16.msra.mxu0 %v4861
      %5306 = vmatprep.subr.bf16.mxu0 0
      %5307 = vmatpush1.bf16.msra.mxu0 %v4862
      %5308 = vmatprep.subr.bf16.mxu0 0
      %5309 = vmatpush1.bf16.msra.mxu0 %v4863
      %5310 = vmatprep.subr.bf16.mxu0 0
      %5311 = vmatpush1.bf16.msra.mxu0 %v4864
      %5312 = vmatprep.subr.bf16.mxu0 0
      %5313 = vmatpush1.bf16.msra.mxu0 %v4865
      %5314 = vmatprep.subr.bf16.mxu0 0
      %5315 = vmatpush1.bf16.msra.mxu0 %v4866
      %5316 = vmatprep.subr.bf16.mxu0 0
      %5317 = vmatpush1.bf16.msra.mxu0 %v4867
      %5318 = vmatprep.mubr.bf16.mxu0 %v4326
      %5319 = vmatmul.mubr.bf16.gmra.mrb[0].mxu0 %v4262
      %v5320 = vpop.f32.mrb[0].mxu0
      %v5321 = vadd.f32 %v5160, %v5320
      %v5322 = vpop.f32.mrb[0].mxu0
      %v5323 = vpop.f32.mrb[0].mxu0
      %v5324 = vadd.f32 %v5163, %v5323
      %v5325 = vpop.f32.mrb[0].mxu0
      %5326 = vmatprep.mubr.bf16.mxu0 %v4327
      %5327 = vmatmul.mubr.bf16.gmra.mrb[0].mxu0 %v4263
      %v5328 = vpop.f32.mrb[0].mxu0
      %v5329 = vadd.f32 %v5168, %v5328
      %v5330 = vpop.f32.mrb[0].mxu0
      %v5331 = vpop.f32.mrb[0].mxu0
      %v5332 = vadd.f32 %v5171, %v5331
      %v5333 = vpop.f32.mrb[0].mxu0
      %5334 = vmatprep.mubr.bf16.mxu0 %v4328
      %5335 = vmatmul.mubr.bf16.gmra.mrb[0].mxu0 %v4264
      %v5336 = vpop.f32.mrb[0].mxu0
      %v5337 = vadd.f32 %v5176, %v5336
      %v5338 = vpop.f32.mrb[0].mxu0
      %v5339 = vpop.f32.mrb[0].mxu0
      %v5340 = vadd.f32 %v5179, %v5339
      %v5341 = vpop.f32.mrb[0].mxu0
      %5342 = vmatprep.mubr.bf16.mxu0 %v4329
      %5343 = vmatmul.mubr.bf16.gmra.mrb[0].mxu0 %v4265
      %v5344 = vpop.f32.mrb[0].mxu0
      %v5345 = vadd.f32 %v5184, %v5344
      %v5346 = vpop.f32.mrb[0].mxu0
      %v5347 = vpop.f32.mrb[0].mxu0
      %v5348 = vadd.f32 %v5187, %v5347
      %v5349 = vpop.f32.mrb[0].mxu0
      %5350 = vmatprep.mubr.bf16.mxu0 %v4330
      %5351 = vmatmul.mubr.bf16.gmra.mrb[0].mxu0 %v4266
      %v5352 = vpop.f32.mrb[0].mxu0
      %v5353 = vadd.f32 %v5192, %v5352
      %v5354 = vpop.f32.mrb[0].mxu0
      %v5355 = vpop.f32.mrb[0].mxu0
      %v5356 = vadd.f32 %v5195, %v5355
      %v5357 = vpop.f32.mrb[0].mxu0
      %5358 = vmatprep.mubr.bf16.mxu0 %v4331
      %5359 = vmatmul.mubr.bf16.gmra.mrb[0].mxu0 %v4267
      %v5360 = vpop.f32.mrb[0].mxu0
      %v5361 = vadd.f32 %v5200, %v5360
      %v5362 = vpop.f32.mrb[0].mxu0
      %v5363 = vpop.f32.mrb[0].mxu0
      %v5364 = vadd.f32 %v5203, %v5363
      %v5365 = vpop.f32.mrb[0].mxu0
      %5366 = vmatprep.mubr.bf16.mxu0 %v4332
      %5367 = vmatmul.mubr.bf16.gmra.mrb[0].mxu0 %v4268
      %v5368 = vpop.f32.mrb[0].mxu0
      %v5369 = vadd.f32 %v5208, %v5368
      %v5370 = vpop.f32.mrb[0].mxu0
      %v5371 = vpop.f32.mrb[0].mxu0
      %v5372 = vadd.f32 %v5211, %v5371
      %v5373 = vpop.f32.mrb[0].mxu0
      %5374 = vmatprep.mubr.bf16.mxu0 %v4333
      %5375 = vmatmul.mubr.bf16.gmra.mrb[0].mxu0 %v4269
      %v5376 = vpop.f32.mrb[0].mxu0
      %v5377 = vadd.f32 %v5216, %v5376
      %v5378 = vpop.f32.mrb[0].mxu0
      %v5379 = vpop.f32.mrb[0].mxu0
      %v5380 = vadd.f32 %v5219, %v5379
      %v5381 = vpop.f32.mrb[0].mxu0
      %5382 = vmatprep.mubr.bf16.mxu0 %v4334
      %5383 = vmatmul.mubr.bf16.gmra.mrb[0].mxu0 %v4270
      %v5384 = vpop.f32.mrb[0].mxu0
      %v5385 = vadd.f32 %v5224, %v5384
      %v5386 = vpop.f32.mrb[0].mxu0
      %v5387 = vpop.f32.mrb[0].mxu0
      %v5388 = vadd.f32 %v5227, %v5387
      %v5389 = vpop.f32.mrb[0].mxu0
      %5390 = vmatprep.mubr.bf16.mxu0 %v4335
      %5391 = vmatmul.mubr.bf16.gmra.mrb[0].mxu0 %v4271
      %v5392 = vpop.f32.mrb[0].mxu0
      %v5393 = vadd.f32 %v5232, %v5392
      %v5394 = vpop.f32.mrb[0].mxu0
      %v5395 = vpop.f32.mrb[0].mxu0
      %v5396 = vadd.f32 %v5235, %v5395
      %v5397 = vpop.f32.mrb[0].mxu0
      %5398 = vmatprep.mubr.bf16.mxu0 %v4336
      %5399 = vmatmul.mubr.bf16.gmra.mrb[0].mxu0 %v4272
      %v5400 = vpop.f32.mrb[0].mxu0
      %v5401 = vadd.f32 %v5240, %v5400
      %v5402 = vpop.f32.mrb[0].mxu0
      %v5403 = vpop.f32.mrb[0].mxu0
      %v5404 = vadd.f32 %v5243, %v5403
      %v5405 = vpop.f32.mrb[0].mxu0
      %5406 = vmatprep.mubr.bf16.mxu0 %v4337
      %5407 = vmatmul.mubr.bf16.gmra.mrb[0].mxu0 %v4273
      %v5408 = vpop.f32.mrb[0].mxu0
      %v5409 = vadd.f32 %v5248, %v5408
      %v5410 = vpop.f32.mrb[0].mxu0
      %v5411 = vpop.f32.mrb[0].mxu0
      %v5412 = vadd.f32 %v5251, %v5411
      %v5413 = vpop.f32.mrb[0].mxu0
      %5414 = vmatprep.mubr.bf16.mxu0 %v4338
      %5415 = vmatmul.mubr.bf16.gmra.mrb[0].mxu0 %v4274
      %v5416 = vpop.f32.mrb[0].mxu0
      %v5417 = vadd.f32 %v5256, %v5416
      %v5418 = vpop.f32.mrb[0].mxu0
      %v5419 = vpop.f32.mrb[0].mxu0
      %v5420 = vadd.f32 %v5259, %v5419
      %v5421 = vpop.f32.mrb[0].mxu0
      %5422 = vmatprep.mubr.bf16.mxu0 %v4339
      %5423 = vmatmul.mubr.bf16.gmra.mrb[0].mxu0 %v4275
      %v5424 = vpop.f32.mrb[0].mxu0
      %v5425 = vadd.f32 %v5264, %v5424
      %v5426 = vpop.f32.mrb[0].mxu0
      %v5427 = vpop.f32.mrb[0].mxu0
      %v5428 = vadd.f32 %v5267, %v5427
      %v5429 = vpop.f32.mrb[0].mxu0
      %5430 = vmatprep.mubr.bf16.mxu0 %v4340
      %5431 = vmatmul.mubr.bf16.gmra.mrb[0].mxu0 %v4276
      %v5432 = vpop.f32.mrb[0].mxu0
      %v5433 = vadd.f32 %v5272, %v5432
      %v5434 = vpop.f32.mrb[0].mxu0
      %v5435 = vpop.f32.mrb[0].mxu0
      %v5436 = vadd.f32 %v5275, %v5435
      %v5437 = vpop.f32.mrb[0].mxu0
      %5438 = vmatprep.mubr.bf16.mxu0 %v4367
      %5439 = vmatmul.mubr.bf16.gmra.mrb[0].mxu0 %v4363
      %v5440 = vpop.f32.mrb[0].mxu0
      %v5441 = vadd.f32 %v5280, %v5440
      %v5442 = vpop.f32.mrb[0].mxu0
      %v5443 = vpop.f32.mrb[0].mxu0
      %v5444 = vadd.f32 %v5283, %v5443
      %v5445 = vpop.f32.mrb[0].mxu0
      %5446 = vdwg.mxu0
      %5447 = vmatprep.subr.bf16.mxu0 0
      %5448 = vmatpush1.bf16.msra.mxu0 %v4868
      %5449 = vmatprep.subr.bf16.mxu0 0
      %5450 = vmatpush1.bf16.msra.mxu0 %v4869
      %5451 = vmatprep.subr.bf16.mxu0 0
      %5452 = vmatpush1.bf16.msra.mxu0 %v4870
      %5453 = vmatprep.subr.bf16.mxu0 0
      %5454 = vmatpush1.bf16.msra.mxu0 %v4871
      %5455 = vmatprep.subr.bf16.mxu0 0
      %5456 = vmatpush1.bf16.msra.mxu0 %v4872
      %5457 = vmatprep.subr.bf16.mxu0 0
      %5458 = vmatpush1.bf16.msra.mxu0 %v4873
      %5459 = vmatprep.subr.bf16.mxu0 0
      %5460 = vmatpush1.bf16.msra.mxu0 %v4874
      %5461 = vmatprep.subr.bf16.mxu0 0
      %5462 = vmatpush1.bf16.msra.mxu0 %v4875
      %5463 = vmatprep.subr.bf16.mxu0 0
      %5464 = vmatpush1.bf16.msra.mxu0 %v4876
      %5465 = vmatprep.subr.bf16.mxu0 0
      %5466 = vmatpush1.bf16.msra.mxu0 %v4877
      %5467 = vmatprep.subr.bf16.mxu0 0
      %5468 = vmatpush1.bf16.msra.mxu0 %v4878
      %5469 = vmatprep.subr.bf16.mxu0 0
      %5470 = vmatpush1.bf16.msra.mxu0 %v4879
      %5471 = vmatprep.subr.bf16.mxu0 0
      %5472 = vmatpush1.bf16.msra.mxu0 %v4880
      %5473 = vmatprep.subr.bf16.mxu0 0
      %5474 = vmatpush1.bf16.msra.mxu0 %v4881
      %5475 = vmatprep.subr.bf16.mxu0 0
      %5476 = vmatpush1.bf16.msra.mxu0 %v4882
      %5477 = vmatprep.subr.bf16.mxu0 0
      %5478 = vmatpush1.bf16.msra.mxu0 %v4883
      %5479 = vmatprep.mubr.bf16.mxu0 %v4263
      %5480 = vmatmul.mubr.bf16.gmra.mrb[0].mxu0 %v4199
      %v5481 = vpop.f32.mrb[0].mxu0
      %v5482 = vadd.f32 %v5321, %v5481
      %v5483 = vpop.f32.mrb[0].mxu0
      %v5484 = vpop.f32.mrb[0].mxu0
      %v5485 = vadd.f32 %v5324, %v5484
      %v5486 = vpop.f32.mrb[0].mxu0
      %5487 = vmatprep.mubr.bf16.mxu0 %v4264
      %5488 = vmatmul.mubr.bf16.gmra.mrb[0].mxu0 %v4200
      %v5489 = vpop.f32.mrb[0].mxu0
      %v5490 = vadd.f32 %v5329, %v5489
      %v5491 = vpop.f32.mrb[0].mxu0
      %v5492 = vpop.f32.mrb[0].mxu0
      %v5493 = vadd.f32 %v5332, %v5492
      %v5494 = vpop.f32.mrb[0].mxu0
      %5495 = vmatprep.mubr.bf16.mxu0 %v4265
      %5496 = vmatmul.mubr.bf16.gmra.mrb[0].mxu0 %v4201
      %v5497 = vpop.f32.mrb[0].mxu0
      %v5498 = vadd.f32 %v5337, %v5497
      %v5499 = vpop.f32.mrb[0].mxu0
      %v5500 = vpop.f32.mrb[0].mxu0
      %v5501 = vadd.f32 %v5340, %v5500
      %v5502 = vpop.f32.mrb[0].mxu0
      %5503 = vmatprep.mubr.bf16.mxu0 %v4266
      %5504 = vmatmul.mubr.bf16.gmra.mrb[0].mxu0 %v4202
      %v5505 = vpop.f32.mrb[0].mxu0
      %v5506 = vadd.f32 %v5345, %v5505
      %v5507 = vpop.f32.mrb[0].mxu0
      %v5508 = vpop.f32.mrb[0].mxu0
      %v5509 = vadd.f32 %v5348, %v5508
      %v5510 = vpop.f32.mrb[0].mxu0
      %5511 = vmatprep.mubr.bf16.mxu0 %v4267
      %5512 = vmatmul.mubr.bf16.gmra.mrb[0].mxu0 %v4203
      %v5513 = vpop.f32.mrb[0].mxu0
      %v5514 = vadd.f32 %v5353, %v5513
      %v5515 = vpop.f32.mrb[0].mxu0
      %v5516 = vpop.f32.mrb[0].mxu0
      %v5517 = vadd.f32 %v5356, %v5516
      %v5518 = vpop.f32.mrb[0].mxu0
      %5519 = vmatprep.mubr.bf16.mxu0 %v4268
      %5520 = vmatmul.mubr.bf16.gmra.mrb[0].mxu0 %v4204
      %v5521 = vpop.f32.mrb[0].mxu0
      %v5522 = vadd.f32 %v5361, %v5521
      %v5523 = vpop.f32.mrb[0].mxu0
      %v5524 = vpop.f32.mrb[0].mxu0
      %v5525 = vadd.f32 %v5364, %v5524
      %v5526 = vpop.f32.mrb[0].mxu0
      %5527 = vmatprep.mubr.bf16.mxu0 %v4269
      %5528 = vmatmul.mubr.bf16.gmra.mrb[0].mxu0 %v4205
      %v5529 = vpop.f32.mrb[0].mxu0
      %v5530 = vadd.f32 %v5369, %v5529
      %v5531 = vpop.f32.mrb[0].mxu0
      %v5532 = vpop.f32.mrb[0].mxu0
      %v5533 = vadd.f32 %v5372, %v5532
      %v5534 = vpop.f32.mrb[0].mxu0
      %5535 = vmatprep.mubr.bf16.mxu0 %v4270
      %5536 = vmatmul.mubr.bf16.gmra.mrb[0].mxu0 %v4206
      %v5537 = vpop.f32.mrb[0].mxu0
      %v5538 = vadd.f32 %v5377, %v5537
      %v5539 = vpop.f32.mrb[0].mxu0
      %v5540 = vpop.f32.mrb[0].mxu0
      %v5541 = vadd.f32 %v5380, %v5540
      %v5542 = vpop.f32.mrb[0].mxu0
      %5543 = vmatprep.mubr.bf16.mxu0 %v4271
      %5544 = vmatmul.mubr.bf16.gmra.mrb[0].mxu0 %v4207
      %v5545 = vpop.f32.mrb[0].mxu0
      %v5546 = vadd.f32 %v5385, %v5545
      %v5547 = vpop.f32.mrb[0].mxu0
      %v5548 = vpop.f32.mrb[0].mxu0
      %v5549 = vadd.f32 %v5388, %v5548
      %v5550 = vpop.f32.mrb[0].mxu0
      %5551 = vmatprep.mubr.bf16.mxu0 %v4272
      %5552 = vmatmul.mubr.bf16.gmra.mrb[0].mxu0 %v4208
      %v5553 = vpop.f32.mrb[0].mxu0
      %v5554 = vadd.f32 %v5393, %v5553
      %v5555 = vpop.f32.mrb[0].mxu0
      %v5556 = vpop.f32.mrb[0].mxu0
      %v5557 = vadd.f32 %v5396, %v5556
      %v5558 = vpop.f32.mrb[0].mxu0
      %5559 = vmatprep.mubr.bf16.mxu0 %v4273
      %5560 = vmatmul.mubr.bf16.gmra.mrb[0].mxu0 %v4209
      %v5561 = vpop.f32.mrb[0].mxu0
      %v5562 = vadd.f32 %v5401, %v5561
      %v5563 = vpop.f32.mrb[0].mxu0
      %v5564 = vpop.f32.mrb[0].mxu0
      %v5565 = vadd.f32 %v5404, %v5564
      %v5566 = vpop.f32.mrb[0].mxu0
      %5567 = vmatprep.mubr.bf16.mxu0 %v4274
      %5568 = vmatmul.mubr.bf16.gmra.mrb[0].mxu0 %v4210
      %v5569 = vpop.f32.mrb[0].mxu0
      %v5570 = vadd.f32 %v5409, %v5569
      %v5571 = vpop.f32.mrb[0].mxu0
      %v5572 = vpop.f32.mrb[0].mxu0
      %v5573 = vadd.f32 %v5412, %v5572
      %v5574 = vpop.f32.mrb[0].mxu0
      %5575 = vmatprep.mubr.bf16.mxu0 %v4275
      %5576 = vmatmul.mubr.bf16.gmra.mrb[0].mxu0 %v4211
      %v5577 = vpop.f32.mrb[0].mxu0
      %v5578 = vadd.f32 %v5417, %v5577
      %v5579 = vpop.f32.mrb[0].mxu0
      %v5580 = vpop.f32.mrb[0].mxu0
      %v5581 = vadd.f32 %v5420, %v5580
      %v5582 = vpop.f32.mrb[0].mxu0
      %5583 = vmatprep.mubr.bf16.mxu0 %v4276
      %5584 = vmatmul.mubr.bf16.gmra.mrb[0].mxu0 %v4212
      %v5585 = vpop.f32.mrb[0].mxu0
      %v5586 = vadd.f32 %v5425, %v5585
      %v5587 = vpop.f32.mrb[0].mxu0
      %v5588 = vpop.f32.mrb[0].mxu0
      %v5589 = vadd.f32 %v5428, %v5588
      %v5590 = vpop.f32.mrb[0].mxu0
      %5591 = vmatprep.mubr.bf16.mxu0 %v4363
      %5592 = vmatmul.mubr.bf16.gmra.mrb[0].mxu0 %v4359
      %v5593 = vpop.f32.mrb[0].mxu0
      %v5594 = vadd.f32 %v5433, %v5593
      %v5595 = vpop.f32.mrb[0].mxu0
      %v5596 = vpop.f32.mrb[0].mxu0
      %v5597 = vadd.f32 %v5436, %v5596
      %v5598 = vpop.f32.mrb[0].mxu0
      %5599 = vmatprep.mubr.bf16.mxu0 %v4375
      %5600 = vmatmul.mubr.bf16.gmra.mrb[0].mxu0 %v4371
      %v5601 = vpop.f32.mrb[0].mxu0
      %v5602 = vadd.f32 %v5441, %v5601
      %v5603 = vpop.f32.mrb[0].mxu0
      %v5604 = vpop.f32.mrb[0].mxu0
      %v5605 = vadd.f32 %v5444, %v5604
      %v5606 = vpop.f32.mrb[0].mxu0
      %5607 = vdwg.mxu0
      %5608 = vmatprep.subr.bf16.mxu0 0
      %5609 = vmatpush1.bf16.msra.mxu0 %v4884
      %5610 = vmatprep.subr.bf16.mxu0 0
      %5611 = vmatpush1.bf16.msra.mxu0 %v4885
      %5612 = vmatprep.subr.bf16.mxu0 0
      %5613 = vmatpush1.bf16.msra.mxu0 %v4886
      %5614 = vmatprep.subr.bf16.mxu0 0
      %5615 = vmatpush1.bf16.msra.mxu0 %v4887
      %5616 = vmatprep.subr.bf16.mxu0 0
      %5617 = vmatpush1.bf16.msra.mxu0 %v4888
      %5618 = vmatprep.subr.bf16.mxu0 0
      %5619 = vmatpush1.bf16.msra.mxu0 %v4889
      %5620 = vmatprep.subr.bf16.mxu0 0
      %5621 = vmatpush1.bf16.msra.mxu0 %v4890
      %5622 = vmatprep.subr.bf16.mxu0 0
      %5623 = vmatpush1.bf16.msra.mxu0 %v4891
      %5624 = vmatprep.subr.bf16.mxu0 0
      %5625 = vmatpush1.bf16.msra.mxu0 0
      %5626 = vmatprep.subr.bf16.mxu0 0
      %5627 = vmatpush1.bf16.msra.mxu0 0
      %5628 = vmatprep.subr.bf16.mxu0 0
      %5629 = vmatpush1.bf16.msra.mxu0 0
      %5630 = vmatprep.subr.bf16.mxu0 0
      %5631 = vmatpush1.bf16.msra.mxu0 0
      %5632 = vmatprep.subr.bf16.mxu0 0
      %5633 = vmatpush1.bf16.msra.mxu0 0
      %5634 = vmatprep.subr.bf16.mxu0 0
      %5635 = vmatpush1.bf16.msra.mxu0 0
      %5636 = vmatprep.subr.bf16.mxu0 0
      %5637 = vmatpush1.bf16.msra.mxu0 0
      %5638 = vmatprep.subr.bf16.mxu0 0
      %5639 = vmatpush1.bf16.msra.mxu0 0
      %5640 = vmatprep.mubr.bf16.mxu0 0
      %5641 = vmatmul.mubr.bf16.gmra.mrb[0].mxu0 %v4327
      %v5642 = vpop.f32.mrb[0].mxu0
      %v5643 = vadd.f32 %v5482, %v5642
      %v5644 = vpop.f32.mrb[0].mxu0
      %v5645 = vpop.f32.mrb[0].mxu0
      %v5646 = vadd.f32 %v5485, %v5645
      %v5647 = vpop.f32.mrb[0].mxu0
      %5648 = vmatprep.mubr.bf16.mxu0 0
      %5649 = vmatmul.mubr.bf16.gmra.mrb[0].mxu0 %v4328
      %v5650 = vpop.f32.mrb[0].mxu0
      %v5651 = vadd.f32 %v5490, %v5650
      %v5652 = vpop.f32.mrb[0].mxu0
      %v5653 = vpop.f32.mrb[0].mxu0
      %v5654 = vadd.f32 %v5493, %v5653
      %v5655 = vpop.f32.mrb[0].mxu0
      %5656 = vmatprep.mubr.bf16.mxu0 0
      %5657 = vmatmul.mubr.bf16.gmra.mrb[0].mxu0 %v4329
      %v5658 = vpop.f32.mrb[0].mxu0
      %v5659 = vadd.f32 %v5498, %v5658
      %v5660 = vpop.f32.mrb[0].mxu0
      %v5661 = vpop.f32.mrb[0].mxu0
      %v5662 = vadd.f32 %v5501, %v5661
      %v5663 = vpop.f32.mrb[0].mxu0
      %5664 = vmatprep.mubr.bf16.mxu0 0
      %5665 = vmatmul.mubr.bf16.gmra.mrb[0].mxu0 %v4330
      %v5666 = vpop.f32.mrb[0].mxu0
      %v5667 = vadd.f32 %v5506, %v5666
      %v5668 = vpop.f32.mrb[0].mxu0
      %v5669 = vpop.f32.mrb[0].mxu0
      %v5670 = vadd.f32 %v5509, %v5669
      %v5671 = vpop.f32.mrb[0].mxu0
      %5672 = vmatprep.mubr.bf16.mxu0 0
      %5673 = vmatmul.mubr.bf16.gmra.mrb[0].mxu0 %v4331
      %v5674 = vpop.f32.mrb[0].mxu0
      %v5675 = vadd.f32 %v5514, %v5674
      %v5676 = vpop.f32.mrb[0].mxu0
      %v5677 = vpop.f32.mrb[0].mxu0
      %v5678 = vadd.f32 %v5517, %v5677
      %v5679 = vpop.f32.mrb[0].mxu0
      %5680 = vmatprep.mubr.bf16.mxu0 0
      %5681 = vmatmul.mubr.bf16.gmra.mrb[0].mxu0 %v4332
      %v5682 = vpop.f32.mrb[0].mxu0
      %v5683 = vadd.f32 %v5522, %v5682
      %v5684 = vpop.f32.mrb[0].mxu0
      %v5685 = vpop.f32.mrb[0].mxu0
      %v5686 = vadd.f32 %v5525, %v5685
      %v5687 = vpop.f32.mrb[0].mxu0
      %5688 = vmatprep.mubr.bf16.mxu0 0
      %5689 = vmatmul.mubr.bf16.gmra.mrb[0].mxu0 %v4333
      %v5690 = vpop.f32.mrb[0].mxu0
      %v5691 = vadd.f32 %v5530, %v5690
      %v5692 = vpop.f32.mrb[0].mxu0
      %v5693 = vpop.f32.mrb[0].mxu0
      %v5694 = vadd.f32 %v5533, %v5693
      %v5695 = vpop.f32.mrb[0].mxu0
      %5696 = vmatprep.mubr.bf16.mxu0 0
      %5697 = vmatmul.mubr.bf16.gmra.mrb[0].mxu0 %v4334
      %v5698 = vpop.f32.mrb[0].mxu0
      %v5699 = vadd.f32 %v5538, %v5698
      %v5700 = vpop.f32.mrb[0].mxu0
      %v5701 = vpop.f32.mrb[0].mxu0
      %v5702 = vadd.f32 %v5541, %v5701
      %v5703 = vpop.f32.mrb[0].mxu0
      %5704 = vmatprep.mubr.bf16.mxu0 0
      %5705 = vmatmul.mubr.bf16.gmra.mrb[0].mxu0 %v4335
      %v5706 = vpop.f32.mrb[0].mxu0
      %v5707 = vadd.f32 %v5546, %v5706
      %v5708 = vpop.f32.mrb[0].mxu0
      %v5709 = vpop.f32.mrb[0].mxu0
      %v5710 = vadd.f32 %v5549, %v5709
      %v5711 = vpop.f32.mrb[0].mxu0
      %5712 = vmatprep.mubr.bf16.mxu0 0
      %5713 = vmatmul.mubr.bf16.gmra.mrb[0].mxu0 %v4336
      %v5714 = vpop.f32.mrb[0].mxu0
      %v5715 = vadd.f32 %v5554, %v5714
      %v5716 = vpop.f32.mrb[0].mxu0
      %v5717 = vpop.f32.mrb[0].mxu0
      %v5718 = vadd.f32 %v5557, %v5717
      %v5719 = vpop.f32.mrb[0].mxu0
      %5720 = vmatprep.mubr.bf16.mxu0 0
      %5721 = vmatmul.mubr.bf16.gmra.mrb[0].mxu0 %v4337
      %v5722 = vpop.f32.mrb[0].mxu0
      %v5723 = vadd.f32 %v5562, %v5722
      %v5724 = vpop.f32.mrb[0].mxu0
      %v5725 = vpop.f32.mrb[0].mxu0
      %v5726 = vadd.f32 %v5565, %v5725
      %v5727 = vpop.f32.mrb[0].mxu0
      %5728 = vmatprep.mubr.bf16.mxu0 0
      %5729 = vmatmul.mubr.bf16.gmra.mrb[0].mxu0 %v4338
      %v5730 = vpop.f32.mrb[0].mxu0
      %v5731 = vadd.f32 %v5570, %v5730
      %v5732 = vpop.f32.mrb[0].mxu0
      %v5733 = vpop.f32.mrb[0].mxu0
      %v5734 = vadd.f32 %v5573, %v5733
      %v5735 = vpop.f32.mrb[0].mxu0
      %5736 = vmatprep.mubr.bf16.mxu0 0
      %5737 = vmatmul.mubr.bf16.gmra.mrb[0].mxu0 %v4339
      %v5738 = vpop.f32.mrb[0].mxu0
      %v5739 = vadd.f32 %v5578, %v5738
      %v5740 = vpop.f32.mrb[0].mxu0
      %v5741 = vpop.f32.mrb[0].mxu0
      %v5742 = vadd.f32 %v5581, %v5741
      %v5743 = vpop.f32.mrb[0].mxu0
      %5744 = vmatprep.mubr.bf16.mxu0 0
      %5745 = vmatmul.mubr.bf16.gmra.mrb[0].mxu0 %v4340
      %v5746 = vpop.f32.mrb[0].mxu0
      %v5747 = vadd.f32 %v5586, %v5746
      %v5748 = vpop.f32.mrb[0].mxu0
      %v5749 = vpop.f32.mrb[0].mxu0
      %v5750 = vadd.f32 %v5589, %v5749
      %v5751 = vpop.f32.mrb[0].mxu0
      %5752 = vmatprep.mubr.bf16.mxu0 0
      %5753 = vmatmul.mubr.bf16.gmra.mrb[0].mxu0 %v4367
      %v5754 = vpop.f32.mrb[0].mxu0
      %v5755 = vadd.f32 %v5594, %v5754
      %v5756 = vpop.f32.mrb[0].mxu0
      %v5757 = vpop.f32.mrb[0].mxu0
      %v5758 = vadd.f32 %v5597, %v5757
      %v5759 = vpop.f32.mrb[0].mxu0
      %5760 = vmatprep.mubr.bf16.mxu0 0
      %5761 = vmatmul.mubr.bf16.gmra.mrb[0].mxu0 %v4379
      %v5762 = vpop.f32.mrb[0].mxu0
      %v5763 = vadd.f32 %v5602, %v5762
      %v5764 = vpop.f32.mrb[0].mxu0
      %v5765 = vpop.f32.mrb[0].mxu0
      %v5766 = vadd.f32 %v5605, %v5765
      %v5767 = vpop.f32.mrb[0].mxu0
      %5768 = vdwg.mxu0
      %v5769 = vld [vmem:[%s5] sm:$0xf]
      %v5770 = vld [vmem:[%s5 + $0x4] sm:$0xf]
      %v5771 = vld [vmem:[%s5 + $0x8] sm:$0xf]
      %v5772 = vld [vmem:[%s5 + $0xc] sm:$0xf]
      %v5773 = vld [vmem:[%s5 + $0x10] sm:$0xf]
      %v5774 = vld [vmem:[%s5 + $0x14] sm:$0xf]
      %v5775 = vld [vmem:[%s5 + $0x18] sm:$0xf]
      %v5776 = vld [vmem:[%s5 + $0x1c] sm:$0xf]
      %v5785 = vunpack.c.l.b16 %v5769
      %v5786 = vunpack.c.l.b16 %v5770
      %v5787 = vunpack.c.l.b16 %v5771
      %v5788 = vunpack.c.l.b16 %v5772
      %v5789 = vunpack.c.l.b16 %v5773
      %v5790 = vunpack.c.l.b16 %v5774
      %v5791 = vunpack.c.l.b16 %v5775
      %v5792 = vunpack.c.l.b16 %v5776
      %v5793 = vpack.c.b16 %v5786, %v5785
      %v5794 = vpack.c.b16 %v5788, %v5787
      %v5795 = vpack.c.b16 %v5790, %v5789
      %v5796 = vpack.c.b16 %v5792, %v5791
      %v5801 = vsel %vm1805, %v1624, 0
      %v5803 = vsel %vm1805, %v1625, 0
      %v5805 = vsel %vm1805, %v1626, 0
      %v5807 = vsel %vm1805, %v1627, 0
      %v5809 = vsel %vm1805, %v1628, 0
      %v5811 = vsel %vm1805, %v1629, 0
      %v5813 = vsel %vm1805, %v1630, 0
      %v5815 = vsel %vm1805, %v1631, 0
      %v5817 = vsel %vm1805, %v1632, 0
      %v5819 = vsel %vm1805, %v1633, 0
      %v5821 = vsel %vm1805, %v1634, 0
      %v5823 = vsel %vm1805, %v1635, 0
      %v5825 = vsel %vm1805, %v1636, 0
      %v5827 = vsel %vm1805, %v1637, 0
      %v5829 = vsel %vm1805, %v1638, 0
      %v5831 = vsel %vm1805, %v1756, 0
      %5833 = vmatprep.subr.bf16.mxu0 0
      %5834 = vmatpush1.bf16.msra.mxu0 %v5793
      %5835 = vmatprep.subr.bf16.mxu0 0
      %5836 = vmatpush1.bf16.msra.mxu0 %v5794
      %5837 = vmatprep.subr.bf16.mxu0 0
      %5838 = vmatpush1.bf16.msra.mxu0 %v5795
      %5839 = vmatprep.subr.bf16.mxu0 0
      %5840 = vmatpush1.bf16.msra.mxu0 %v5796
      %5841 = vmatprep.subr.bf16.mxu0 0
      %5842 = vmatpush1.bf16.msra.mxu0 0
      %5843 = vmatprep.subr.bf16.mxu0 0
      %5844 = vmatpush1.bf16.msra.mxu0 0
      %5845 = vmatprep.subr.bf16.mxu0 0
      %5846 = vmatpush1.bf16.msra.mxu0 0
      %5847 = vmatprep.subr.bf16.mxu0 0
      %5848 = vmatpush1.bf16.msra.mxu0 0
      %5849 = vmatprep.subr.bf16.mxu0 0
      %5850 = vmatpush1.bf16.msra.mxu0 0
      %5851 = vmatprep.subr.bf16.mxu0 0
      %5852 = vmatpush1.bf16.msra.mxu0 0
      %5853 = vmatprep.subr.bf16.mxu0 0
      %5854 = vmatpush1.bf16.msra.mxu0 0
      %5855 = vmatprep.subr.bf16.mxu0 0
      %5856 = vmatpush1.bf16.msra.mxu0 0
      %5857 = vmatprep.subr.bf16.mxu0 0
      %5858 = vmatpush1.bf16.msra.mxu0 0
      %5859 = vmatprep.subr.bf16.mxu0 0
      %5860 = vmatpush1.bf16.msra.mxu0 0
      %5861 = vmatprep.subr.bf16.mxu0 0
      %5862 = vmatpush1.bf16.msra.mxu0 0
      %5863 = vmatprep.subr.bf16.mxu0 0
      %5864 = vmatpush1.bf16.msra.mxu0 0
      %5865 = vmatprep.mubr.bf16.mxu0 0
      %5866 = vmatmul.mubr.bf16.gmra.mrb[0].mxu0 %v5801
      %v5867 = vpop.f32.mrb[0].mxu0
      %v5868 = vadd.f32 0.0, %v5867
      %v5869 = vpop.f32.mrb[0].mxu0
      %v5870 = vpop.f32.mrb[0].mxu0
      %v5871 = vadd.f32 0.0, %v5870
      %v5872 = vpop.f32.mrb[0].mxu0
      %5873 = vmatprep.mubr.bf16.mxu0 0
      %5874 = vmatmul.mubr.bf16.gmra.mrb[0].mxu0 %v5803
      %v5875 = vpop.f32.mrb[0].mxu0
      %v5876 = vadd.f32 0.0, %v5875
      %v5877 = vpop.f32.mrb[0].mxu0
      %v5878 = vpop.f32.mrb[0].mxu0
      %v5879 = vadd.f32 0.0, %v5878
      %v5880 = vpop.f32.mrb[0].mxu0
      %5881 = vmatprep.mubr.bf16.mxu0 0
      %5882 = vmatmul.mubr.bf16.gmra.mrb[0].mxu0 %v5805
      %v5883 = vpop.f32.mrb[0].mxu0
      %v5884 = vadd.f32 0.0, %v5883
      %v5885 = vpop.f32.mrb[0].mxu0
      %v5886 = vpop.f32.mrb[0].mxu0
      %v5887 = vadd.f32 0.0, %v5886
      %v5888 = vpop.f32.mrb[0].mxu0
      %5889 = vmatprep.mubr.bf16.mxu0 0
      %5890 = vmatmul.mubr.bf16.gmra.mrb[0].mxu0 %v5807
      %v5891 = vpop.f32.mrb[0].mxu0
      %v5892 = vadd.f32 0.0, %v5891
      %v5893 = vpop.f32.mrb[0].mxu0
      %v5894 = vpop.f32.mrb[0].mxu0
      %v5895 = vadd.f32 0.0, %v5894
      %v5896 = vpop.f32.mrb[0].mxu0
      %5897 = vmatprep.mubr.bf16.mxu0 0
      %5898 = vmatmul.mubr.bf16.gmra.mrb[0].mxu0 %v5809
      %v5899 = vpop.f32.mrb[0].mxu0
      %v5900 = vadd.f32 0.0, %v5899
      %v5901 = vpop.f32.mrb[0].mxu0
      %v5902 = vpop.f32.mrb[0].mxu0
      %v5903 = vadd.f32 0.0, %v5902
      %v5904 = vpop.f32.mrb[0].mxu0
      %5905 = vmatprep.mubr.bf16.mxu0 0
      %5906 = vmatmul.mubr.bf16.gmra.mrb[0].mxu0 %v5811
      %v5907 = vpop.f32.mrb[0].mxu0
      %v5908 = vadd.f32 0.0, %v5907
      %v5909 = vpop.f32.mrb[0].mxu0
      %v5910 = vpop.f32.mrb[0].mxu0
      %v5911 = vadd.f32 0.0, %v5910
      %v5912 = vpop.f32.mrb[0].mxu0
      %5913 = vmatprep.mubr.bf16.mxu0 0
      %5914 = vmatmul.mubr.bf16.gmra.mrb[0].mxu0 %v5813
      %v5915 = vpop.f32.mrb[0].mxu0
      %v5916 = vadd.f32 0.0, %v5915
      %v5917 = vpop.f32.mrb[0].mxu0
      %v5918 = vpop.f32.mrb[0].mxu0
      %v5919 = vadd.f32 0.0, %v5918
      %v5920 = vpop.f32.mrb[0].mxu0
      %5921 = vmatprep.mubr.bf16.mxu0 0
      %5922 = vmatmul.mubr.bf16.gmra.mrb[0].mxu0 %v5815
      %v5923 = vpop.f32.mrb[0].mxu0
      %v5924 = vadd.f32 0.0, %v5923
      %v5925 = vpop.f32.mrb[0].mxu0
      %v5926 = vpop.f32.mrb[0].mxu0
      %v5927 = vadd.f32 0.0, %v5926
      %v5928 = vpop.f32.mrb[0].mxu0
      %5929 = vmatprep.mubr.bf16.mxu0 0
      %5930 = vmatmul.mubr.bf16.gmra.mrb[0].mxu0 %v5817
      %v5931 = vpop.f32.mrb[0].mxu0
      %v5932 = vadd.f32 0.0, %v5931
      %v5933 = vpop.f32.mrb[0].mxu0
      %v5934 = vpop.f32.mrb[0].mxu0
      %v5935 = vadd.f32 0.0, %v5934
      %v5936 = vpop.f32.mrb[0].mxu0
      %5937 = vmatprep.mubr.bf16.mxu0 0
      %5938 = vmatmul.mubr.bf16.gmra.mrb[0].mxu0 %v5819
      %v5939 = vpop.f32.mrb[0].mxu0
      %v5940 = vadd.f32 0.0, %v5939
      %v5941 = vpop.f32.mrb[0].mxu0
      %v5942 = vpop.f32.mrb[0].mxu0
      %v5943 = vadd.f32 0.0, %v5942
      %v5944 = vpop.f32.mrb[0].mxu0
      %5945 = vmatprep.mubr.bf16.mxu0 0
      %5946 = vmatmul.mubr.bf16.gmra.mrb[0].mxu0 %v5821
      %v5947 = vpop.f32.mrb[0].mxu0
      %v5948 = vadd.f32 0.0, %v5947
      %v5949 = vpop.f32.mrb[0].mxu0
      %v5950 = vpop.f32.mrb[0].mxu0
      %v5951 = vadd.f32 0.0, %v5950
      %v5952 = vpop.f32.mrb[0].mxu0
      %5953 = vmatprep.mubr.bf16.mxu0 0
      %5954 = vmatmul.mubr.bf16.gmra.mrb[0].mxu0 %v5823
      %v5955 = vpop.f32.mrb[0].mxu0
      %v5956 = vadd.f32 0.0, %v5955
      %v5957 = vpop.f32.mrb[0].mxu0
      %v5958 = vpop.f32.mrb[0].mxu0
      %v5959 = vadd.f32 0.0, %v5958
      %v5960 = vpop.f32.mrb[0].mxu0
      %5961 = vmatprep.mubr.bf16.mxu0 0
      %5962 = vmatmul.mubr.bf16.gmra.mrb[0].mxu0 %v5825
      %v5963 = vpop.f32.mrb[0].mxu0
      %v5964 = vadd.f32 0.0, %v5963
      %v5965 = vpop.f32.mrb[0].mxu0
      %v5966 = vpop.f32.mrb[0].mxu0
      %v5967 = vadd.f32 0.0, %v5966
      %v5968 = vpop.f32.mrb[0].mxu0
      %5969 = vmatprep.mubr.bf16.mxu0 0
      %5970 = vmatmul.mubr.bf16.gmra.mrb[0].mxu0 %v5827
      %v5971 = vpop.f32.mrb[0].mxu0
      %v5972 = vadd.f32 0.0, %v5971
      %v5973 = vpop.f32.mrb[0].mxu0
      %v5974 = vpop.f32.mrb[0].mxu0
      %v5975 = vadd.f32 0.0, %v5974
      %v5976 = vpop.f32.mrb[0].mxu0
      %5977 = vmatprep.mubr.bf16.mxu0 0
      %5978 = vmatmul.mubr.bf16.gmra.mrb[0].mxu0 %v5829
      %v5979 = vpop.f32.mrb[0].mxu0
      %v5980 = vadd.f32 0.0, %v5979
      %v5981 = vpop.f32.mrb[0].mxu0
      %v5982 = vpop.f32.mrb[0].mxu0
      %v5983 = vadd.f32 0.0, %v5982
      %v5984 = vpop.f32.mrb[0].mxu0
      %5985 = vmatprep.mubr.bf16.mxu0 0
      %5986 = vmatmul.mubr.bf16.gmra.mrb[0].mxu0 %v5831
      %v5987 = vpop.f32.mrb[0].mxu0
      %v5988 = vadd.f32 0.0, %v5987
      %v5989 = vpop.f32.mrb[0].mxu0
      %v5990 = vpop.f32.mrb[0].mxu0
      %v5991 = vadd.f32 0.0, %v5990
      %v5992 = vpop.f32.mrb[0].mxu0
      %5993 = vdwg.mxu0
      %v5994 = vadd.f32 %v5643, %v5868
      %v5995 = vadd.f32 %v5646, %v5871
      %v5996 = vadd.f32 %v5651, %v5876
      %v5997 = vadd.f32 %v5654, %v5879
      %v5998 = vadd.f32 %v5659, %v5884
      %v5999 = vadd.f32 %v5662, %v5887
      %v6000 = vadd.f32 %v5667, %v5892
      %v6001 = vadd.f32 %v5670, %v5895
      %v6002 = vadd.f32 %v5675, %v5900
      %v6003 = vadd.f32 %v5678, %v5903
      %v6004 = vadd.f32 %v5683, %v5908
      %v6005 = vadd.f32 %v5686, %v5911
      %v6006 = vadd.f32 %v5691, %v5916
      %v6007 = vadd.f32 %v5694, %v5919
      %v6008 = vadd.f32 %v5699, %v5924
      %v6009 = vadd.f32 %v5702, %v5927
      %v6010 = vadd.f32 %v5707, %v5932
      %v6011 = vadd.f32 %v5710, %v5935
      %v6012 = vadd.f32 %v5715, %v5940
      %v6013 = vadd.f32 %v5718, %v5943
      %v6014 = vadd.f32 %v5723, %v5948
      %v6015 = vadd.f32 %v5726, %v5951
      %v6016 = vadd.f32 %v5731, %v5956
      %v6017 = vadd.f32 %v5734, %v5959
      %v6018 = vadd.f32 %v5739, %v5964
      %v6019 = vadd.f32 %v5742, %v5967
      %v6020 = vadd.f32 %v5747, %v5972
      %v6021 = vadd.f32 %v5750, %v5975
      %v6022 = vadd.f32 %v5755, %v5980
      %v6023 = vadd.f32 %v5758, %v5983
      %v6024 = vadd.f32 %v5763, %v5988
      %v6025 = vadd.f32 %v5766, %v5991
      %v6026 = vld [vmem:[%s6] sm:$0x1]
      %v6028 = vlaneseq
      %v6029 = vshrl.u32 %v6028, 7
      %v6030 = vsub.s32 0, %v6029
      %v6031 = vrot.slane %v6026, %v6030
      %v6033 = vadd.f32 %v5994, %v6031
      %v6034 = vadd.f32 %v5995, %v6031
      %v6035 = vadd.f32 %v5996, %v6031
      %v6036 = vadd.f32 %v5997, %v6031
      %v6037 = vadd.f32 %v5998, %v6031
      %v6038 = vadd.f32 %v5999, %v6031
      %v6039 = vadd.f32 %v6000, %v6031
      %v6040 = vadd.f32 %v6001, %v6031
      %v6041 = vadd.f32 %v6002, %v6031
      %v6042 = vadd.f32 %v6003, %v6031
      %v6043 = vadd.f32 %v6004, %v6031
      %v6044 = vadd.f32 %v6005, %v6031
      %v6045 = vadd.f32 %v6006, %v6031
      %v6046 = vadd.f32 %v6007, %v6031
      %v6047 = vadd.f32 %v6008, %v6031
      %v6048 = vadd.f32 %v6009, %v6031
      %v6049 = vadd.f32 %v6010, %v6031
      %v6050 = vadd.f32 %v6011, %v6031
      %v6051 = vadd.f32 %v6012, %v6031
      %v6052 = vadd.f32 %v6013, %v6031
      %v6053 = vadd.f32 %v6014, %v6031
      %v6054 = vadd.f32 %v6015, %v6031
      %v6055 = vadd.f32 %v6016, %v6031
      %v6056 = vadd.f32 %v6017, %v6031
      %v6057 = vadd.f32 %v6018, %v6031
      %v6058 = vadd.f32 %v6019, %v6031
      %v6059 = vadd.f32 %v6020, %v6031
      %v6060 = vadd.f32 %v6021, %v6031
      %v6061 = vadd.f32 %v6022, %v6031
      %v6062 = vadd.f32 %v6023, %v6031
      %v6063 = vadd.f32 %v6024, %v6031
      %v6064 = vadd.f32 %v6025, %v6031
      %v6065 = vmax.f32 %v6033, 0.0
      %v6066 = vmax.f32 %v6034, 0.0
      %v6067 = vmax.f32 %v6035, 0.0
      %v6068 = vmax.f32 %v6036, 0.0
      %v6069 = vmax.f32 %v6037, 0.0
      %v6070 = vmax.f32 %v6038, 0.0
      %v6071 = vmax.f32 %v6039, 0.0
      %v6072 = vmax.f32 %v6040, 0.0
      %v6073 = vmax.f32 %v6041, 0.0
      %v6074 = vmax.f32 %v6042, 0.0
      %v6075 = vmax.f32 %v6043, 0.0
      %v6076 = vmax.f32 %v6044, 0.0
      %v6077 = vmax.f32 %v6045, 0.0
      %v6078 = vmax.f32 %v6046, 0.0
      %v6079 = vmax.f32 %v6047, 0.0
      %v6080 = vmax.f32 %v6048, 0.0
      %v6081 = vmax.f32 %v6049, 0.0
      %v6082 = vmax.f32 %v6050, 0.0
      %v6083 = vmax.f32 %v6051, 0.0
      %v6084 = vmax.f32 %v6052, 0.0
      %v6085 = vmax.f32 %v6053, 0.0
      %v6086 = vmax.f32 %v6054, 0.0
      %v6087 = vmax.f32 %v6055, 0.0
      %v6088 = vmax.f32 %v6056, 0.0
      %v6089 = vmax.f32 %v6057, 0.0
      %v6090 = vmax.f32 %v6058, 0.0
      %v6091 = vmax.f32 %v6059, 0.0
      %v6092 = vmax.f32 %v6060, 0.0
      %v6093 = vmax.f32 %v6061, 0.0
      %v6094 = vmax.f32 %v6062, 0.0
      %v6095 = vmax.f32 %v6063, 0.0
      %v6096 = vmax.f32 %v6064, 0.0
      %v6097 = vpack.c.bf16 %v6066, %v6065
      %v6098 = vpack.c.bf16 %v6068, %v6067
      %v6099 = vpack.c.bf16 %v6070, %v6069
      %v6100 = vpack.c.bf16 %v6072, %v6071
      %v6101 = vpack.c.bf16 %v6074, %v6073
      %v6102 = vpack.c.bf16 %v6076, %v6075
      %v6103 = vpack.c.bf16 %v6078, %v6077
      %v6104 = vpack.c.bf16 %v6080, %v6079
      %v6105 = vpack.c.bf16 %v6082, %v6081
      %v6106 = vpack.c.bf16 %v6084, %v6083
      %v6107 = vpack.c.bf16 %v6086, %v6085
      %v6108 = vpack.c.bf16 %v6088, %v6087
      %v6109 = vpack.c.bf16 %v6090, %v6089
      %v6110 = vpack.c.bf16 %v6092, %v6091
      %v6111 = vpack.c.bf16 %v6094, %v6093
      %v6112 = vpack.c.bf16 %v6096, %v6095
      %v6129 = vunpack.c.l.b16 %v6097
      %v6130 = vunpack.c.h.b16 %v6097
      %v6131 = vunpack.c.l.b16 %v6098
      %v6132 = vunpack.c.h.b16 %v6098
      %v6133 = vunpack.c.l.b16 %v6099
      %v6134 = vunpack.c.h.b16 %v6099
      %v6135 = vunpack.c.l.b16 %v6100
      %v6136 = vunpack.c.h.b16 %v6100
      %v6137 = vunpack.c.l.b16 %v6101
      %v6138 = vunpack.c.h.b16 %v6101
      %v6139 = vunpack.c.l.b16 %v6102
      %v6140 = vunpack.c.h.b16 %v6102
      %v6141 = vunpack.c.l.b16 %v6103
      %v6142 = vunpack.c.h.b16 %v6103
      %v6143 = vunpack.c.l.b16 %v6104
      %v6144 = vunpack.c.h.b16 %v6104
      %v6145 = vunpack.c.l.b16 %v6105
      %v6146 = vunpack.c.h.b16 %v6105
      %v6147 = vunpack.c.l.b16 %v6106
      %v6148 = vunpack.c.h.b16 %v6106
      %v6149 = vunpack.c.l.b16 %v6107
      %v6150 = vunpack.c.h.b16 %v6107
      %v6151 = vunpack.c.l.b16 %v6108
      %v6152 = vunpack.c.h.b16 %v6108
      %v6153 = vunpack.c.l.b16 %v6109
      %v6154 = vunpack.c.h.b16 %v6109
      %v6155 = vunpack.c.l.b16 %v6110
      %v6156 = vunpack.c.h.b16 %v6110
      %v6157 = vunpack.c.l.b16 %v6111
      %v6158 = vunpack.c.h.b16 %v6111
      %v6159 = vunpack.c.l.b16 %v6112
      %v6160 = vunpack.c.h.b16 %v6112
      %v6161 = vpack.c.b16 %v6129, %v6129
      %v6162 = vpack.c.b16 %v6130, %v6130
      %v6163 = vpack.c.b16 %v6131, %v6131
      %v6164 = vpack.c.b16 %v6132, %v6132
      %v6165 = vpack.c.b16 %v6133, %v6133
      %v6166 = vpack.c.b16 %v6134, %v6134
      %v6167 = vpack.c.b16 %v6135, %v6135
      %v6168 = vpack.c.b16 %v6136, %v6136
      %v6169 = vpack.c.b16 %v6137, %v6137
      %v6170 = vpack.c.b16 %v6138, %v6138
      %v6171 = vpack.c.b16 %v6139, %v6139
      %v6172 = vpack.c.b16 %v6140, %v6140
      %v6173 = vpack.c.b16 %v6141, %v6141
      %v6174 = vpack.c.b16 %v6142, %v6142
      %v6175 = vpack.c.b16 %v6143, %v6143
      %v6176 = vpack.c.b16 %v6144, %v6144
      %v6177 = vpack.c.b16 %v6145, %v6145
      %v6178 = vpack.c.b16 %v6146, %v6146
      %v6179 = vpack.c.b16 %v6147, %v6147
      %v6180 = vpack.c.b16 %v6148, %v6148
      %v6181 = vpack.c.b16 %v6149, %v6149
      %v6182 = vpack.c.b16 %v6150, %v6150
      %v6183 = vpack.c.b16 %v6151, %v6151
      %v6184 = vpack.c.b16 %v6152, %v6152
      %v6185 = vpack.c.b16 %v6153, %v6153
      %v6186 = vpack.c.b16 %v6154, %v6154
      %v6187 = vpack.c.b16 %v6155, %v6155
      %v6188 = vpack.c.b16 %v6156, %v6156
      %v6189 = vpack.c.b16 %v6157, %v6157
      %v6190 = vpack.c.b16 %v6158, %v6158
      %v6191 = vpack.c.b16 %v6159, %v6159
      %v6192 = vpack.c.b16 %v6160, %v6160
      %6225 = vst [vmem:[%s278] sm:$0xf] %v6161
      %6226 = vst [vmem:[%s278 + $0x4] sm:$0xf] %v6162
      %6227 = vst [vmem:[%s278 + $0x8] sm:$0xf] %v6163
      %6228 = vst [vmem:[%s278 + $0xc] sm:$0xf] %v6164
      %6229 = vst [vmem:[%s278 + $0x10] sm:$0xf] %v6165
      %6230 = vst [vmem:[%s278 + $0x14] sm:$0xf] %v6166
      %6231 = vst [vmem:[%s278 + $0x18] sm:$0xf] %v6167
      %6232 = vst [vmem:[%s278 + $0x1c] sm:$0xf] %v6168
      %6233 = vst [vmem:[%s278 + $0x20] sm:$0xf] %v6169
      %6234 = vst [vmem:[%s278 + $0x24] sm:$0xf] %v6170
      %6235 = vst [vmem:[%s278 + $0x28] sm:$0xf] %v6171
      %6236 = vst [vmem:[%s278 + $0x2c] sm:$0xf] %v6172
      %6237 = vst [vmem:[%s278 + $0x30] sm:$0xf] %v6173
      %6238 = vst [vmem:[%s278 + $0x34] sm:$0xf] %v6174
      %6239 = vst [vmem:[%s278 + $0x38] sm:$0xf] %v6175
      %6240 = vst [vmem:[%s278 + $0x3c] sm:$0xf] %v6176
      %6241 = vst [vmem:[%s278 + $0x40] sm:$0xf] %v6177
      %6242 = vst [vmem:[%s278 + $0x44] sm:$0xf] %v6178
      %6243 = vst [vmem:[%s278 + $0x48] sm:$0xf] %v6179
      %6244 = vst [vmem:[%s278 + $0x4c] sm:$0xf] %v6180
      %6245 = vst [vmem:[%s278 + $0x50] sm:$0xf] %v6181
      %6246 = vst [vmem:[%s278 + $0x54] sm:$0xf] %v6182
      %6247 = vst [vmem:[%s278 + $0x58] sm:$0xf] %v6183
      %6248 = vst [vmem:[%s278 + $0x5c] sm:$0xf] %v6184
      %6249 = vst [vmem:[%s278 + $0x60] sm:$0xf] %v6185
      %6250 = vst [vmem:[%s278 + $0x64] sm:$0xf] %v6186
      %6251 = vst [vmem:[%s278 + $0x68] sm:$0xf] %v6187
      %6252 = vst [vmem:[%s278 + $0x6c] sm:$0xf] %v6188
      %6253 = vst [vmem:[%s278 + $0x70] sm:$0xf] %v6189
      %6254 = vst [vmem:[%s278 + $0x74] sm:$0xf] %v6190
      %6255 = vst [vmem:[%s278 + $0x78] sm:$0xf] %v6191
      %6256 = vst [vmem:[%s278 + $0x7c] sm:$0xf] %v6192
      %p6257 = scmp.lt.s32.totalorder %s18, 1
      %s6258 = scalar_select %p6257, %s18, 1
      %s6259 = smul.addr %s6258, 32
      %s6260 = smul.addr %s6259, 4
      %s6261 = scalar_lea.vmem %s7, %s6260
      // Predicated region
      $region49: #{basic_block_forward.1} parent=47 // pred_check
        %p6262 = pneg %p188
      $region50: #{basic_block_forward.1} parent=47 // pred_check_branch
        %6264 = sbr.rel (%p6262) target = $region52
      $region51: #{basic_block_forward.1} parent=47 // pred_region
        _
      $region52: #{basic_block_forward.1} parent=47 // pred_fallthru
        _
    $region48: #{basic_block_forward.1} parent=5 // pred_fallthru
      _
    %p6265 = scmp.le.s32.totalorder 2, %s13
    // Predicated region
    $region53: #{basic_block_forward.1} parent=5 // pred_check
      %p6266 = pneg %p6265
    $region54: #{basic_block_forward.1} parent=5 // pred_check_branch
      %6268 = sbr.rel (%p6266) target = $region56
    $region55: #{basic_block_forward.1} parent=5 // pred_region
      %s6269 = ssub.s32 %s13, 2
      // Predicated region
      $region57: #{basic_block_forward.1} parent=55 // pred_check
        %p6270 = pneg %p194
      $region58: #{basic_block_forward.1} parent=55 // pred_check_branch
        %6272 = sbr.rel (%p6270) target = $region60
      $region59: #{basic_block_forward.1} parent=55 // pred_region
        %p6273 = scmp.lt.s32.totalorder %s19, 1
        %s6274 = scalar_select %p6273, %s19, 1
        %s6275 = smul.addr %s6274, 32
        %s6276 = smul.addr %s6275, 4
        %s6277 = scalar_lea.vmem %s7, %s6276
      $region60: #{basic_block_forward.1} parent=55 // pred_fallthru
        _
    $region56: #{basic_block_forward.1} parent=5 // pred_fallthru
      _
  $region6: #{basic_block_forward.1} parent=0 // loop_footer
    %s17 = sadd.s32 1, %s13
  $region7: #{basic_block_forward.1} parent=0 // loop_footer_branch
    %12 = sbr.rel target = $region3
  $region8: #{basic_block_forward.1} parent=0 // loop_exit
    _

</llo_original>
